<compile_context>
chip_gen: v7x
topology: tpu7x:2x2x1
jax: 0.10.0
libtpu: 0.0.40
codegen_flags: <defaults>
</compile_context>

<pallas_src>
import functools
import math

import jax
import jax.numpy as jnp
from jax.experimental import pallas as pl
from jax.experimental.pallas import tpu as pltpu


_ROW_TILE_TARGET = 512     # row tiles (sequence / flattened tokens)
_I_TILE_TARGET = 512       # MLP intermediate tiles
_VMEM_LIMIT = 48 * 1024 * 1024


# ----------------------------------------------------------------------------
# tiling helpers
# ----------------------------------------------------------------------------

def _round_up(x, m):
    return ((x + m - 1) // m) * m


def _pick_div_tile(n, target, mult):
    """Largest t <= target with n % t == 0 and t % mult == 0; else n."""
    t = min(target, n)
    t -= t % mult
    while t >= mult:
        if n % t == 0:
            return int(t)
        t -= mult
    return int(n)


def _seq_pad_and_tile(P, target=_ROW_TILE_TARGET):
    """Pad sequence length to a tile-friendly value and pick the row tile."""
    base = 128 if P > 128 else 8
    Pp = _round_up(P, base)
    t = _pick_div_tile(Pp, target, 8)
    return Pp, t


def _cparams(sem):
    return pltpu.CompilerParams(dimension_semantics=sem,
                                vmem_limit_bytes=_VMEM_LIMIT)


# ----------------------------------------------------------------------------
# Pallas kernels
# ----------------------------------------------------------------------------

def _patch_embed_kernel(x_ref, w_ref, b_ref, pos_ref, o_ref):
    # x: (tp, C*ps*ps) bf16, w: (C*ps*ps, D) bf16, b/pos: f32 -> o: (tp, D) bf16
    acc = jnp.dot(x_ref[...], w_ref[...], preferred_element_type=jnp.float32)
    o_ref[...] = (acc + b_ref[...] + pos_ref[...]).astype(o_ref.dtype)


def _ln_qkv_kernel(x_ref, g_ref, bln_ref, w_ref, bw_ref, o_ref, xn_ref, *, eps):
    # Fused LayerNorm1 + head-split QKV projection.
    # LN(x) computed once per (batch, row-tile) and reused across the 3*nH
    # head-chunks (innermost grid axis).
    @pl.when(pl.program_id(2) == 0)
    def _():
        x = x_ref[...].astype(jnp.float32)
        mu = jnp.mean(x, axis=-1, keepdims=True)
        var = jnp.mean(jnp.square(x - mu), axis=-1, keepdims=True)
        xn = (x - mu) * jax.lax.rsqrt(var + eps) * g_ref[...] + bln_ref[...]
        xn_ref[...] = xn.astype(xn_ref.dtype)
    acc = jnp.dot(xn_ref[...], w_ref[...], preferred_element_type=jnp.float32)
    o_ref[...] = (acc + bw_ref[...]).astype(o_ref.dtype)


def _flash_attn_kernel(q_ref, k_ref, v_ref, o_ref, m_ref, l_ref, acc_ref,
                       *, scale, tk, seq_valid, padded_len):
    # Online-softmax over kv tiles for one (head, batch, q-tile).
    ki = pl.program_id(3)

    @pl.when(ki == 0)
    def _():
        m_ref[...] = jnp.full_like(m_ref, -jnp.inf)
        l_ref[...] = jnp.zeros_like(l_ref)
        acc_ref[...] = jnp.zeros_like(acc_ref)

    # fold softmax scale into q (cheap (tq,hd) pass instead of (tq,tk))
    q = (q_ref[...].astype(jnp.float32) * scale).astype(q_ref.dtype)
    s = jax.lax.dot_general(q, k_ref[...], (((1,), (1,)), ((), ())),
                            preferred_element_type=jnp.float32)   # (tq, tk)
    if padded_len > seq_valid:   # mask padded kv positions (static check)
        kv_pos = jax.lax.broadcasted_iota(jnp.int32, s.shape, 1) + ki * tk
        s = jnp.where(kv_pos < seq_valid, s, -1e30)

    m_prev = m_ref[...]
    m_new = jnp.maximum(m_prev, jnp.max(s, axis=-1, keepdims=True))
    alpha = jnp.exp(m_prev - m_new)
    p = jnp.exp(s - m_new)
    l_ref[...] = alpha * l_ref[...] + jnp.sum(p, axis=-1, keepdims=True)
    acc_ref[...] = alpha * acc_ref[...] + jnp.dot(
        p.astype(v_ref.dtype), v_ref[...], preferred_element_type=jnp.float32)
    m_ref[...] = m_new

    @pl.when(ki == pl.num_programs(3) - 1)
    def _():
        o_ref[...] = (acc_ref[...] / l_ref[...]).astype(o_ref.dtype)


def _attn_out_kernel(a_ref, w_ref, b_ref, res_ref, o_ref, *, num_heads):
    # out = residual + sum_h attn_h @ o_w[h] + o_b
    # All heads in one block; static unrolled head loop accumulates in regs
    # (no per-head grid axis / accumulator scratch round trips).
    acc = jnp.dot(a_ref[0], w_ref[0], preferred_element_type=jnp.float32)
    for h in range(1, num_heads):
        acc = acc + jnp.dot(a_ref[h], w_ref[h],
                            preferred_element_type=jnp.float32)
    o_ref[...] = (acc + b_ref[...]
                  + res_ref[...].astype(jnp.float32)).astype(o_ref.dtype)


def _ln_mlp_kernel(x_ref, g_ref, bln_ref, w1_ref, b1_ref, w2_ref, b2_ref, o_ref,
                   xn_ref, acc_ref, *, eps):
    # Fused LN2 -> fc1 -> tanh-GELU (bf16) -> fc2 -> +residual, tiled over I.
    j = pl.program_id(1)

    @pl.when(j == 0)
    def _():
        x = x_ref[...].astype(jnp.float32)
        mu = jnp.mean(x, axis=-1, keepdims=True)
        var = jnp.mean(jnp.square(x - mu), axis=-1, keepdims=True)
        xn = (x - mu) * jax.lax.rsqrt(var + eps) * g_ref[...] + bln_ref[...]
        xn_ref[...] = xn.astype(xn_ref.dtype)
        acc_ref[...] = jnp.zeros_like(acc_ref)

    h = jnp.dot(xn_ref[...], w1_ref[...],
                preferred_element_type=jnp.float32) + b1_ref[...]
    hb = h.astype(jnp.bfloat16)                      # GELU in bf16 (VPU/EUP)
    c = math.sqrt(2.0 / math.pi)
    g = 0.5 * hb * (1.0 + jnp.tanh(c * (hb + 0.044715 * (hb * hb * hb))))
    acc_ref[...] += jnp.dot(g.astype(jnp.bfloat16), w2_ref[...],
                            preferred_element_type=jnp.float32)

    @pl.when(j == pl.num_programs(1) - 1)
    def _():
        o_ref[...] = (acc_ref[...] + b2_ref[...]
                      + x_ref[...].astype(jnp.float32)).astype(o_ref.dtype)


def _layernorm_kernel(x_ref, g_ref, b_ref, o_ref, *, eps):
    x = x_ref[...].astype(jnp.float32)
    mu = jnp.mean(x, axis=-1, keepdims=True)
    var = jnp.mean(jnp.square(x - mu), axis=-1, keepdims=True)
    o_ref[...] = ((x - mu) * jax.lax.rsqrt(var + eps)
                  * g_ref[...] + b_ref[...]).astype(o_ref.dtype)


# ----------------------------------------------------------------------------
# pallas_call wrappers
# ----------------------------------------------------------------------------

def patch_embed(x, w, b, pos, tp):
    """x: (B, Pp, C*ps*ps) bf16 -> (B, Pp, D) bf16; bias + pos-emb fused."""
    B, Pp, K = x.shape
    D = w.shape[1]
    return pl.pallas_call(
        _patch_embed_kernel,
        out_shape=jax.ShapeDtypeStruct((B, Pp, D), x.dtype),
        grid=(B, Pp // tp),
        in_specs=[
            pl.BlockSpec((None, tp, K), lambda b, i: (b, i, 0)),
            pl.BlockSpec((K, D), lambda b, i: (0, 0)),
            pl.BlockSpec((1, D), lambda b, i: (0, 0)),
            pl.BlockSpec((tp, D), lambda b, i: (i, 0)),
        ],
        out_specs=pl.BlockSpec((None, tp, D), lambda b, i: (b, i, 0)),
        compiler_params=_cparams(("parallel", "parallel")),
    )(x, w, b, pos)


def ln_qkv(x, g, bln, w, bw, eps, tm):
    """x: (B, Pp, D); w: (3nH, D, hd); bw: (3nH, 1, hd) -> (3nH, B, Pp, hd)."""
    B, Pp, D = x.shape
    G, _, hd = w.shape
    return pl.pallas_call(
        functools.partial(_ln_qkv_kernel, eps=eps),
        out_shape=jax.ShapeDtypeStruct((G, B, Pp, hd), x.dtype),
        grid=(B, Pp // tm, G),
        in_specs=[
            pl.BlockSpec((None, tm, D), lambda b, i, gi: (b, i, 0)),
            pl.BlockSpec((1, D), lambda b, i, gi: (0, 0)),
            pl.BlockSpec((1, D), lambda b, i, gi: (0, 0)),
            pl.BlockSpec((None, D, hd), lambda b, i, gi: (gi, 0, 0)),
            pl.BlockSpec((None, 1, hd), lambda b, i, gi: (gi, 0, 0)),
        ],
        out_specs=pl.BlockSpec((None, None, tm, hd),
                               lambda b, i, gi: (gi, b, i, 0)),
        scratch_shapes=[pltpu.VMEM((tm, D), jnp.bfloat16)],
        compiler_params=_cparams(("parallel", "parallel", "arbitrary")),
    )(x, g, bln, w, bw)


def flash_attention(qkv, num_heads, seq_valid, scale, tq, tk):
    """qkv: (3*nH, B, Pp, hd) head-split -> attn: (B, nH, Pp, hd)."""
    G, B, Pp, hd = qkv.shape
    nH = num_heads
    kernel = functools.partial(_flash_attn_kernel, scale=scale, tk=tk,
                               seq_valid=seq_valid, padded_len=Pp)
    return pl.pallas_call(
        kernel,
        out_shape=jax.ShapeDtypeStruct((B, nH, Pp, hd), qkv.dtype),
        grid=(nH, B, Pp // tq, Pp // tk),
        in_specs=[
            pl.BlockSpec((None, None, tq, hd),
                         lambda h, b, qi, ki: (h, b, qi, 0)),
            pl.BlockSpec((None, None, tk, hd),
                         lambda h, b, qi, ki: (nH + h, b, ki, 0)),
            pl.BlockSpec((None, None, tk, hd),
                         lambda h, b, qi, ki: (2 * nH + h, b, ki, 0)),
        ],
        out_specs=pl.BlockSpec((None, None, tq, hd),
                               lambda h, b, qi, ki: (b, h, qi, 0)),
        scratch_shapes=[
            pltpu.VMEM((tq, 1), jnp.float32),    # running max m
            pltpu.VMEM((tq, 1), jnp.float32),    # running denom l
            pltpu.VMEM((tq, hd), jnp.float32),   # running numerator acc
        ],
        compiler_params=_cparams(
            ("parallel", "parallel", "parallel", "arbitrary")),
    )(qkv, qkv, qkv)


def attn_out_proj(attn, ow, ob, residual, tp):
    """attn: (B, nH, Pp, hd); ow: (nH, hd, D) -> residual + attn @ o_w + o_b."""
    B, nH, Pp, hd = attn.shape
    D = ow.shape[-1]
    return pl.pallas_call(
        functools.partial(_attn_out_kernel, num_heads=nH),
        out_shape=jax.ShapeDtypeStruct((B, Pp, D), residual.dtype),
        grid=(B, Pp // tp),
        in_specs=[
            pl.BlockSpec((None, nH, tp, hd), lambda b, i: (b, 0, i, 0)),
            pl.BlockSpec((nH, hd, D), lambda b, i: (0, 0, 0)),
            pl.BlockSpec((1, D), lambda b, i: (0, 0)),
            pl.BlockSpec((None, tp, D), lambda b, i: (b, i, 0)),
        ],
        out_specs=pl.BlockSpec((None, tp, D), lambda b, i: (b, i, 0)),
        compiler_params=_cparams(("parallel", "parallel")),
    )(attn, ow, ob, residual)


def ln_mlp(x, g, bln, w1, b1, w2, b2, eps, tm):
    """(M, D) -> x + fc2(gelu_tanh(fc1(LN(x)))), tiled over rows and I."""
    M, D = x.shape
    Ip = w1.shape[1]
    ti = _pick_div_tile(Ip, _I_TILE_TARGET, 128)
    return pl.pallas_call(
        functools.partial(_ln_mlp_kernel, eps=eps),
        out_shape=jax.ShapeDtypeStruct((M, D), x.dtype),
        grid=(M // tm, Ip // ti),
        in_specs=[
            pl.BlockSpec((tm, D), lambda i, j: (i, 0)),
            pl.BlockSpec((1, D), lambda i, j: (0, 0)),
            pl.BlockSpec((1, D), lambda i, j: (0, 0)),
            pl.BlockSpec((D, ti), lambda i, j: (0, j)),
            pl.BlockSpec((1, ti), lambda i, j: (0, j)),
            pl.BlockSpec((ti, D), lambda i, j: (j, 0)),
            pl.BlockSpec((1, D), lambda i, j: (0, 0)),
        ],
        out_specs=pl.BlockSpec((tm, D), lambda i, j: (i, 0)),
        scratch_shapes=[pltpu.VMEM((tm, D), jnp.bfloat16),
                        pltpu.VMEM((tm, D), jnp.float32)],
        compiler_params=_cparams(("parallel", "arbitrary")),
    )(x, g, bln, w1, b1, w2, b2)


def layernorm(x, g, b, eps, tm, out_dtype=jnp.bfloat16):
    M, D = x.shape
    return pl.pallas_call(
        functools.partial(_layernorm_kernel, eps=eps),
        out_shape=jax.ShapeDtypeStruct((M, D), out_dtype),
        grid=(M // tm,),
        in_specs=[
            pl.BlockSpec((tm, D), lambda i: (i, 0)),
            pl.BlockSpec((1, D), lambda i: (0, 0)),
            pl.BlockSpec((1, D), lambda i: (0, 0)),
        ],
        out_specs=pl.BlockSpec((tm, D), lambda i: (i, 0)),
        compiler_params=_cparams(("parallel",)),
    )(x, g, b)


# ----------------------------------------------------------------------------
# Model
# ----------------------------------------------------------------------------

def init_params(key, cfg):
    D = cfg['hidden_size']
    I = cfg['intermediate_size']
    C = cfg['num_channels']
    ps = cfg['patch_size']
    P = (cfg['image_size'] // ps) ** 2
    nH = cfg['num_attention_heads']
    hd = D // nH
    Ip = _round_up(I, 128)        # padded intermediate (zero cols are no-ops)
    std = 0.02
    wdt = jnp.bfloat16            # weights bf16 (MXU), biases / LN params f32

    def nrm(k, shape, dtype=wdt):
        return (jax.random.normal(k, shape, jnp.float32) * std).astype(dtype)

    keys = jax.random.split(key, 3 + cfg['num_hidden_layers'])
    params = {
        'patch_w': nrm(keys[0], (C * ps * ps, D)),     # conv as im2col matmul
        'patch_b': nrm(keys[1], (1, D), jnp.float32),
        'pos_emb': nrm(keys[2], (P, D), jnp.float32),
        'post_ln_g': jnp.ones((1, D), jnp.float32),
        'post_ln_b': jnp.zeros((1, D), jnp.float32),
        'layers': [],
    }
    for li in range(cfg['num_hidden_layers']):
        lk = jax.random.split(keys[3 + li], 8)
        fc1_w = nrm(lk[4], (D, I))
        fc1_b = nrm(lk[5], (1, I), jnp.float32)
        fc2_w = nrm(lk[6], (I, D))
        if Ip != I:
            fc1_w = jnp.pad(fc1_w, ((0, 0), (0, Ip - I)))
            fc1_b = jnp.pad(fc1_b, ((0, 0), (0, Ip - I)))
            fc2_w = jnp.pad(fc2_w, ((0, Ip - I), (0, 0)))
        params['layers'].append({
            'ln1_g': jnp.ones((1, D), jnp.float32),
            'ln1_b': jnp.zeros((1, D), jnp.float32),
            'qkv_w': nrm(lk[0], (3 * nH, D, hd)),      # [q heads | k heads | v heads]
            'qkv_b': nrm(lk[1], (3 * nH, 1, hd), jnp.float32),
            'o_w': nrm(lk[2], (nH, hd, D)),            # out_proj split per head
            'o_b': nrm(lk[3], (1, D), jnp.float32),
            'ln2_g': jnp.ones((1, D), jnp.float32),
            'ln2_b': jnp.zeros((1, D), jnp.float32),
            'fc1_w': fc1_w,
            'fc1_b': fc1_b,
            'fc2_w': fc2_w,
            'fc2_b': nrm(lk[7], (1, D), jnp.float32),
        })
    return params


def siglip_vision_forward(pixel_values, params, cfg):
    B, C, H, W = pixel_values.shape
    ps = cfg['patch_size']
    D = cfg['hidden_size']
    nH = cfg['num_attention_heads']
    hd = D // nH
    eps = cfg['layer_norm_eps']
    P = (H // ps) * (W // ps)
    scale = hd ** (-0.5)
    cdt = jnp.bfloat16

    Pp, st = _seq_pad_and_tile(P)               # padded seq len + seq/row tile
    M = B * Pp
    tm = _pick_div_tile(M, _ROW_TILE_TARGET, 8)

    # --- SiglipVisionEmbeddings: valid conv(stride=patch) == im2col + matmul ---
    x = pixel_values.reshape(B, C, H // ps, ps, W // ps, ps)
    x = x.transpose(0, 2, 4, 1, 3, 5).reshape(B, P, C * ps * ps).astype(cdt)
    pos = params['pos_emb']
    if Pp != P:
        x = jnp.pad(x, ((0, 0), (0, Pp - P), (0, 0)))
        pos = jnp.pad(pos, ((0, Pp - P), (0, 0)))
    hidden = patch_embed(x, params['patch_w'], params['patch_b'], pos, st)

    # --- SiglipEncoder ---
    for layer in params['layers']:
        # fused LN1 + head-split QKV projection: (3*nH, B, Pp, hd)
        qkv = ln_qkv(hidden, layer['ln1_g'], layer['ln1_b'],
                     layer['qkv_w'], layer['qkv_b'], eps, st)
        # flash attention reads q/k/v directly (no XLA transpose); pads masked
        attn = flash_attention(qkv, nH, P, scale, st, st)        # (B, nH, Pp, hd)
        # fused out-projection (+bias +residual), all heads in one block
        hidden = attn_out_proj(attn, layer['o_w'], layer['o_b'], hidden, st)
        # fused LN2 + MLP + residual
        hidden = ln_mlp(hidden.reshape(M, D), layer['ln2_g'], layer['ln2_b'],
                        layer['fc1_w'], layer['fc1_b'],
                        layer['fc2_w'], layer['fc2_b'], eps, tm).reshape(B, Pp, D)

    # --- post_layernorm ---
    out = layernorm(hidden.reshape(M, D), params['post_ln_g'],
                    params['post_ln_b'], eps, tm).reshape(B, Pp, D)
    if Pp != P:
        out = out[:, :P, :]
    return out


if __name__ == "__main__":
    # Small config; image_size=40 / patch_size=8 gives P=25, which exercises
    # the sequence-padding + kv-masking path (Pp=32 > P=25).
    cfg = dict(
        hidden_size=64,
        intermediate_size=128,
        num_attention_heads=4,
        num_hidden_layers=2,
        num_channels=3,
        image_size=40,
        patch_size=8,
        layer_norm_eps=1e-6,
    )
    key = jax.random.PRNGKey(0)
    k_params, k_pix = jax.random.split(key)
    params = init_params(k_params, cfg)

    B = 2
    pixel_values = jax.random.normal(
        k_pix, (B, cfg['num_channels'], cfg['image_size'], cfg['image_size']),
        jnp.float32)

    fwd = jax.jit(lambda pv, p: siglip_vision_forward(pv, p, cfg))
    out = fwd(pixel_values, params)
    jax.block_until_ready(out)

    P = (cfg['image_size'] // cfg['patch_size']) ** 2
    assert out.shape == (B, P, cfg['hidden_size'])
    assert jnp.isfinite(out.astype(jnp.float32)).all()
    print("KERNEL_OK")
</pallas_src>

<mosaic_0001>
module attributes {stable_mosaic.version = 11 : i64} {
  func.func @_patch_embed_kernel(%arg0: i32, %arg1: i32, %arg2: memref<1x32x192xbf16, #tpu.memory_space<vmem>>, %arg3: memref<192x64xbf16, #tpu.memory_space<vmem>>, %arg4: memref<1x64xf32, #tpu.memory_space<vmem>>, %arg5: memref<32x64xf32, #tpu.memory_space<vmem>>, %arg6: memref<1x32x64xbf16, #tpu.memory_space<vmem>>) attributes {dimension_semantics = [#tpu.dimension_semantics<parallel>, #tpu.dimension_semantics<parallel>], iteration_bounds = array<i64: 2, 1>, scalar_prefetch = 0 : i64, scratch_operands = 0 : i64, tpu.core_type = #tpu.core_type<tc>, window_params = [{transform_indices = @transform_0, window_bounds = array<i64: 1, 32, 192>}, {pipeline_mode = #tpu.pipeline_mode<synchronous>, transform_indices = @transform_1, window_bounds = array<i64: 192, 64>}, {pipeline_mode = #tpu.pipeline_mode<synchronous>, transform_indices = @transform_2, window_bounds = array<i64: 1, 64>}, {transform_indices = @transform_3, window_bounds = array<i64: 32, 64>}, {transform_indices = @transform_4, window_bounds = array<i64: 1, 32, 64>}]} {
    %c0 = arith.constant 0 : index
    %c0_0 = arith.constant 0 : index
    %c0_1 = arith.constant 0 : index
    %0 = vector.load %arg2[%c0, %c0_0, %c0_1] : memref<1x32x192xbf16, #tpu.memory_space<vmem>>, vector<1x32x192xbf16>
    %1 = vector.shape_cast %0 : vector<1x32x192xbf16> to vector<32x192xbf16>
    %c0_2 = arith.constant 0 : index
    %c0_3 = arith.constant 0 : index
    %2 = vector.load %arg3[%c0_2, %c0_3] : memref<192x64xbf16, #tpu.memory_space<vmem>>, vector<192x64xbf16>
    %cst = arith.constant dense<0.000000e+00> : vector<32x64xf32>
    %3 = tpu.matmul %1, %2, %cst {dimension_numbers = #tpu.dot_dimension_numbers<[1], [0], [0], [1], [0, 0, 1, 1], [], []>} : vector<32x192xbf16>, vector<192x64xbf16>, vector<32x64xf32> -> vector<32x64xf32>
    %c0_4 = arith.constant 0 : index
    %c0_5 = arith.constant 0 : index
    %4 = vector.load %arg4[%c0_4, %c0_5] : memref<1x64xf32, #tpu.memory_space<vmem>>, vector<1x64xf32>
    %5 = vector.broadcast %4 : vector<1x64xf32> to vector<32x64xf32>
    %6 = arith.addf %3, %5 : vector<32x64xf32>
    %c0_6 = arith.constant 0 : index
    %c0_7 = arith.constant 0 : index
    %7 = vector.load %arg5[%c0_6, %c0_7] : memref<32x64xf32, #tpu.memory_space<vmem>>, vector<32x64xf32>
    %8 = arith.addf %6, %7 : vector<32x64xf32>
    %9 = arith.truncf %8 : vector<32x64xf32> to vector<32x64xbf16>
    %c0_8 = arith.constant 0 : index
    %c0_9 = arith.constant 0 : index
    %c0_10 = arith.constant 0 : index
    %10 = vector.load %arg6[%c0_8, %c0_9, %c0_10] : memref<1x32x64xbf16, #tpu.memory_space<vmem>>, vector<1x32x64xbf16>
    %11 = vector.shape_cast %10 : vector<1x32x64xbf16> to vector<32x64xbf16>
    %12 = vector.shape_cast %9 : vector<32x64xbf16> to vector<1x32x64xbf16>
    tpu.vector_store %arg6[%c0_8, %c0_9, %c0_10], %12 {strides = array<i32>} : memref<1x32x64xbf16, #tpu.memory_space<vmem>>, vector<1x32x64xbf16>,
    return
  }
  func.func @transform_0(%arg0: i32, %arg1: i32) -> (i32, i32, i32) {
    %c0_i32 = arith.constant 0 : i32
    %c0_i32_0 = arith.constant 0 : i32
    return %arg0, %arg1, %c0_i32 : i32, i32, i32
  }
  func.func @transform_1(%arg0: i32, %arg1: i32) -> (i32, i32) {
    %c0_i32 = arith.constant 0 : i32
    %c0_i32_0 = arith.constant 0 : i32
    %c0_i32_1 = arith.constant 0 : i32
    return %c0_i32, %c0_i32_0 : i32, i32
  }
  func.func @transform_2(%arg0: i32, %arg1: i32) -> (i32, i32) {
    %c0_i32 = arith.constant 0 : i32
    %c0_i32_0 = arith.constant 0 : i32
    %c0_i32_1 = arith.constant 0 : i32
    return %c0_i32, %c0_i32_0 : i32, i32
  }
  func.func @transform_3(%arg0: i32, %arg1: i32) -> (i32, i32) {
    %c0_i32 = arith.constant 0 : i32
    %c0_i32_0 = arith.constant 0 : i32
    return %arg1, %c0_i32 : i32, i32
  }
  func.func @transform_4(%arg0: i32, %arg1: i32) -> (i32, i32, i32) {
    %c0_i32 = arith.constant 0 : i32
    %c0_i32_0 = arith.constant 0 : i32
    return %arg0, %arg1, %c0_i32 : i32, i32, i32
  }
}

module attributes {stable_mosaic.version = 11 : i64} {
  func.func @_ln_qkv_kernel(%arg0: i32, %arg1: i32, %arg2: i32, %arg3: memref<1x32x64xbf16, #tpu.memory_space<vmem>>, %arg4: memref<1x64xf32, #tpu.memory_space<vmem>>, %arg5: memref<1x64xf32, #tpu.memory_space<vmem>>, %arg6: memref<1x64x16xbf16, #tpu.memory_space<vmem>>, %arg7: memref<1x1x16xf32, #tpu.memory_space<vmem>>, %arg8: memref<1x1x32x16xbf16, #tpu.memory_space<vmem>>, %arg9: memref<32x64xbf16, #tpu.memory_space<vmem>>) attributes {dimension_semantics = [#tpu.dimension_semantics<parallel>, #tpu.dimension_semantics<parallel>, #tpu.dimension_semantics<arbitrary>], iteration_bounds = array<i64: 2, 1, 12>, scalar_prefetch = 0 : i64, scratch_operands = 1 : i64, tpu.core_type = #tpu.core_type<tc>, window_params = [{transform_indices = @transform_0, window_bounds = array<i64: 1, 32, 64>}, {pipeline_mode = #tpu.pipeline_mode<synchronous>, transform_indices = @transform_1, window_bounds = array<i64: 1, 64>}, {pipeline_mode = #tpu.pipeline_mode<synchronous>, transform_indices = @transform_2, window_bounds = array<i64: 1, 64>}, {transform_indices = @transform_3, window_bounds = array<i64: 1, 64, 16>}, {transform_indices = @transform_4, window_bounds = array<i64: 1, 1, 16>}, {transform_indices = @transform_5, window_bounds = array<i64: 1, 1, 32, 16>}]} {
    %c0_i32 = arith.constant 0 : i32
    %0 = arith.cmpi eq, %arg2, %c0_i32 : i32
    %1 = arith.extui %0 : i1 to i32
    %c0_i32_0 = arith.constant 0 : i32
    %2 = arith.cmpi ne, %1, %c0_i32_0 : i32
    scf.if %2 {
      %c0_12 = arith.constant 0 : index
      %c0_13 = arith.constant 0 : index
      %c0_14 = arith.constant 0 : index
      %15 = vector.load %arg3[%c0_12, %c0_13, %c0_14] : memref<1x32x64xbf16, #tpu.memory_space<vmem>>, vector<1x32x64xbf16>
      %16 = vector.shape_cast %15 : vector<1x32x64xbf16> to vector<32x64xbf16>
      %17 = arith.extf %16 : vector<32x64xbf16> to vector<32x64xf32>
      %cst_15 = arith.constant dense<0.000000e+00> : vector<32xf32>
      %18 = vector.multi_reduction <add>, %17, %cst_15 [1] : vector<32x64xf32> to vector<32xf32>
      %19 = vector.shape_cast %18 : vector<32xf32> to vector<32x1xf32>
      %cst_16 = arith.constant 6.400000e+01 : f32
      %20 = vector.broadcast %cst_16 : f32 to vector<32x1xf32>
      %21 = arith.divf %19, %20 : vector<32x1xf32>
      %22 = vector.broadcast %21 : vector<32x1xf32> to vector<32x64xf32>
      %23 = arith.subf %17, %22 : vector<32x64xf32>
      %24 = arith.mulf %23, %23 : vector<32x64xf32>
      %cst_17 = arith.constant dense<0.000000e+00> : vector<32xf32>
      %25 = vector.multi_reduction <add>, %24, %cst_17 [1] : vector<32x64xf32> to vector<32xf32>
      %26 = vector.shape_cast %25 : vector<32xf32> to vector<32x1xf32>
      %cst_18 = arith.constant 6.400000e+01 : f32
      %27 = vector.broadcast %cst_18 : f32 to vector<32x1xf32>
      %28 = arith.divf %26, %27 : vector<32x1xf32>
      %29 = vector.broadcast %21 : vector<32x1xf32> to vector<32x64xf32>
      %30 = arith.subf %17, %29 : vector<32x64xf32>
      %cst_19 = arith.constant 9.99999997E-7 : f32
      %31 = vector.broadcast %cst_19 : f32 to vector<32x1xf32>
      %32 = arith.addf %28, %31 : vector<32x1xf32>
      %33 = math.rsqrt %32 : vector<32x1xf32>
      %34 = vector.broadcast %33 : vector<32x1xf32> to vector<32x64xf32>
      %35 = arith.mulf %30, %34 : vector<32x64xf32>
      %c0_20 = arith.constant 0 : index
      %c0_21 = arith.constant 0 : index
      %36 = vector.load %arg4[%c0_20, %c0_21] : memref<1x64xf32, #tpu.memory_space<vmem>>, vector<1x64xf32>
      %37 = vector.broadcast %36 : vector<1x64xf32> to vector<32x64xf32>
      %38 = arith.mulf %35, %37 : vector<32x64xf32>
      %c0_22 = arith.constant 0 : index
      %c0_23 = arith.constant 0 : index
      %39 = vector.load %arg5[%c0_22, %c0_23] : memref<1x64xf32, #tpu.memory_space<vmem>>, vector<1x64xf32>
      %40 = vector.broadcast %39 : vector<1x64xf32> to vector<32x64xf32>
      %41 = arith.addf %38, %40 : vector<32x64xf32>
      %42 = arith.truncf %41 : vector<32x64xf32> to vector<32x64xbf16>
      %c0_24 = arith.constant 0 : index
      %c0_25 = arith.constant 0 : index
      %43 = vector.load %arg9[%c0_24, %c0_25] : memref<32x64xbf16, #tpu.memory_space<vmem>>, vector<32x64xbf16>
      tpu.vector_store %arg9[%c0_24, %c0_25], %42 {strides = array<i32>} : memref<32x64xbf16, #tpu.memory_space<vmem>>, vector<32x64xbf16>,
    } else {
    }
    %c0 = arith.constant 0 : index
    %c0_1 = arith.constant 0 : index
    %3 = vector.load %arg9[%c0, %c0_1] : memref<32x64xbf16, #tpu.memory_space<vmem>>, vector<32x64xbf16>
    %c0_2 = arith.constant 0 : index
    %c0_3 = arith.constant 0 : index
    %c0_4 = arith.constant 0 : index
    %4 = vector.load %arg6[%c0_2, %c0_3, %c0_4] : memref<1x64x16xbf16, #tpu.memory_space<vmem>>, vector<1x64x16xbf16>
    %5 = vector.shape_cast %4 : vector<1x64x16xbf16> to vector<64x16xbf16>
    %cst = arith.constant dense<0.000000e+00> : vector<32x16xf32>
    %6 = tpu.matmul %3, %5, %cst {dimension_numbers = #tpu.dot_dimension_numbers<[1], [0], [0], [1], [0, 0, 1, 1], [], []>} : vector<32x64xbf16>, vector<64x16xbf16>, vector<32x16xf32> -> vector<32x16xf32>
    %c0_5 = arith.constant 0 : index
    %c0_6 = arith.constant 0 : index
    %c0_7 = arith.constant 0 : index
    %7 = vector.load %arg7[%c0_5, %c0_6, %c0_7] : memref<1x1x16xf32, #tpu.memory_space<vmem>>, vector<1x1x16xf32>
    %8 = vector.shape_cast %7 : vector<1x1x16xf32> to vector<1x16xf32>
    %9 = vector.broadcast %8 : vector<1x16xf32> to vector<32x16xf32>
    %10 = arith.addf %6, %9 : vector<32x16xf32>
    %11 = arith.truncf %10 : vector<32x16xf32> to vector<32x16xbf16>
    %c0_8 = arith.constant 0 : index
    %c0_9 = arith.constant 0 : index
    %c0_10 = arith.constant 0 : index
    %c0_11 = arith.constant 0 : index
    %12 = vector.load %arg8[%c0_8, %c0_9, %c0_10, %c0_11] : memref<1x1x32x16xbf16, #tpu.memory_space<vmem>>, vector<1x1x32x16xbf16>
    %13 = vector.shape_cast %12 : vector<1x1x32x16xbf16> to vector<32x16xbf16>
    %14 = vector.shape_cast %11 : vector<32x16xbf16> to vector<1x1x32x16xbf16>
    tpu.vector_store %arg8[%c0_8, %c0_9, %c0_10, %c0_11], %14 {strides = array<i32>} : memref<1x1x32x16xbf16, #tpu.memory_space<vmem>>, vector<1x1x32x16xbf16>,
    return
  }
  func.func @transform_0(%arg0: i32, %arg1: i32, %arg2: i32) -> (i32, i32, i32) {
    %c0_i32 = arith.constant 0 : i32
    %c0_i32_0 = arith.constant 0 : i32
    return %arg0, %arg1, %c0_i32 : i32, i32, i32
  }
  func.func @transform_1(%arg0: i32, %arg1: i32, %arg2: i32) -> (i32, i32) {
    %c0_i32 = arith.constant 0 : i32
    %c0_i32_0 = arith.constant 0 : i32
    %c0_i32_1 = arith.constant 0 : i32
    return %c0_i32, %c0_i32_0 : i32, i32
  }
  func.func @transform_2(%arg0: i32, %arg1: i32, %arg2: i32) -> (i32, i32) {
    %c0_i32 = arith.constant 0 : i32
    %c0_i32_0 = arith.constant 0 : i32
    %c0_i32_1 = arith.constant 0 : i32
    return %c0_i32, %c0_i32_0 : i32, i32
  }
  func.func @transform_3(%arg0: i32, %arg1: i32, %arg2: i32) -> (i32, i32, i32) {
    %c0_i32 = arith.constant 0 : i32
    %c0_i32_0 = arith.constant 0 : i32
    %c0_i32_1 = arith.constant 0 : i32
    return %arg2, %c0_i32, %c0_i32_0 : i32, i32, i32
  }
  func.func @transform_4(%arg0: i32, %arg1: i32, %arg2: i32) -> (i32, i32, i32) {
    %c0_i32 = arith.constant 0 : i32
    %c0_i32_0 = arith.constant 0 : i32
    %c0_i32_1 = arith.constant 0 : i32
    return %arg2, %c0_i32, %c0_i32_0 : i32, i32, i32
  }
  func.func @transform_5(%arg0: i32, %arg1: i32, %arg2: i32) -> (i32, i32, i32, i32) {
    %c0_i32 = arith.constant 0 : i32
    %c0_i32_0 = arith.constant 0 : i32
    return %arg2, %arg0, %arg1, %c0_i32 : i32, i32, i32, i32
  }
}

module attributes {stable_mosaic.version = 11 : i64} {
  func.func @_flash_attn_kernel(%arg0: i32, %arg1: i32, %arg2: i32, %arg3: i32, %arg4: memref<1x1x32x16xbf16, #tpu.memory_space<vmem>>, %arg5: memref<1x1x32x16xbf16, #tpu.memory_space<vmem>>, %arg6: memref<1x1x32x16xbf16, #tpu.memory_space<vmem>>, %arg7: memref<1x1x32x16xbf16, #tpu.memory_space<vmem>>, %arg8: memref<32x1xf32, #tpu.memory_space<vmem>>, %arg9: memref<32x1xf32, #tpu.memory_space<vmem>>, %arg10: memref<32x16xf32, #tpu.memory_space<vmem>>) attributes {dimension_semantics = [#tpu.dimension_semantics<parallel>, #tpu.dimension_semantics<parallel>, #tpu.dimension_semantics<parallel>, #tpu.dimension_semantics<arbitrary>], iteration_bounds = array<i64: 4, 2, 1, 1>, scalar_prefetch = 0 : i64, scratch_operands = 3 : i64, tpu.core_type = #tpu.core_type<tc>, window_params = [{transform_indices = @transform_0, window_bounds = array<i64: 1, 1, 32, 16>}, {transform_indices = @transform_1, window_bounds = array<i64: 1, 1, 32, 16>}, {transform_indices = @transform_2, window_bounds = array<i64: 1, 1, 32, 16>}, {transform_indices = @transform_3, window_bounds = array<i64: 1, 1, 32, 16>}]} {
    %c0_i32 = arith.constant 0 : i32
    %0 = arith.cmpi eq, %arg3, %c0_i32 : i32
    %1 = arith.extui %0 : i1 to i32
    %c0_i32_0 = arith.constant 0 : i32
    %2 = arith.cmpi ne, %1, %c0_i32_0 : i32
    scf.if %2 {
      %cst_31 = arith.constant 0xFF800000 : f32
      %48 = vector.broadcast %cst_31 : f32 to vector<32x1xf32>
      %c0_32 = arith.constant 0 : index
      %c0_33 = arith.constant 0 : index
      %49 = vector.load %arg8[%c0_32, %c0_33] : memref<32x1xf32, #tpu.memory_space<vmem>>, vector<32x1xf32>
      tpu.vector_store %arg8[%c0_32, %c0_33], %48 {strides = array<i32>} : memref<32x1xf32, #tpu.memory_space<vmem>>, vector<32x1xf32>,
      %cst_34 = arith.constant 0.000000e+00 : f32
      %50 = vector.broadcast %cst_34 : f32 to vector<32x1xf32>
      %c0_35 = arith.constant 0 : index
      %c0_36 = arith.constant 0 : index
      %51 = vector.load %arg9[%c0_35, %c0_36] : memref<32x1xf32, #tpu.memory_space<vmem>>, vector<32x1xf32>
      tpu.vector_store %arg9[%c0_35, %c0_36], %50 {strides = array<i32>} : memref<32x1xf32, #tpu.memory_space<vmem>>, vector<32x1xf32>,
      %cst_37 = arith.constant 0.000000e+00 : f32
      %52 = vector.broadcast %cst_37 : f32 to vector<32x16xf32>
      %c0_38 = arith.constant 0 : index
      %c0_39 = arith.constant 0 : index
      %53 = vector.load %arg10[%c0_38, %c0_39] : memref<32x16xf32, #tpu.memory_space<vmem>>, vector<32x16xf32>
      tpu.vector_store %arg10[%c0_38, %c0_39], %52 {strides = array<i32>} : memref<32x16xf32, #tpu.memory_space<vmem>>, vector<32x16xf32>,
    } else {
    }
    %c0 = arith.constant 0 : index
    %c0_1 = arith.constant 0 : index
    %c0_2 = arith.constant 0 : index
    %c0_3 = arith.constant 0 : index
    %3 = vector.load %arg4[%c0, %c0_1, %c0_2, %c0_3] : memref<1x1x32x16xbf16, #tpu.memory_space<vmem>>, vector<1x1x32x16xbf16>
    %4 = vector.shape_cast %3 : vector<1x1x32x16xbf16> to vector<32x16xbf16>
    %5 = arith.extf %4 : vector<32x16xbf16> to vector<32x16xf32>
    %cst = arith.constant 2.500000e-01 : f32
    %6 = vector.broadcast %cst : f32 to vector<32x16xf32>
    %7 = arith.mulf %5, %6 : vector<32x16xf32>
    %8 = arith.truncf %7 : vector<32x16xf32> to vector<32x16xbf16>
    %c0_4 = arith.constant 0 : index
    %c0_5 = arith.constant 0 : index
    %c0_6 = arith.constant 0 : index
    %c0_7 = arith.constant 0 : index
    %9 = vector.load %arg5[%c0_4, %c0_5, %c0_6, %c0_7] : memref<1x1x32x16xbf16, #tpu.memory_space<vmem>>, vector<1x1x32x16xbf16>
    %10 = vector.shape_cast %9 : vector<1x1x32x16xbf16> to vector<32x16xbf16>
    %cst_8 = arith.constant dense<0.000000e+00> : vector<32x32xf32>
    %11 = tpu.matmul %8, %10, %cst_8 {dimension_numbers = #tpu.dot_dimension_numbers<[1], [1], [0], [0], [0, 0, 1, 0], [], []>} : vector<32x16xbf16>, vector<32x16xbf16>, vector<32x32xf32> -> vector<32x32xf32>
    %12 = tpu.iota {dimensions = array<i32: 1>} : vector<32x32xi32>
    %c32_i32 = arith.constant 32 : i32
    %13 = arith.muli %arg3, %c32_i32 : i32
    %14 = vector.broadcast %13 : i32 to vector<32x32xi32>
    %15 = arith.addi %12, %14 : vector<32x32xi32>
    %c25_i32 = arith.constant 25 : i32
    %16 = vector.broadcast %c25_i32 : i32 to vector<32x32xi32>
    %17 = arith.cmpi slt, %15, %16 : vector<32x32xi32>
    %cst_9 = arith.constant -1.000000e+30 : f32
    %18 = vector.broadcast %cst_9 : f32 to vector<32x32xf32>
    %19 = arith.select %17, %11, %18 : vector<32x32xi1>, vector<32x32xf32>
    %c0_10 = arith.constant 0 : index
    %c0_11 = arith.constant 0 : index
    %20 = vector.load %arg8[%c0_10, %c0_11] : memref<32x1xf32, #tpu.memory_space<vmem>>, vector<32x1xf32>
    %cst_12 = arith.constant dense<0xFF800000> : vector<32xf32>
    %21 = vector.multi_reduction <maximumf>, %19, %cst_12 [1] : vector<32x32xf32> to vector<32xf32>
    %22 = vector.shape_cast %21 : vector<32xf32> to vector<32x1xf32>
    %23 = arith.maximumf %20, %22 : vector<32x1xf32>
    %24 = arith.subf %20, %23 : vector<32x1xf32>
    %25 = math.exp %24 : vector<32x1xf32>
    %26 = vector.broadcast %23 : vector<32x1xf32> to vector<32x32xf32>
    %27 = arith.subf %19, %26 : vector<32x32xf32>
    %28 = math.exp %27 : vector<32x32xf32>
    %c0_13 = arith.constant 0 : index
    %c0_14 = arith.constant 0 : index
    %29 = vector.load %arg9[%c0_13, %c0_14] : memref<32x1xf32, #tpu.memory_space<vmem>>, vector<32x1xf32>
    %30 = arith.mulf %25, %29 : vector<32x1xf32>
    %cst_15 = arith.constant dense<0.000000e+00> : vector<32xf32>
    %31 = vector.multi_reduction <add>, %28, %cst_15 [1] : vector<32x32xf32> to vector<32xf32>
    %32 = vector.shape_cast %31 : vector<32xf32> to vector<32x1xf32>
    %33 = arith.addf %30, %32 : vector<32x1xf32>
    %c0_16 = arith.constant 0 : index
    %c0_17 = arith.constant 0 : index
    %34 = vector.load %arg9[%c0_16, %c0_17] : memref<32x1xf32, #tpu.memory_space<vmem>>, vector<32x1xf32>
    tpu.vector_store %arg9[%c0_16, %c0_17], %33 {strides = array<i32>} : memref<32x1xf32, #tpu.memory_space<vmem>>, vector<32x1xf32>,
    %c0_18 = arith.constant 0 : index
    %c0_19 = arith.constant 0 : index
    %35 = vector.load %arg10[%c0_18, %c0_19] : memref<32x16xf32, #tpu.memory_space<vmem>>, vector<32x16xf32>
    %36 = vector.broadcast %25 : vector<32x1xf32> to vector<32x16xf32>
    %37 = arith.mulf %36, %35 : vector<32x16xf32>
    %38 = arith.truncf %28 : vector<32x32xf32> to vector<32x32xbf16>
    %c0_20 = arith.constant 0 : index
    %c0_21 = arith.constant 0 : index
    %c0_22 = arith.constant 0 : index
    %c0_23 = arith.constant 0 : index
    %39 = vector.load %arg6[%c0_20, %c0_21, %c0_22, %c0_23] : memref<1x1x32x16xbf16, #tpu.memory_space<vmem>>, vector<1x1x32x16xbf16>
    %40 = vector.shape_cast %39 : vector<1x1x32x16xbf16> to vector<32x16xbf16>
    %cst_24 = arith.constant dense<0.000000e+00> : vector<32x16xf32>
    %41 = tpu.matmul %38, %40, %cst_24 {dimension_numbers = #tpu.dot_dimension_numbers<[1], [0], [0], [1], [0, 0, 1, 1], [], []>} : vector<32x32xbf16>, vector<32x16xbf16>, vector<32x16xf32> -> vector<32x16xf32>
    %42 = arith.addf %37, %41 : vector<32x16xf32>
    %c0_25 = arith.constant 0 : index
    %c0_26 = arith.constant 0 : index
    %43 = vector.load %arg10[%c0_25, %c0_26] : memref<32x16xf32, #tpu.memory_space<vmem>>, vector<32x16xf32>
    tpu.vector_store %arg10[%c0_25, %c0_26], %42 {strides = array<i32>} : memref<32x16xf32, #tpu.memory_space<vmem>>, vector<32x16xf32>,
    %c0_27 = arith.constant 0 : index
    %c0_28 = arith.constant 0 : index
    %44 = vector.load %arg8[%c0_27, %c0_28] : memref<32x1xf32, #tpu.memory_space<vmem>>, vector<32x1xf32>
    tpu.vector_store %arg8[%c0_27, %c0_28], %23 {strides = array<i32>} : memref<32x1xf32, #tpu.memory_space<vmem>>, vector<32x1xf32>,
    %c0_i32_29 = arith.constant 0 : i32
    %45 = arith.cmpi eq, %arg3, %c0_i32_29 : i32
    %46 = arith.extui %45 : i1 to i32
    %c0_i32_30 = arith.constant 0 : i32
    %47 = arith.cmpi ne, %46, %c0_i32_30 : i32
    scf.if %47 {
      %c0_31 = arith.constant 0 : index
      %c0_32 = arith.constant 0 : index
      %48 = vector.load %arg10[%c0_31, %c0_32] : memref<32x16xf32, #tpu.memory_space<vmem>>, vector<32x16xf32>
      %c0_33 = arith.constant 0 : index
      %c0_34 = arith.constant 0 : index
      %49 = vector.load %arg9[%c0_33, %c0_34] : memref<32x1xf32, #tpu.memory_space<vmem>>, vector<32x1xf32>
      %50 = vector.broadcast %49 : vector<32x1xf32> to vector<32x16xf32>
      %51 = arith.divf %48, %50 : vector<32x16xf32>
      %52 = arith.truncf %51 : vector<32x16xf32> to vector<32x16xbf16>
      %c0_35 = arith.constant 0 : index
      %c0_36 = arith.constant 0 : index
      %c0_37 = arith.constant 0 : index
      %c0_38 = arith.constant 0 : index
      %53 = vector.load %arg7[%c0_35, %c0_36, %c0_37, %c0_38] : memref<1x1x32x16xbf16, #tpu.memory_space<vmem>>, vector<1x1x32x16xbf16>
      %54 = vector.shape_cast %53 : vector<1x1x32x16xbf16> to vector<32x16xbf16>
      %55 = vector.shape_cast %52 : vector<32x16xbf16> to vector<1x1x32x16xbf16>
      tpu.vector_store %arg7[%c0_35, %c0_36, %c0_37, %c0_38], %55 {strides = array<i32>} : memref<1x1x32x16xbf16, #tpu.memory_space<vmem>>, vector<1x1x32x16xbf16>,
    } else {
    }
    return
  }
  func.func @transform_0(%arg0: i32, %arg1: i32, %arg2: i32, %arg3: i32) -> (i32, i32, i32, i32) {
    %c0_i32 = arith.constant 0 : i32
    %c0_i32_0 = arith.constant 0 : i32
    return %arg0, %arg1, %arg2, %c0_i32 : i32, i32, i32, i32
  }
  func.func @transform_1(%arg0: i32, %arg1: i32, %arg2: i32, %arg3: i32) -> (i32, i32, i32, i32) {
    %c4_i32 = arith.constant 4 : i32
    %0 = arith.addi %c4_i32, %arg0 : i32
    %c0_i32 = arith.constant 0 : i32
    %c0_i32_0 = arith.constant 0 : i32
    return %0, %arg1, %arg3, %c0_i32 : i32, i32, i32, i32
  }
  func.func @transform_2(%arg0: i32, %arg1: i32, %arg2: i32, %arg3: i32) -> (i32, i32, i32, i32) {
    %c8_i32 = arith.constant 8 : i32
    %0 = arith.addi %c8_i32, %arg0 : i32
    %c0_i32 = arith.constant 0 : i32
    %c0_i32_0 = arith.constant 0 : i32
    return %0, %arg1, %arg3, %c0_i32 : i32, i32, i32, i32
  }
  func.func @transform_3(%arg0: i32, %arg1: i32, %arg2: i32, %arg3: i32) -> (i32, i32, i32, i32) {
    %c0_i32 = arith.constant 0 : i32
    %c0_i32_0 = arith.constant 0 : i32
    return %arg1, %arg0, %arg2, %c0_i32 : i32, i32, i32, i32
  }
}

module attributes {stable_mosaic.version = 11 : i64} {
  func.func @_attn_out_kernel(%arg0: i32, %arg1: i32, %arg2: memref<1x4x32x16xbf16, #tpu.memory_space<vmem>>, %arg3: memref<4x16x64xbf16, #tpu.memory_space<vmem>>, %arg4: memref<1x64xf32, #tpu.memory_space<vmem>>, %arg5: memref<1x32x64xbf16, #tpu.memory_space<vmem>>, %arg6: memref<1x32x64xbf16, #tpu.memory_space<vmem>>) attributes {dimension_semantics = [#tpu.dimension_semantics<parallel>, #tpu.dimension_semantics<parallel>], iteration_bounds = array<i64: 2, 1>, scalar_prefetch = 0 : i64, scratch_operands = 0 : i64, tpu.core_type = #tpu.core_type<tc>, window_params = [{transform_indices = @transform_0, window_bounds = array<i64: 1, 4, 32, 16>}, {pipeline_mode = #tpu.pipeline_mode<synchronous>, transform_indices = @transform_1, window_bounds = array<i64: 4, 16, 64>}, {pipeline_mode = #tpu.pipeline_mode<synchronous>, transform_indices = @transform_2, window_bounds = array<i64: 1, 64>}, {transform_indices = @transform_3, window_bounds = array<i64: 1, 32, 64>}, {transform_indices = @transform_4, window_bounds = array<i64: 1, 32, 64>}]} {
    %c0 = arith.constant 0 : index
    %c0_0 = arith.constant 0 : index
    %c0_1 = arith.constant 0 : index
    %c0_2 = arith.constant 0 : index
    %0 = vector.load %arg2[%c0, %c0_0, %c0_1, %c0_2] : memref<1x4x32x16xbf16, #tpu.memory_space<vmem>>, vector<1x1x32x16xbf16>
    %1 = vector.shape_cast %0 : vector<1x1x32x16xbf16> to vector<32x16xbf16>
    %c0_3 = arith.constant 0 : index
    %c0_4 = arith.constant 0 : index
    %c0_5 = arith.constant 0 : index
    %2 = vector.load %arg3[%c0_3, %c0_4, %c0_5] : memref<4x16x64xbf16, #tpu.memory_space<vmem>>, vector<1x16x64xbf16>
    %3 = vector.shape_cast %2 : vector<1x16x64xbf16> to vector<16x64xbf16>
    %cst = arith.constant dense<0.000000e+00> : vector<32x64xf32>
    %4 = tpu.matmul %1, %3, %cst {dimension_numbers = #tpu.dot_dimension_numbers<[1], [0], [0], [1], [0, 0, 1, 1], [], []>} : vector<32x16xbf16>, vector<16x64xbf16>, vector<32x64xf32> -> vector<32x64xf32>
    %c0_6 = arith.constant 0 : index
    %c1 = arith.constant 1 : index
    %c0_7 = arith.constant 0 : index
    %c0_8 = arith.constant 0 : index
    %5 = vector.load %arg2[%c0_6, %c1, %c0_7, %c0_8] : memref<1x4x32x16xbf16, #tpu.memory_space<vmem>>, vector<1x1x32x16xbf16>
    %6 = vector.shape_cast %5 : vector<1x1x32x16xbf16> to vector<32x16xbf16>
    %c1_9 = arith.constant 1 : index
    %c0_10 = arith.constant 0 : index
    %c0_11 = arith.constant 0 : index
    %7 = vector.load %arg3[%c1_9, %c0_10, %c0_11] : memref<4x16x64xbf16, #tpu.memory_space<vmem>>, vector<1x16x64xbf16>
    %8 = vector.shape_cast %7 : vector<1x16x64xbf16> to vector<16x64xbf16>
    %cst_12 = arith.constant dense<0.000000e+00> : vector<32x64xf32>
    %9 = tpu.matmul %6, %8, %cst_12 {dimension_numbers = #tpu.dot_dimension_numbers<[1], [0], [0], [1], [0, 0, 1, 1], [], []>} : vector<32x16xbf16>, vector<16x64xbf16>, vector<32x64xf32> -> vector<32x64xf32>
    %10 = arith.addf %4, %9 : vector<32x64xf32>
    %c0_13 = arith.constant 0 : index
    %c2 = arith.constant 2 : index
    %c0_14 = arith.constant 0 : index
    %c0_15 = arith.constant 0 : index
    %11 = vector.load %arg2[%c0_13, %c2, %c0_14, %c0_15] : memref<1x4x32x16xbf16, #tpu.memory_space<vmem>>, vector<1x1x32x16xbf16>
    %12 = vector.shape_cast %11 : vector<1x1x32x16xbf16> to vector<32x16xbf16>
    %c2_16 = arith.constant 2 : index
    %c0_17 = arith.constant 0 : index
    %c0_18 = arith.constant 0 : index
    %13 = vector.load %arg3[%c2_16, %c0_17, %c0_18] : memref<4x16x64xbf16, #tpu.memory_space<vmem>>, vector<1x16x64xbf16>
    %14 = vector.shape_cast %13 : vector<1x16x64xbf16> to vector<16x64xbf16>
    %cst_19 = arith.constant dense<0.000000e+00> : vector<32x64xf32>
    %15 = tpu.matmul %12, %14, %cst_19 {dimension_numbers = #tpu.dot_dimension_numbers<[1], [0], [0], [1], [0, 0, 1, 1], [], []>} : vector<32x16xbf16>, vector<16x64xbf16>, vector<32x64xf32> -> vector<32x64xf32>
    %16 = arith.addf %10, %15 : vector<32x64xf32>
    %c0_20 = arith.constant 0 : index
    %c3 = arith.constant 3 : index
    %c0_21 = arith.constant 0 : index
    %c0_22 = arith.constant 0 : index
    %17 = vector.load %arg2[%c0_20, %c3, %c0_21, %c0_22] : memref<1x4x32x16xbf16, #tpu.memory_space<vmem>>, vector<1x1x32x16xbf16>
    %18 = vector.shape_cast %17 : vector<1x1x32x16xbf16> to vector<32x16xbf16>
    %c3_23 = arith.constant 3 : index
    %c0_24 = arith.constant 0 : index
    %c0_25 = arith.constant 0 : index
    %19 = vector.load %arg3[%c3_23, %c0_24, %c0_25] : memref<4x16x64xbf16, #tpu.memory_space<vmem>>, vector<1x16x64xbf16>
    %20 = vector.shape_cast %19 : vector<1x16x64xbf16> to vector<16x64xbf16>
    %cst_26 = arith.constant dense<0.000000e+00> : vector<32x64xf32>
    %21 = tpu.matmul %18, %20, %cst_26 {dimension_numbers = #tpu.dot_dimension_numbers<[1], [0], [0], [1], [0, 0, 1, 1], [], []>} : vector<32x16xbf16>, vector<16x64xbf16>, vector<32x64xf32> -> vector<32x64xf32>
    %22 = arith.addf %16, %21 : vector<32x64xf32>
    %c0_27 = arith.constant 0 : index
    %c0_28 = arith.constant 0 : index
    %23 = vector.load %arg4[%c0_27, %c0_28] : memref<1x64xf32, #tpu.memory_space<vmem>>, vector<1x64xf32>
    %24 = vector.broadcast %23 : vector<1x64xf32> to vector<32x64xf32>
    %25 = arith.addf %22, %24 : vector<32x64xf32>
    %c0_29 = arith.constant 0 : index
    %c0_30 = arith.constant 0 : index
    %c0_31 = arith.constant 0 : index
    %26 = vector.load %arg5[%c0_29, %c0_30, %c0_31] : memref<1x32x64xbf16, #tpu.memory_space<vmem>>, vector<1x32x64xbf16>
    %27 = vector.shape_cast %26 : vector<1x32x64xbf16> to vector<32x64xbf16>
    %28 = arith.extf %27 : vector<32x64xbf16> to vector<32x64xf32>
    %29 = arith.addf %25, %28 : vector<32x64xf32>
    %30 = arith.truncf %29 : vector<32x64xf32> to vector<32x64xbf16>
    %c0_32 = arith.constant 0 : index
    %c0_33 = arith.constant 0 : index
    %c0_34 = arith.constant 0 : index
    %31 = vector.load %arg6[%c0_32, %c0_33, %c0_34] : memref<1x32x64xbf16, #tpu.memory_space<vmem>>, vector<1x32x64xbf16>
    %32 = vector.shape_cast %31 : vector<1x32x64xbf16> to vector<32x64xbf16>
    %33 = vector.shape_cast %30 : vector<32x64xbf16> to vector<1x32x64xbf16>
    tpu.vector_store %arg6[%c0_32, %c0_33, %c0_34], %33 {strides = array<i32>} : memref<1x32x64xbf16, #tpu.memory_space<vmem>>, vector<1x32x64xbf16>,
    return
  }
  func.func @transform_0(%arg0: i32, %arg1: i32) -> (i32, i32, i32, i32) {
    %c0_i32 = arith.constant 0 : i32
    %c0_i32_0 = arith.constant 0 : i32
    %c0_i32_1 = arith.constant 0 : i32
    return %arg0, %c0_i32, %arg1, %c0_i32_0 : i32, i32, i32, i32
  }
  func.func @transform_1(%arg0: i32, %arg1: i32) -> (i32, i32, i32) {
    %c0_i32 = arith.constant 0 : i32
    %c0_i32_0 = arith.constant 0 : i32
    %c0_i32_1 = arith.constant 0 : i32
    %c0_i32_2 = arith.constant 0 : i32
    return %c0_i32, %c0_i32_0, %c0_i32_1 : i32, i32, i32
  }
  func.func @transform_2(%arg0: i32, %arg1: i32) -> (i32, i32) {
    %c0_i32 = arith.constant 0 : i32
    %c0_i32_0 = arith.constant 0 : i32
    %c0_i32_1 = arith.constant 0 : i32
    return %c0_i32, %c0_i32_0 : i32, i32
  }
  func.func @transform_3(%arg0: i32, %arg1: i32) -> (i32, i32, i32) {
    %c0_i32 = arith.constant 0 : i32
    %c0_i32_0 = arith.constant 0 : i32
    return %arg0, %arg1, %c0_i32 : i32, i32, i32
  }
  func.func @transform_4(%arg0: i32, %arg1: i32) -> (i32, i32, i32) {
    %c0_i32 = arith.constant 0 : i32
    %c0_i32_0 = arith.constant 0 : i32
    return %arg0, %arg1, %c0_i32 : i32, i32, i32
  }
}

module attributes {stable_mosaic.version = 11 : i64} {
  func.func @_ln_mlp_kernel(%arg0: i32, %arg1: i32, %arg2: memref<64x64xbf16, #tpu.memory_space<vmem>>, %arg3: memref<1x64xf32, #tpu.memory_space<vmem>>, %arg4: memref<1x64xf32, #tpu.memory_space<vmem>>, %arg5: memref<64x128xbf16, #tpu.memory_space<vmem>>, %arg6: memref<1x128xf32, #tpu.memory_space<vmem>>, %arg7: memref<128x64xbf16, #tpu.memory_space<vmem>>, %arg8: memref<1x64xf32, #tpu.memory_space<vmem>>, %arg9: memref<64x64xbf16, #tpu.memory_space<vmem>>, %arg10: memref<64x64xbf16, #tpu.memory_space<vmem>>, %arg11: memref<64x64xf32, #tpu.memory_space<vmem>>) attributes {dimension_semantics = [#tpu.dimension_semantics<parallel>, #tpu.dimension_semantics<arbitrary>], iteration_bounds = array<i64: 1, 1>, scalar_prefetch = 0 : i64, scratch_operands = 2 : i64, tpu.core_type = #tpu.core_type<tc>, window_params = [{transform_indices = @transform_0, window_bounds = array<i64: 64, 64>}, {pipeline_mode = #tpu.pipeline_mode<synchronous>, transform_indices = @transform_1, window_bounds = array<i64: 1, 64>}, {pipeline_mode = #tpu.pipeline_mode<synchronous>, transform_indices = @transform_2, window_bounds = array<i64: 1, 64>}, {transform_indices = @transform_3, window_bounds = array<i64: 64, 128>}, {transform_indices = @transform_4, window_bounds = array<i64: 1, 128>}, {transform_indices = @transform_5, window_bounds = array<i64: 128, 64>}, {pipeline_mode = #tpu.pipeline_mode<synchronous>, transform_indices = @transform_6, window_bounds = array<i64: 1, 64>}, {transform_indices = @transform_7, window_bounds = array<i64: 64, 64>}]} {
    %c0_i32 = arith.constant 0 : i32
    %0 = arith.cmpi eq, %arg1, %c0_i32 : i32
    %1 = arith.extui %0 : i1 to i32
    %c0_i32_0 = arith.constant 0 : i32
    %2 = arith.cmpi ne, %1, %c0_i32_0 : i32
    scf.if %2 {
      %c0_19 = arith.constant 0 : index
      %c0_20 = arith.constant 0 : index
      %31 = vector.load %arg2[%c0_19, %c0_20] : memref<64x64xbf16, #tpu.memory_space<vmem>>, vector<64x64xbf16>
      %32 = arith.extf %31 : vector<64x64xbf16> to vector<64x64xf32>
      %cst_21 = arith.constant dense<0.000000e+00> : vector<64xf32>
      %33 = vector.multi_reduction <add>, %32, %cst_21 [1] : vector<64x64xf32> to vector<64xf32>
      %34 = vector.shape_cast %33 : vector<64xf32> to vector<64x1xf32>
      %cst_22 = arith.constant 6.400000e+01 : f32
      %35 = vector.broadcast %cst_22 : f32 to vector<64x1xf32>
      %36 = arith.divf %34, %35 : vector<64x1xf32>
      %37 = vector.broadcast %36 : vector<64x1xf32> to vector<64x64xf32>
      %38 = arith.subf %32, %37 : vector<64x64xf32>
      %39 = arith.mulf %38, %38 : vector<64x64xf32>
      %cst_23 = arith.constant dense<0.000000e+00> : vector<64xf32>
      %40 = vector.multi_reduction <add>, %39, %cst_23 [1] : vector<64x64xf32> to vector<64xf32>
      %41 = vector.shape_cast %40 : vector<64xf32> to vector<64x1xf32>
      %cst_24 = arith.constant 6.400000e+01 : f32
      %42 = vector.broadcast %cst_24 : f32 to vector<64x1xf32>
      %43 = arith.divf %41, %42 : vector<64x1xf32>
      %44 = vector.broadcast %36 : vector<64x1xf32> to vector<64x64xf32>
      %45 = arith.subf %32, %44 : vector<64x64xf32>
      %cst_25 = arith.constant 9.99999997E-7 : f32
      %46 = vector.broadcast %cst_25 : f32 to vector<64x1xf32>
      %47 = arith.addf %43, %46 : vector<64x1xf32>
      %48 = math.rsqrt %47 : vector<64x1xf32>
      %49 = vector.broadcast %48 : vector<64x1xf32> to vector<64x64xf32>
      %50 = arith.mulf %45, %49 : vector<64x64xf32>
      %c0_26 = arith.constant 0 : index
      %c0_27 = arith.constant 0 : index
      %51 = vector.load %arg3[%c0_26, %c0_27] : memref<1x64xf32, #tpu.memory_space<vmem>>, vector<1x64xf32>
      %52 = vector.broadcast %51 : vector<1x64xf32> to vector<64x64xf32>
      %53 = arith.mulf %50, %52 : vector<64x64xf32>
      %c0_28 = arith.constant 0 : index
      %c0_29 = arith.constant 0 : index
      %54 = vector.load %arg4[%c0_28, %c0_29] : memref<1x64xf32, #tpu.memory_space<vmem>>, vector<1x64xf32>
      %55 = vector.broadcast %54 : vector<1x64xf32> to vector<64x64xf32>
      %56 = arith.addf %53, %55 : vector<64x64xf32>
      %57 = arith.truncf %56 : vector<64x64xf32> to vector<64x64xbf16>
      %c0_30 = arith.constant 0 : index
      %c0_31 = arith.constant 0 : index
      %58 = vector.load %arg10[%c0_30, %c0_31] : memref<64x64xbf16, #tpu.memory_space<vmem>>, vector<64x64xbf16>
      tpu.vector_store %arg10[%c0_30, %c0_31], %57 {strides = array<i32>} : memref<64x64xbf16, #tpu.memory_space<vmem>>, vector<64x64xbf16>,
      %cst_32 = arith.constant 0.000000e+00 : f32
      %59 = vector.broadcast %cst_32 : f32 to vector<64x64xf32>
      %c0_33 = arith.constant 0 : index
      %c0_34 = arith.constant 0 : index
      %60 = vector.load %arg11[%c0_33, %c0_34] : memref<64x64xf32, #tpu.memory_space<vmem>>, vector<64x64xf32>
      tpu.vector_store %arg11[%c0_33, %c0_34], %59 {strides = array<i32>} : memref<64x64xf32, #tpu.memory_space<vmem>>, vector<64x64xf32>,
    } else {
    }
    %c0 = arith.constant 0 : index
    %c0_1 = arith.constant 0 : index
    %3 = vector.load %arg10[%c0, %c0_1] : memref<64x64xbf16, #tpu.memory_space<vmem>>, vector<64x64xbf16>
    %c0_2 = arith.constant 0 : index
    %c0_3 = arith.constant 0 : index
    %4 = vector.load %arg5[%c0_2, %c0_3] : memref<64x128xbf16, #tpu.memory_space<vmem>>, vector<64x128xbf16>
    %cst = arith.constant dense<0.000000e+00> : vector<64x128xf32>
    %5 = tpu.matmul %3, %4, %cst {dimension_numbers = #tpu.dot_dimension_numbers<[1], [0], [0], [1], [0, 0, 1, 1], [], []>} : vector<64x64xbf16>, vector<64x128xbf16>, vector<64x128xf32> -> vector<64x128xf32>
    %c0_4 = arith.constant 0 : index
    %c0_5 = arith.constant 0 : index
    %6 = vector.load %arg6[%c0_4, %c0_5] : memref<1x128xf32, #tpu.memory_space<vmem>>, vector<1x128xf32>
    %7 = vector.broadcast %6 : vector<1x128xf32> to vector<64x128xf32>
    %8 = arith.addf %5, %7 : vector<64x128xf32>
    %9 = arith.truncf %8 : vector<64x128xf32> to vector<64x128xbf16>
    %cst_6 = arith.constant 5.000000e-01 : bf16
    %10 = vector.broadcast %cst_6 : bf16 to vector<64x128xbf16>
    %11 = arith.mulf %10, %9 : vector<64x128xbf16>
    %12 = arith.mulf %9, %9 : vector<64x128xbf16>
    %13 = arith.mulf %12, %9 : vector<64x128xbf16>
    %cst_7 = arith.constant 4.467770e-02 : bf16
    %14 = vector.broadcast %cst_7 : bf16 to vector<64x128xbf16>
    %15 = arith.mulf %14, %13 : vector<64x128xbf16>
    %16 = arith.addf %9, %15 : vector<64x128xbf16>
    %cst_8 = arith.constant 7.968750e-01 : bf16
    %17 = vector.broadcast %cst_8 : bf16 to vector<64x128xbf16>
    %18 = arith.mulf %17, %16 : vector<64x128xbf16>
    %19 = math.tanh %18 : vector<64x128xbf16>
    %cst_9 = arith.constant 1.000000e+00 : bf16
    %20 = vector.broadcast %cst_9 : bf16 to vector<64x128xbf16>
    %21 = arith.addf %20, %19 : vector<64x128xbf16>
    %22 = arith.mulf %11, %21 : vector<64x128xbf16>
    %c0_10 = arith.constant 0 : index
    %c0_11 = arith.constant 0 : index
    %23 = vector.load %arg11[%c0_10, %c0_11] : memref<64x64xf32, #tpu.memory_space<vmem>>, vector<64x64xf32>
    %c0_12 = arith.constant 0 : index
    %c0_13 = arith.constant 0 : index
    %24 = vector.load %arg7[%c0_12, %c0_13] : memref<128x64xbf16, #tpu.memory_space<vmem>>, vector<128x64xbf16>
    %cst_14 = arith.constant dense<0.000000e+00> : vector<64x64xf32>
    %25 = tpu.matmul %22, %24, %cst_14 {dimension_numbers = #tpu.dot_dimension_numbers<[1], [0], [0], [1], [0, 0, 1, 1], [], []>} : vector<64x128xbf16>, vector<128x64xbf16>, vector<64x64xf32> -> vector<64x64xf32>
    %26 = arith.addf %23, %25 : vector<64x64xf32>
    %c0_15 = arith.constant 0 : index
    %c0_16 = arith.constant 0 : index
    %27 = vector.load %arg11[%c0_15, %c0_16] : memref<64x64xf32, #tpu.memory_space<vmem>>, vector<64x64xf32>
    tpu.vector_store %arg11[%c0_15, %c0_16], %26 {strides = array<i32>} : memref<64x64xf32, #tpu.memory_space<vmem>>, vector<64x64xf32>,
    %c0_i32_17 = arith.constant 0 : i32
    %28 = arith.cmpi eq, %arg1, %c0_i32_17 : i32
    %29 = arith.extui %28 : i1 to i32
    %c0_i32_18 = arith.constant 0 : i32
    %30 = arith.cmpi ne, %29, %c0_i32_18 : i32
    scf.if %30 {
      %c0_19 = arith.constant 0 : index
      %c0_20 = arith.constant 0 : index
      %31 = vector.load %arg11[%c0_19, %c0_20] : memref<64x64xf32, #tpu.memory_space<vmem>>, vector<64x64xf32>
      %c0_21 = arith.constant 0 : index
      %c0_22 = arith.constant 0 : index
      %32 = vector.load %arg8[%c0_21, %c0_22] : memref<1x64xf32, #tpu.memory_space<vmem>>, vector<1x64xf32>
      %33 = vector.broadcast %32 : vector<1x64xf32> to vector<64x64xf32>
      %34 = arith.addf %31, %33 : vector<64x64xf32>
      %c0_23 = arith.constant 0 : index
      %c0_24 = arith.constant 0 : index
      %35 = vector.load %arg2[%c0_23, %c0_24] : memref<64x64xbf16, #tpu.memory_space<vmem>>, vector<64x64xbf16>
      %36 = arith.extf %35 : vector<64x64xbf16> to vector<64x64xf32>
      %37 = arith.addf %34, %36 : vector<64x64xf32>
      %38 = arith.truncf %37 : vector<64x64xf32> to vector<64x64xbf16>
      %c0_25 = arith.constant 0 : index
      %c0_26 = arith.constant 0 : index
      %39 = vector.load %arg9[%c0_25, %c0_26] : memref<64x64xbf16, #tpu.memory_space<vmem>>, vector<64x64xbf16>
      tpu.vector_store %arg9[%c0_25, %c0_26], %38 {strides = array<i32>} : memref<64x64xbf16, #tpu.memory_space<vmem>>, vector<64x64xbf16>,
    } else {
    }
    return
  }
  func.func @transform_0(%arg0: i32, %arg1: i32) -> (i32, i32) {
    %c0_i32 = arith.constant 0 : i32
    %c0_i32_0 = arith.constant 0 : i32
    return %arg0, %c0_i32 : i32, i32
  }
  func.func @transform_1(%arg0: i32, %arg1: i32) -> (i32, i32) {
    %c0_i32 = arith.constant 0 : i32
    %c0_i32_0 = arith.constant 0 : i32
    %c0_i32_1 = arith.constant 0 : i32
    return %c0_i32, %c0_i32_0 : i32, i32
  }
  func.func @transform_2(%arg0: i32, %arg1: i32) -> (i32, i32) {
    %c0_i32 = arith.constant 0 : i32
    %c0_i32_0 = arith.constant 0 : i32
    %c0_i32_1 = arith.constant 0 : i32
    return %c0_i32, %c0_i32_0 : i32, i32
  }
  func.func @transform_3(%arg0: i32, %arg1: i32) -> (i32, i32) {
    %c0_i32 = arith.constant 0 : i32
    %c0_i32_0 = arith.constant 0 : i32
    return %c0_i32, %arg1 : i32, i32
  }
  func.func @transform_4(%arg0: i32, %arg1: i32) -> (i32, i32) {
    %c0_i32 = arith.constant 0 : i32
    %c0_i32_0 = arith.constant 0 : i32
    return %c0_i32, %arg1 : i32, i32
  }
  func.func @transform_5(%arg0: i32, %arg1: i32) -> (i32, i32) {
    %c0_i32 = arith.constant 0 : i32
    %c0_i32_0 = arith.constant 0 : i32
    return %arg1, %c0_i32 : i32, i32
  }
  func.func @transform_6(%arg0: i32, %arg1: i32) -> (i32, i32) {
    %c0_i32 = arith.constant 0 : i32
    %c0_i32_0 = arith.constant 0 : i32
    %c0_i32_1 = arith.constant 0 : i32
    return %c0_i32, %c0_i32_0 : i32, i32
  }
  func.func @transform_7(%arg0: i32, %arg1: i32) -> (i32, i32) {
    %c0_i32 = arith.constant 0 : i32
    %c0_i32_0 = arith.constant 0 : i32
    return %arg0, %c0_i32 : i32, i32
  }
}

module attributes {stable_mosaic.version = 11 : i64} {
  func.func @_layernorm_kernel(%arg0: i32, %arg1: memref<64x64xbf16, #tpu.memory_space<vmem>>, %arg2: memref<1x64xf32, #tpu.memory_space<vmem>>, %arg3: memref<1x64xf32, #tpu.memory_space<vmem>>, %arg4: memref<64x64xbf16, #tpu.memory_space<vmem>>) attributes {dimension_semantics = [#tpu.dimension_semantics<parallel>], iteration_bounds = array<i64: 1>, scalar_prefetch = 0 : i64, scratch_operands = 0 : i64, tpu.core_type = #tpu.core_type<tc>, window_params = [{transform_indices = @transform_0, window_bounds = array<i64: 64, 64>}, {pipeline_mode = #tpu.pipeline_mode<synchronous>, transform_indices = @transform_1, window_bounds = array<i64: 1, 64>}, {pipeline_mode = #tpu.pipeline_mode<synchronous>, transform_indices = @transform_2, window_bounds = array<i64: 1, 64>}, {transform_indices = @transform_3, window_bounds = array<i64: 64, 64>}]} {
    %c0 = arith.constant 0 : index
    %c0_0 = arith.constant 0 : index
    %0 = vector.load %arg1[%c0, %c0_0] : memref<64x64xbf16, #tpu.memory_space<vmem>>, vector<64x64xbf16>
    %1 = arith.extf %0 : vector<64x64xbf16> to vector<64x64xf32>
    %cst = arith.constant dense<0.000000e+00> : vector<64xf32>
    %2 = vector.multi_reduction <add>, %1, %cst [1] : vector<64x64xf32> to vector<64xf32>
    %3 = vector.shape_cast %2 : vector<64xf32> to vector<64x1xf32>
    %cst_1 = arith.constant 6.400000e+01 : f32
    %4 = vector.broadcast %cst_1 : f32 to vector<64x1xf32>
    %5 = arith.divf %3, %4 : vector<64x1xf32>
    %6 = vector.broadcast %5 : vector<64x1xf32> to vector<64x64xf32>
    %7 = arith.subf %1, %6 : vector<64x64xf32>
    %8 = arith.mulf %7, %7 : vector<64x64xf32>
    %cst_2 = arith.constant dense<0.000000e+00> : vector<64xf32>
    %9 = vector.multi_reduction <add>, %8, %cst_2 [1] : vector<64x64xf32> to vector<64xf32>
    %10 = vector.shape_cast %9 : vector<64xf32> to vector<64x1xf32>
    %cst_3 = arith.constant 6.400000e+01 : f32
    %11 = vector.broadcast %cst_3 : f32 to vector<64x1xf32>
    %12 = arith.divf %10, %11 : vector<64x1xf32>
    %13 = vector.broadcast %5 : vector<64x1xf32> to vector<64x64xf32>
    %14 = arith.subf %1, %13 : vector<64x64xf32>
    %cst_4 = arith.constant 9.99999997E-7 : f32
    %15 = vector.broadcast %cst_4 : f32 to vector<64x1xf32>
    %16 = arith.addf %12, %15 : vector<64x1xf32>
    %17 = math.rsqrt %16 : vector<64x1xf32>
    %18 = vector.broadcast %17 : vector<64x1xf32> to vector<64x64xf32>
    %19 = arith.mulf %14, %18 : vector<64x64xf32>
    %c0_5 = arith.constant 0 : index
    %c0_6 = arith.constant 0 : index
    %20 = vector.load %arg2[%c0_5, %c0_6] : memref<1x64xf32, #tpu.memory_space<vmem>>, vector<1x64xf32>
    %21 = vector.broadcast %20 : vector<1x64xf32> to vector<64x64xf32>
    %22 = arith.mulf %19, %21 : vector<64x64xf32>
    %c0_7 = arith.constant 0 : index
    %c0_8 = arith.constant 0 : index
    %23 = vector.load %arg3[%c0_7, %c0_8] : memref<1x64xf32, #tpu.memory_space<vmem>>, vector<1x64xf32>
    %24 = vector.broadcast %23 : vector<1x64xf32> to vector<64x64xf32>
    %25 = arith.addf %22, %24 : vector<64x64xf32>
    %26 = arith.truncf %25 : vector<64x64xf32> to vector<64x64xbf16>
    %c0_9 = arith.constant 0 : index
    %c0_10 = arith.constant 0 : index
    %27 = vector.load %arg4[%c0_9, %c0_10] : memref<64x64xbf16, #tpu.memory_space<vmem>>, vector<64x64xbf16>
    tpu.vector_store %arg4[%c0_9, %c0_10], %26 {strides = array<i32>} : memref<64x64xbf16, #tpu.memory_space<vmem>>, vector<64x64xbf16>,
    return
  }
  func.func @transform_0(%arg0: i32) -> (i32, i32) {
    %c0_i32 = arith.constant 0 : i32
    %c0_i32_0 = arith.constant 0 : i32
    return %arg0, %c0_i32 : i32, i32
  }
  func.func @transform_1(%arg0: i32) -> (i32, i32) {
    %c0_i32 = arith.constant 0 : i32
    %c0_i32_0 = arith.constant 0 : i32
    %c0_i32_1 = arith.constant 0 : i32
    return %c0_i32, %c0_i32_0 : i32, i32
  }
  func.func @transform_2(%arg0: i32) -> (i32, i32) {
    %c0_i32 = arith.constant 0 : i32
    %c0_i32_0 = arith.constant 0 : i32
    %c0_i32_1 = arith.constant 0 : i32
    return %c0_i32, %c0_i32_0 : i32, i32
  }
  func.func @transform_3(%arg0: i32) -> (i32, i32) {
    %c0_i32 = arith.constant 0 : i32
    %c0_i32_0 = arith.constant 0 : i32
    return %arg0, %c0_i32 : i32, i32
  }
}

</mosaic_0001>

<llo_original>
// kernel: _lambda_.10
$region0: #{_lambda_.10}
  #allocation0 [shape = 'u32[]', space=smem, size = 0x4, offset = 0x4, fixed_abs, tag = 'smem constant byte address 0x4 - core index']
  #allocation1 [shape = 'u32[144,128]{1,0:T(1,128)}', space=vmem, size = 0x12000, scoped, tag = 'internal scratch']
  %s0 = inlined_call_operand.vmem [shape: bf16[2,32,192], index: 0, kind: input, shape index: {}]
  %s1 = inlined_call_operand.vmem [shape: bf16[192,64], index: 1, kind: input, shape index: {}]
  %s2 = inlined_call_operand.vmem [shape: f32[1,64], index: 2, kind: input, shape index: {}]
  %s3 = inlined_call_operand.vmem [shape: f32[32,64], index: 3, kind: input, shape index: {}]
  %s4 = inlined_call_operand.vmem [shape: bf16[2,32,64], index: 4, kind: output, shape index: {}]
  %s5 = sld [smem:[#allocation0]]
  $region49: #{_lambda_.10} parent=0
    _
  %s7 = ssub.s32 1, %s5
  %s8 = scalar_select 0, %s7, %s5
  loop: start=0, step=1, limit=4
  $region2: #{_lambda_.10} parent=0 // loop_pre_header
    _
  $region3: #{_lambda_.10} parent=0 // loop_header
    %s10 = sphi 0, %s14
    %p11 = scmp.ge.s32.totalorder %s10, 4
    %s17 = sphi 0, %s29
    %s18 = sphi 0, %s25
    %s19 = sphi 0, %s17
    %s20 = sphi 0, %s18
    %s21 = sphi 0, %s19
    %s22 = sphi 0, %s20
    %s34 = sphi 0, %s36
    %s37 = sphi 0, %s34
    %s38 = sphi 0, %s37
    %s54 = sphi 0, %s38
    %s58 = sphi 0, %s58
    %s60 = sphi 0, %s58
    %s61 = sphi 0, %s60
    %s75 = sphi 0, %s61
    %s79 = sphi 0, %s79
    %s81 = sphi 0, %s79
    %s82 = sphi 0, %s81
    %s96 = sphi 0, %s82
    %s102 = sphi 0, %s104
    %s105 = sphi 0, %s102
    %s106 = sphi 0, %s105
    %s122 = sphi 0, %s106
    %s130 = sphi 0, %s132
    %s133 = sphi 0, %s130
    %s134 = sphi 0, %s133
    %s150 = sphi 0, %s134
  $region4: #{_lambda_.10} parent=0 // loop_header_branch
    %13 = sbr.rel (%p11) target = $region8
  $region5: #{_lambda_.10} parent=0 // loop_body
    %s15 = ssub.s32 %s10, 1
    %s16 = ssub.s32 %s10, 2
    %s23 = sadd.s32 1, %s18
    %p24 = scmp.ge.s32.totalorder %s23, 1
    %s25 = scalar_select %p24, 0, %s23
    %s26 = sadd.s32 1, %s17
    %s27 = scalar_select %p24, %s26, %s17
    %p28 = scmp.ge.s32.totalorder %s27, 2
    %s29 = scalar_select %p28, 0, %s27
    %s30 = ssub.s32 %s17, %s29
    %s31 = ssub.s32 %s18, %s25
    %s32 = sor.u32 %s30, %s31
    %p33 = scmp.eq.s32.totalorder %s32, 0
    %s35 = sadd.s32 %s34, 1
    %s36 = scalar_select %p33, %s34, %s35
    %p39 = pneg %p33
    %p40 = scmp.eq.s32.totalorder %s10, 1
    %p41 = por %p39, %p40
    %p42 = scmp.ne.s32.totalorder %s34, %s37
    %p43 = scmp.eq.s32.totalorder %s10, 0
    %p44 = por %p42, %p43
    %p45 = scmp.ne.s32.totalorder %s34, %s37
    %p46 = scmp.eq.s32.totalorder %s15, 1
    %p47 = por %p45, %p46
    %p48 = scmp.ne.s32.totalorder %s37, %s38
    %p49 = scmp.eq.s32.totalorder %s15, 0
    %p50 = por %p48, %p49
    %p51 = scmp.ne.s32.totalorder %s37, %s38
    %p52 = scmp.eq.s32.totalorder %s16, 1
    %p53 = por %p51, %p52
    %p55 = scmp.ne.s32.totalorder %s38, %s54
    %p56 = scmp.eq.s32.totalorder %s16, 0
    %p57 = por %p55, %p56
    %s59 = sadd.s32 %s58, 1
    %p62 = scmp.eq.s32.totalorder %s10, 1
    %p63 = scmp.ne.s32.totalorder %s58, %s60
    %p64 = scmp.eq.s32.totalorder %s10, 0
    %p65 = por %p63, %p64
    %p66 = scmp.ne.s32.totalorder %s58, %s60
    %p67 = scmp.eq.s32.totalorder %s15, 1
    %p68 = por %p66, %p67
    %p69 = scmp.ne.s32.totalorder %s60, %s61
    %p70 = scmp.eq.s32.totalorder %s15, 0
    %p71 = por %p69, %p70
    %p72 = scmp.ne.s32.totalorder %s60, %s61
    %p73 = scmp.eq.s32.totalorder %s16, 1
    %p74 = por %p72, %p73
    %p76 = scmp.ne.s32.totalorder %s61, %s75
    %p77 = scmp.eq.s32.totalorder %s16, 0
    %p78 = por %p76, %p77
    %s80 = sadd.s32 %s79, 1
    %p83 = scmp.eq.s32.totalorder %s10, 1
    %p84 = scmp.ne.s32.totalorder %s79, %s81
    %p85 = scmp.eq.s32.totalorder %s10, 0
    %p86 = por %p84, %p85
    %p87 = scmp.ne.s32.totalorder %s79, %s81
    %p88 = scmp.eq.s32.totalorder %s15, 1
    %p89 = por %p87, %p88
    %p90 = scmp.ne.s32.totalorder %s81, %s82
    %p91 = scmp.eq.s32.totalorder %s15, 0
    %p92 = por %p90, %p91
    %p93 = scmp.ne.s32.totalorder %s81, %s82
    %p94 = scmp.eq.s32.totalorder %s16, 1
    %p95 = por %p93, %p94
    %p97 = scmp.ne.s32.totalorder %s82, %s96
    %p98 = scmp.eq.s32.totalorder %s16, 0
    %p99 = por %p97, %p98
    %s100 = ssub.s32 %s18, %s25
    %p101 = scmp.eq.s32.totalorder %s100, 0
    %s103 = sadd.s32 %s102, 1
    %s104 = scalar_select %p101, %s102, %s103
    %p107 = pneg %p101
    %p108 = scmp.eq.s32.totalorder %s10, 1
    %p109 = por %p107, %p108
    %p110 = scmp.ne.s32.totalorder %s102, %s105
    %p111 = scmp.eq.s32.totalorder %s10, 0
    %p112 = por %p110, %p111
    %p113 = scmp.ne.s32.totalorder %s102, %s105
    %p114 = scmp.eq.s32.totalorder %s15, 1
    %p115 = por %p113, %p114
    %p116 = scmp.ne.s32.totalorder %s105, %s106
    %p117 = scmp.eq.s32.totalorder %s15, 0
    %p118 = por %p116, %p117
    %p119 = scmp.ne.s32.totalorder %s105, %s106
    %p120 = scmp.eq.s32.totalorder %s16, 1
    %p121 = por %p119, %p120
    %p123 = scmp.ne.s32.totalorder %s106, %s122
    %p124 = scmp.eq.s32.totalorder %s16, 0
    %p125 = por %p123, %p124
    %s126 = ssub.s32 %s17, %s29
    %s127 = ssub.s32 %s18, %s25
    %s128 = sor.u32 %s126, %s127
    %p129 = scmp.eq.s32.totalorder %s128, 0
    %s131 = sadd.s32 %s130, 1
    %s132 = scalar_select %p129, %s130, %s131
    %p135 = pneg %p129
    %p136 = scmp.eq.s32.totalorder %s10, 1
    %p137 = por %p135, %p136
    %p138 = scmp.ne.s32.totalorder %s130, %s133
    %p139 = scmp.eq.s32.totalorder %s10, 0
    %p140 = por %p138, %p139
    %p141 = scmp.ne.s32.totalorder %s130, %s133
    %p142 = scmp.eq.s32.totalorder %s15, 1
    %p143 = por %p141, %p142
    %p144 = scmp.ne.s32.totalorder %s133, %s134
    %p145 = scmp.eq.s32.totalorder %s15, 0
    %p146 = por %p144, %p145
    %p147 = scmp.ne.s32.totalorder %s133, %s134
    %p148 = scmp.eq.s32.totalorder %s16, 1
    %p149 = por %p147, %p148
    %p151 = scmp.ne.s32.totalorder %s134, %s150
    %p152 = scmp.eq.s32.totalorder %s16, 0
    %p153 = por %p151, %p152
    %p154 = scmp.le.s32.totalorder 1, %s10
    %p155 = scmp.lt.s32.totalorder %s10, 3
    %p156 = pnand %p154, %p155
    %p157 = pneg %p156
    // Predicated region
    $region9: #{_lambda_.10} parent=5 // pred_check
      _
    $region10: #{_lambda_.10} parent=5 // pred_check_branch
      %159 = sbr.rel (%p156) target = $region12
    $region11: #{_lambda_.10} parent=5 // pred_region
      %s160 = ssub.s32 %s10, 1
      // Predicated region
      $region13: #{_lambda_.10} parent=11 // pred_check
        %p161 = pneg %p71
      $region14: #{_lambda_.10} parent=11 // pred_check_branch
        %163 = sbr.rel (%p161) target = $region16
      $region15: #{_lambda_.10} parent=11 // pred_region
        _
      $region16: #{_lambda_.10} parent=11 // pred_fallthru
        _
      // Predicated region
      $region17: #{_lambda_.10} parent=11 // pred_check
        %p164 = pneg %p92
      $region18: #{_lambda_.10} parent=11 // pred_check_branch
        %166 = sbr.rel (%p164) target = $region20
      $region19: #{_lambda_.10} parent=11 // pred_region
        _
      $region20: #{_lambda_.10} parent=11 // pred_fallthru
        _
      // Predicated region
      $region21: #{_lambda_.10} parent=11 // pred_check
        %p167 = pneg %p118
      $region22: #{_lambda_.10} parent=11 // pred_check_branch
        %169 = sbr.rel (%p167) target = $region24
      $region23: #{_lambda_.10} parent=11 // pred_region
        %s170 = smul.u32 4, %s20
        %p171 = scmp.lt.s32.totalorder %s170, 3
        %s172 = scalar_select %p171, %s170, 3
        %s173 = smul.addr %s172, 8
        %s174 = scalar_lea.vmem %s3, %s173
        %s175 = smul.u32 4, %s20
      $region24: #{_lambda_.10} parent=11 // pred_fallthru
        _
    $region12: #{_lambda_.10} parent=5 // pred_fallthru
      _
    %p176 = scmp.lt.s32.totalorder %s10, 2
    // Predicated region
    $region25: #{_lambda_.10} parent=5 // pred_check
      %p177 = pneg %p176
    $region26: #{_lambda_.10} parent=5 // pred_check_branch
      %179 = sbr.rel (%p177) target = $region28
    $region27: #{_lambda_.10} parent=5 // pred_region
      // Predicated region
      $region29: #{_lambda_.10} parent=27 // pred_check
        %p180 = pneg %p44
      $region30: #{_lambda_.10} parent=27 // pred_check_branch
        %182 = sbr.rel (%p180) target = $region32
      $region31: #{_lambda_.10} parent=27 // pred_region
        %s183 = smul.u32 4, %s18
        %p184 = scmp.lt.s32.totalorder %s17, 1
        %s185 = scalar_select %p184, %s17, 1
        %p186 = scmp.lt.s32.totalorder %s183, 3
        %s187 = scalar_select %p186, %s183, 3
        %s188 = smul.addr %s187, 2
        %s189 = smul.addr %s185, 8
        %s190 = sadd.s32 %s188, %s189
        %s191 = smul.addr %s190, 4
        %s192 = scalar_lea.vmem %s0, %s191
        %s193 = smul.u32 4, %s18
      $region32: #{_lambda_.10} parent=27 // pred_fallthru
        _
    $region28: #{_lambda_.10} parent=5 // pred_fallthru
      _
    %p194 = scmp.le.s32.totalorder 1, %s10
    %p195 = scmp.lt.s32.totalorder %s10, 3
    %p196 = pnand %p194, %p195
    %p197 = pneg %p196
    // Predicated region
    $region33: #{_lambda_.10} parent=5 // pred_check
      _
    $region34: #{_lambda_.10} parent=5 // pred_check_branch
      %199 = sbr.rel (%p196) target = $region36
    $region35: #{_lambda_.10} parent=5 // pred_region
      %s200 = ssub.s32 %s10, 1
      %s201 = smul.u32 4, %s20
      %p202 = scmp.lt.s32.totalorder %s19, 1
      %s203 = scalar_select %p202, %s19, 1
      %p204 = scmp.lt.s32.totalorder %s201, 3
      %s205 = scalar_select %p204, %s201, 3
      %s206 = smul.addr %s205, 2
      %s207 = smul.addr %s203, 8
      %s208 = sadd.s32 %s206, %s207
      %s209 = smul.addr %s208, 4
      %s210 = scalar_lea.vmem %s0, %s209
      %p211 = pneg %p50
      %p212 = pneg %p47
      %p213 = pneg %p71
      %p214 = pneg %p68
      %p215 = pneg %p92
      %p216 = pneg %p89
      %s217 = smul.u32 4, %s20
      %p218 = scmp.lt.s32.totalorder %s217, 3
      %s219 = scalar_select %p218, %s217, 3
      %s220 = smul.addr %s219, 8
      %s221 = scalar_lea.vmem %s3, %s220
      %p222 = pneg %p118
      %p223 = pneg %p115
      %p224 = pneg %p146
      %p225 = pneg %p143
      %s226 = smul.u32 4, %s20
      %p227 = scmp.lt.s32.totalorder %s19, 1
      %s228 = scalar_select %p227, %s19, 1
      %p229 = scmp.lt.s32.totalorder %s226, 3
      %s230 = scalar_select %p229, %s226, 3
      %s231 = smul.addr %s228, 4
      %s232 = sadd.s32 %s230, %s231
      %s233 = smul.addr %s232, 4
      %s234 = scalar_lea.vmem %s4, %s233
      %s235 = smul.u32 4, %s20
      %p236 = scmp.lt.s32.totalorder %s19, 1
      %s237 = scalar_select %p236, %s19, 1
      %p238 = scmp.lt.s32.totalorder %s235, 3
      %s239 = scalar_select %p238, %s235, 3
      %s240 = smul.addr %s239, 2
      %s241 = smul.addr %s237, 8
      %s242 = sadd.s32 %s240, %s241
      %s243 = smul.addr %s242, 4
      %s244 = scalar_lea.vmem %s0, %s243
      %s245 = smul.u32 4, %s20
      %s246 = smul.u32 4, %s20
      %p247 = scmp.lt.s32.totalorder %s246, 3
      %s248 = scalar_select %p247, %s246, 3
      %s249 = smul.addr %s248, 8
      %s250 = scalar_lea.vmem %s3, %s249
      %s251 = smul.u32 4, %s20
      %s252 = smul.u32 4, %s20
      %p253 = scmp.lt.s32.totalorder %s19, 1
      %s254 = scalar_select %p253, %s19, 1
      %p255 = scmp.lt.s32.totalorder %s252, 3
      %s256 = scalar_select %p255, %s252, 3
      %s257 = smul.addr %s254, 4
      %s258 = sadd.s32 %s256, %s257
      %s259 = smul.addr %s258, 4
      %s260 = scalar_lea.vmem %s4, %s259
      %s261 = smul.u32 4, %s20
      %v263 = vld [vmem:[%s244] sm:$0xff]
      %v264 = vld [vmem:[%s244 + $0x8] sm:$0xff]
      %v265 = vld [vmem:[%s244 + $0x10] sm:$0xff]
      %v266 = vld [vmem:[%s244 + $0x18] sm:$0xff]
      %v267 = vld [vmem:[%s1] sm:$0xf]
      %v268 = vld [vmem:[%s1 + $0x4] sm:$0xf]
      %v269 = vld [vmem:[%s1 + $0x8] sm:$0xf]
      %v270 = vld [vmem:[%s1 + $0xc] sm:$0xf]
      %v271 = vld [vmem:[%s1 + $0x10] sm:$0xf]
      %v272 = vld [vmem:[%s1 + $0x14] sm:$0xf]
      %v273 = vld [vmem:[%s1 + $0x18] sm:$0xf]
      %v274 = vld [vmem:[%s1 + $0x1c] sm:$0xf]
      %v275 = vld [vmem:[%s1 + $0x20] sm:$0xf]
      %v276 = vld [vmem:[%s1 + $0x24] sm:$0xf]
      %v277 = vld [vmem:[%s1 + $0x28] sm:$0xf]
      %v278 = vld [vmem:[%s1 + $0x2c] sm:$0xf]
      %v279 = vld [vmem:[%s1 + $0x30] sm:$0xf]
      %v280 = vld [vmem:[%s1 + $0x34] sm:$0xf]
      %v281 = vld [vmem:[%s1 + $0x38] sm:$0xf]
      %v282 = vld [vmem:[%s1 + $0x3c] sm:$0xf]
      %v283 = vld [vmem:[%s1 + $0x40] sm:$0xf]
      %v284 = vld [vmem:[%s1 + $0x44] sm:$0xf]
      %v285 = vld [vmem:[%s1 + $0x48] sm:$0xf]
      %v286 = vld [vmem:[%s1 + $0x4c] sm:$0xf]
      %v287 = vld [vmem:[%s1 + $0x50] sm:$0xf]
      %v288 = vld [vmem:[%s1 + $0x54] sm:$0xf]
      %v289 = vld [vmem:[%s1 + $0x58] sm:$0xf]
      %v290 = vld [vmem:[%s1 + $0x5c] sm:$0xf]
      %v291 = vld [vmem:[%s2] sm:$0x1]
      %v293 = vlaneseq
      %v294 = vshrl.u32 %v293, 7
      %v295 = vsub.s32 0, %v294
      %v296 = vrot.slane %v291, %v295
      %v302 = vunpack.c.l.b16 %v263
      %v303 = vunpack.c.h.b16 %v263
      %v304 = vunpack.c.l.b16 %v264
      %v305 = vunpack.c.h.b16 %v264
      %v306 = vunpack.c.l.b16 %v265
      %v307 = vunpack.c.h.b16 %v265
      %v308 = vunpack.c.l.b16 %v266
      %v309 = vunpack.c.h.b16 %v266
      %v310 = vpack.c.b16 %v304, %v302
      %v311 = vpack.c.b16 %v305, %v303
      %v312 = vpack.c.b16 %v308, %v306
      %v313 = vpack.c.b16 %v309, %v307
      %v340 = vunpack.c.l.b16 %v267
      %v341 = vunpack.c.l.b16 %v268
      %v342 = vunpack.c.l.b16 %v269
      %v343 = vunpack.c.l.b16 %v270
      %v344 = vunpack.c.l.b16 %v271
      %v345 = vunpack.c.l.b16 %v272
      %v346 = vunpack.c.l.b16 %v273
      %v347 = vunpack.c.l.b16 %v274
      %v348 = vunpack.c.l.b16 %v275
      %v349 = vunpack.c.l.b16 %v276
      %v350 = vunpack.c.l.b16 %v277
      %v351 = vunpack.c.l.b16 %v278
      %v352 = vunpack.c.l.b16 %v279
      %v353 = vunpack.c.l.b16 %v280
      %v354 = vunpack.c.l.b16 %v281
      %v355 = vunpack.c.l.b16 %v282
      %v356 = vunpack.c.l.b16 %v283
      %v357 = vunpack.c.l.b16 %v284
      %v358 = vunpack.c.l.b16 %v285
      %v359 = vunpack.c.l.b16 %v286
      %v360 = vunpack.c.l.b16 %v287
      %v361 = vunpack.c.l.b16 %v288
      %v362 = vunpack.c.l.b16 %v289
      %v363 = vunpack.c.l.b16 %v290
      %v364 = vpack.c.b16 %v341, %v340
      %v365 = vpack.c.b16 %v343, %v342
      %v366 = vpack.c.b16 %v345, %v344
      %v367 = vpack.c.b16 %v347, %v346
      %v368 = vpack.c.b16 %v349, %v348
      %v369 = vpack.c.b16 %v351, %v350
      %v370 = vpack.c.b16 %v353, %v352
      %v371 = vpack.c.b16 %v355, %v354
      %v372 = vpack.c.b16 %v357, %v356
      %v373 = vpack.c.b16 %v359, %v358
      %v374 = vpack.c.b16 %v361, %v360
      %v375 = vpack.c.b16 %v363, %v362
      %vm388 = vcmask 523264
      %v390 = vsel %vm388, %v311, 0
      %v393 = vsel %vm388, %v313, 0
      %395 = vmatprep.subr.bf16.mxu0 0
      %396 = vmatpush1.bf16.msra.mxu0 %v364
      %397 = vmatprep.subr.bf16.mxu0 0
      %398 = vmatpush1.bf16.msra.mxu0 %v365
      %399 = vmatprep.subr.bf16.mxu0 0
      %400 = vmatpush1.bf16.msra.mxu0 %v366
      %401 = vmatprep.subr.bf16.mxu0 0
      %402 = vmatpush1.bf16.msra.mxu0 %v367
      %403 = vmatprep.subr.bf16.mxu0 0
      %404 = vmatpush1.bf16.msra.mxu0 %v368
      %405 = vmatprep.subr.bf16.mxu0 0
      %406 = vmatpush1.bf16.msra.mxu0 %v369
      %407 = vmatprep.subr.bf16.mxu0 0
      %408 = vmatpush1.bf16.msra.mxu0 %v370
      %409 = vmatprep.subr.bf16.mxu0 0
      %410 = vmatpush1.bf16.msra.mxu0 %v371
      %411 = vmatprep.subr.bf16.mxu0 0
      %412 = vmatpush1.bf16.msra.mxu0 %v372
      %413 = vmatprep.subr.bf16.mxu0 0
      %414 = vmatpush1.bf16.msra.mxu0 %v373
      %415 = vmatprep.subr.bf16.mxu0 0
      %416 = vmatpush1.bf16.msra.mxu0 %v374
      %417 = vmatprep.subr.bf16.mxu0 0
      %418 = vmatpush1.bf16.msra.mxu0 %v375
      %419 = vmatprep.subr.bf16.mxu0 0
      %420 = vmatpush1.bf16.msra.mxu0 0
      %421 = vmatprep.subr.bf16.mxu0 0
      %422 = vmatpush1.bf16.msra.mxu0 0
      %423 = vmatprep.subr.bf16.mxu0 0
      %424 = vmatpush1.bf16.msra.mxu0 0
      %425 = vmatprep.subr.bf16.mxu0 0
      %426 = vmatpush1.bf16.msra.mxu0 0
      %427 = vmatprep.mubr.bf16.mxu0 %v390
      %428 = vmatmul.mubr.bf16.gmra.mrb[0].mxu0 %v310
      %v429 = vpop.f32.mrb[0].mxu0
      %v430 = vadd.f32 %v296, %v429
      %v431 = vpop.f32.mrb[0].mxu0
      %v432 = vpop.f32.mrb[0].mxu0
      %v433 = vadd.f32 %v296, %v432
      %v434 = vpop.f32.mrb[0].mxu0
      %435 = vmatprep.mubr.bf16.mxu0 %v393
      %436 = vmatmul.mubr.bf16.gmra.mrb[0].mxu0 %v312
      %v437 = vpop.f32.mrb[0].mxu0
      %v438 = vadd.f32 %v296, %v437
      %v439 = vpop.f32.mrb[0].mxu0
      %v440 = vpop.f32.mrb[0].mxu0
      %v441 = vadd.f32 %v296, %v440
      %v442 = vpop.f32.mrb[0].mxu0
      %443 = vdwg.mxu0
      %v444 = vld [vmem:[%s250] sm:$0xff]
      %v445 = vld [vmem:[%s250 + $0x8] sm:$0xff]
      %v446 = vld [vmem:[%s250 + $0x10] sm:$0xff]
      %v447 = vld [vmem:[%s250 + $0x18] sm:$0xff]
      %v448 = vadd.f32 %v430, %v444
      %v449 = vadd.f32 %v433, %v445
      %v450 = vadd.f32 %v438, %v446
      %v451 = vadd.f32 %v441, %v447
      %v452 = vpack.c.bf16 %v449, %v448
      %v453 = vpack.c.bf16 %v451, %v450
      %v456 = vunpack.c.l.b16 %v452
      %v457 = vunpack.c.h.b16 %v452
      %v458 = vunpack.c.l.b16 %v453
      %v459 = vunpack.c.h.b16 %v453
      %v460 = vpack.c.b16 %v456, %v456
      %v461 = vpack.c.b16 %v457, %v457
      %v462 = vpack.c.b16 %v458, %v458
      %v463 = vpack.c.b16 %v459, %v459
      %vm468 = vcmask 519168
      %469 = vst.msk [vmem:[%s260] sm:$0xf] %vm468, %v460
      %470 = vst.msk [vmem:[%s260 + $0x4] sm:$0xf] %vm468, %v461
      %471 = vst.msk [vmem:[%s260 + $0x8] sm:$0xf] %vm468, %v462
      %472 = vst.msk [vmem:[%s260 + $0xc] sm:$0xf] %vm468, %v463
      %s473 = smul.u32 4, %s20
      %p474 = scmp.lt.s32.totalorder %s19, 1
      %s475 = scalar_select %p474, %s19, 1
      %p476 = scmp.lt.s32.totalorder %s473, 3
      %s477 = scalar_select %p476, %s473, 3
      %s478 = smul.addr %s475, 4
      %s479 = sadd.s32 %s477, %s478
      %s480 = smul.addr %s479, 4
      %s481 = scalar_lea.vmem %s4, %s480
      // Predicated region
      $region37: #{_lambda_.10} parent=35 // pred_check
        %p482 = pneg %p143
      $region38: #{_lambda_.10} parent=35 // pred_check_branch
        %484 = sbr.rel (%p482) target = $region40
      $region39: #{_lambda_.10} parent=35 // pred_region
        %s485 = smul.u32 4, %s20
      $region40: #{_lambda_.10} parent=35 // pred_fallthru
        _
    $region36: #{_lambda_.10} parent=5 // pred_fallthru
      _
    %p486 = scmp.le.s32.totalorder 2, %s10
    // Predicated region
    $region41: #{_lambda_.10} parent=5 // pred_check
      %p487 = pneg %p486
    $region42: #{_lambda_.10} parent=5 // pred_check_branch
      %489 = sbr.rel (%p487) target = $region44
    $region43: #{_lambda_.10} parent=5 // pred_region
      %s490 = ssub.s32 %s10, 2
      // Predicated region
      $region45: #{_lambda_.10} parent=43 // pred_check
        %p491 = pneg %p149
      $region46: #{_lambda_.10} parent=43 // pred_check_branch
        %493 = sbr.rel (%p491) target = $region48
      $region47: #{_lambda_.10} parent=43 // pred_region
        %s494 = smul.u32 4, %s22
        %p495 = scmp.lt.s32.totalorder %s21, 1
        %s496 = scalar_select %p495, %s21, 1
        %p497 = scmp.lt.s32.totalorder %s494, 3
        %s498 = scalar_select %p497, %s494, 3
        %s499 = smul.addr %s496, 4
        %s500 = sadd.s32 %s498, %s499
        %s501 = smul.addr %s500, 4
        %s502 = scalar_lea.vmem %s4, %s501
      $region48: #{_lambda_.10} parent=43 // pred_fallthru
        _
    $region44: #{_lambda_.10} parent=5 // pred_fallthru
      _
  $region6: #{_lambda_.10} parent=0 // loop_footer
    %s14 = sadd.s32 1, %s10
  $region7: #{_lambda_.10} parent=0 // loop_footer_branch
    %9 = sbr.rel target = $region3
  $region8: #{_lambda_.10} parent=0 // loop_exit
    _

// kernel: _lambda_.11
$region0: #{_lambda_.11}
  #allocation0 [shape = 'u32[]', space=smem, size = 0x4, offset = 0x4, fixed_abs, tag = 'smem constant byte address 0x4 - core index']
  #allocation1 [shape = 'u32[144,128]{1,0:T(1,128)}', space=vmem, size = 0x12000, scoped, tag = 'internal scratch']
  #allocation2 [shape = 'bf16[32,64]{1,0:T(16,128)(2,1)}', space=vmem, size = 0x2000, scoped, tag = 'scratch operand']
  %s0 = inlined_call_operand.vmem [shape: bf16[2,32,64], index: 0, kind: input, shape index: {}]
  %s1 = inlined_call_operand.vmem [shape: f32[1,64], index: 1, kind: input, shape index: {}]
  %s2 = inlined_call_operand.vmem [shape: f32[1,64], index: 2, kind: input, shape index: {}]
  %s3 = inlined_call_operand.vmem [shape: bf16[12,64,16], index: 3, kind: input, shape index: {}]
  %s4 = inlined_call_operand.vmem [shape: f32[12,1,16], index: 4, kind: input, shape index: {}]
  %s5 = inlined_call_operand.vmem [shape: bf16[12,2,32,16], index: 5, kind: output, shape index: {}]
  %s6 = sld [smem:[#allocation0]]
  $region57: #{_lambda_.11} parent=0
    _
  %s8 = ssub.s32 1, %s6
  %s9 = scalar_select 0, %s8, %s6
  loop: start=0, step=1, limit=26
  $region2: #{_lambda_.11} parent=0 // loop_pre_header
    _
  $region3: #{_lambda_.11} parent=0 // loop_header
    %s11 = sphi 0, %s15
    %p12 = scmp.ge.s32.totalorder %s11, 26
    %s18 = sphi 0, %s37
    %s19 = sphi 0, %s33
    %s20 = sphi 0, %s29
    %s21 = sphi 0, %s18
    %s22 = sphi 0, %s19
    %s23 = sphi 0, %s20
    %s24 = sphi 0, %s21
    %s25 = sphi 0, %s22
    %s26 = sphi 0, %s23
    %s42 = sphi 0, %s44
    %s45 = sphi 0, %s42
    %s46 = sphi 0, %s45
    %s62 = sphi 0, %s46
    %s66 = sphi 0, %s66
    %s68 = sphi 0, %s66
    %s69 = sphi 0, %s68
    %s83 = sphi 0, %s69
    %s87 = sphi 0, %s87
    %s89 = sphi 0, %s87
    %s90 = sphi 0, %s89
    %s104 = sphi 0, %s90
    %s110 = sphi 0, %s112
    %s113 = sphi 0, %s110
    %s114 = sphi 0, %s113
    %s130 = sphi 0, %s114
    %s136 = sphi 0, %s138
    %s139 = sphi 0, %s136
    %s140 = sphi 0, %s139
    %s156 = sphi 0, %s140
    %s166 = sphi 0, %s168
    %s169 = sphi 0, %s166
    %s170 = sphi 0, %s169
    %s186 = sphi 0, %s170
  $region4: #{_lambda_.11} parent=0 // loop_header_branch
    %14 = sbr.rel (%p12) target = $region8
  $region5: #{_lambda_.11} parent=0 // loop_body
    %s16 = ssub.s32 %s11, 1
    %s17 = ssub.s32 %s11, 2
    %s27 = sadd.s32 1, %s20
    %p28 = scmp.ge.s32.totalorder %s27, 12
    %s29 = scalar_select %p28, 0, %s27
    %s30 = sadd.s32 1, %s19
    %s31 = scalar_select %p28, %s30, %s19
    %p32 = scmp.ge.s32.totalorder %s31, 1
    %s33 = scalar_select %p32, 0, %s31
    %s34 = sadd.s32 1, %s18
    %s35 = scalar_select %p32, %s34, %s18
    %p36 = scmp.ge.s32.totalorder %s35, 2
    %s37 = scalar_select %p36, 0, %s35
    %s38 = ssub.s32 %s18, %s37
    %s39 = ssub.s32 %s19, %s33
    %s40 = sor.u32 %s38, %s39
    %p41 = scmp.eq.s32.totalorder %s40, 0
    %s43 = sadd.s32 %s42, 1
    %s44 = scalar_select %p41, %s42, %s43
    %p47 = pneg %p41
    %p48 = scmp.eq.s32.totalorder %s11, 23
    %p49 = por %p47, %p48
    %p50 = scmp.ne.s32.totalorder %s42, %s45
    %p51 = scmp.eq.s32.totalorder %s11, 0
    %p52 = por %p50, %p51
    %p53 = scmp.ne.s32.totalorder %s42, %s45
    %p54 = scmp.eq.s32.totalorder %s16, 23
    %p55 = por %p53, %p54
    %p56 = scmp.ne.s32.totalorder %s45, %s46
    %p57 = scmp.eq.s32.totalorder %s16, 0
    %p58 = por %p56, %p57
    %p59 = scmp.ne.s32.totalorder %s45, %s46
    %p60 = scmp.eq.s32.totalorder %s17, 23
    %p61 = por %p59, %p60
    %p63 = scmp.ne.s32.totalorder %s46, %s62
    %p64 = scmp.eq.s32.totalorder %s17, 0
    %p65 = por %p63, %p64
    %s67 = sadd.s32 %s66, 1
    %p70 = scmp.eq.s32.totalorder %s11, 23
    %p71 = scmp.ne.s32.totalorder %s66, %s68
    %p72 = scmp.eq.s32.totalorder %s11, 0
    %p73 = por %p71, %p72
    %p74 = scmp.ne.s32.totalorder %s66, %s68
    %p75 = scmp.eq.s32.totalorder %s16, 23
    %p76 = por %p74, %p75
    %p77 = scmp.ne.s32.totalorder %s68, %s69
    %p78 = scmp.eq.s32.totalorder %s16, 0
    %p79 = por %p77, %p78
    %p80 = scmp.ne.s32.totalorder %s68, %s69
    %p81 = scmp.eq.s32.totalorder %s17, 23
    %p82 = por %p80, %p81
    %p84 = scmp.ne.s32.totalorder %s69, %s83
    %p85 = scmp.eq.s32.totalorder %s17, 0
    %p86 = por %p84, %p85
    %s88 = sadd.s32 %s87, 1
    %p91 = scmp.eq.s32.totalorder %s11, 23
    %p92 = scmp.ne.s32.totalorder %s87, %s89
    %p93 = scmp.eq.s32.totalorder %s11, 0
    %p94 = por %p92, %p93
    %p95 = scmp.ne.s32.totalorder %s87, %s89
    %p96 = scmp.eq.s32.totalorder %s16, 23
    %p97 = por %p95, %p96
    %p98 = scmp.ne.s32.totalorder %s89, %s90
    %p99 = scmp.eq.s32.totalorder %s16, 0
    %p100 = por %p98, %p99
    %p101 = scmp.ne.s32.totalorder %s89, %s90
    %p102 = scmp.eq.s32.totalorder %s17, 23
    %p103 = por %p101, %p102
    %p105 = scmp.ne.s32.totalorder %s90, %s104
    %p106 = scmp.eq.s32.totalorder %s17, 0
    %p107 = por %p105, %p106
    %s108 = ssub.s32 %s20, %s29
    %p109 = scmp.eq.s32.totalorder %s108, 0
    %s111 = sadd.s32 %s110, 1
    %s112 = scalar_select %p109, %s110, %s111
    %p115 = pneg %p109
    %p116 = scmp.eq.s32.totalorder %s11, 23
    %p117 = por %p115, %p116
    %p118 = scmp.ne.s32.totalorder %s110, %s113
    %p119 = scmp.eq.s32.totalorder %s11, 0
    %p120 = por %p118, %p119
    %p121 = scmp.ne.s32.totalorder %s110, %s113
    %p122 = scmp.eq.s32.totalorder %s16, 23
    %p123 = por %p121, %p122
    %p124 = scmp.ne.s32.totalorder %s113, %s114
    %p125 = scmp.eq.s32.totalorder %s16, 0
    %p126 = por %p124, %p125
    %p127 = scmp.ne.s32.totalorder %s113, %s114
    %p128 = scmp.eq.s32.totalorder %s17, 23
    %p129 = por %p127, %p128
    %p131 = scmp.ne.s32.totalorder %s114, %s130
    %p132 = scmp.eq.s32.totalorder %s17, 0
    %p133 = por %p131, %p132
    %s134 = ssub.s32 %s20, %s29
    %p135 = scmp.eq.s32.totalorder %s134, 0
    %s137 = sadd.s32 %s136, 1
    %s138 = scalar_select %p135, %s136, %s137
    %p141 = pneg %p135
    %p142 = scmp.eq.s32.totalorder %s11, 23
    %p143 = por %p141, %p142
    %p144 = scmp.ne.s32.totalorder %s136, %s139
    %p145 = scmp.eq.s32.totalorder %s11, 0
    %p146 = por %p144, %p145
    %p147 = scmp.ne.s32.totalorder %s136, %s139
    %p148 = scmp.eq.s32.totalorder %s16, 23
    %p149 = por %p147, %p148
    %p150 = scmp.ne.s32.totalorder %s139, %s140
    %p151 = scmp.eq.s32.totalorder %s16, 0
    %p152 = por %p150, %p151
    %p153 = scmp.ne.s32.totalorder %s139, %s140
    %p154 = scmp.eq.s32.totalorder %s17, 23
    %p155 = por %p153, %p154
    %p157 = scmp.ne.s32.totalorder %s140, %s156
    %p158 = scmp.eq.s32.totalorder %s17, 0
    %p159 = por %p157, %p158
    %s160 = ssub.s32 %s20, %s29
    %s161 = ssub.s32 %s18, %s37
    %s162 = sor.u32 %s160, %s161
    %s163 = ssub.s32 %s19, %s33
    %s164 = sor.u32 %s162, %s163
    %p165 = scmp.eq.s32.totalorder %s164, 0
    %s167 = sadd.s32 %s166, 1
    %s168 = scalar_select %p165, %s166, %s167
    %p171 = pneg %p165
    %p172 = scmp.eq.s32.totalorder %s11, 23
    %p173 = por %p171, %p172
    %p174 = scmp.ne.s32.totalorder %s166, %s169
    %p175 = scmp.eq.s32.totalorder %s11, 0
    %p176 = por %p174, %p175
    %p177 = scmp.ne.s32.totalorder %s166, %s169
    %p178 = scmp.eq.s32.totalorder %s16, 23
    %p179 = por %p177, %p178
    %p180 = scmp.ne.s32.totalorder %s169, %s170
    %p181 = scmp.eq.s32.totalorder %s16, 0
    %p182 = por %p180, %p181
    %p183 = scmp.ne.s32.totalorder %s169, %s170
    %p184 = scmp.eq.s32.totalorder %s17, 23
    %p185 = por %p183, %p184
    %p187 = scmp.ne.s32.totalorder %s170, %s186
    %p188 = scmp.eq.s32.totalorder %s17, 0
    %p189 = por %p187, %p188
    %p190 = scmp.le.s32.totalorder 1, %s11
    %p191 = scmp.lt.s32.totalorder %s11, 25
    %p192 = pnand %p190, %p191
    %p193 = pneg %p192
    // Predicated region
    $region9: #{_lambda_.11} parent=5 // pred_check
      _
    $region10: #{_lambda_.11} parent=5 // pred_check_branch
      %195 = sbr.rel (%p192) target = $region12
    $region11: #{_lambda_.11} parent=5 // pred_region
      %s196 = ssub.s32 %s11, 1
      // Predicated region
      $region13: #{_lambda_.11} parent=11 // pred_check
        %p197 = pneg %p79
      $region14: #{_lambda_.11} parent=11 // pred_check_branch
        %199 = sbr.rel (%p197) target = $region16
      $region15: #{_lambda_.11} parent=11 // pred_region
        _
      $region16: #{_lambda_.11} parent=11 // pred_fallthru
        _
      // Predicated region
      $region17: #{_lambda_.11} parent=11 // pred_check
        %p200 = pneg %p100
      $region18: #{_lambda_.11} parent=11 // pred_check_branch
        %202 = sbr.rel (%p200) target = $region20
      $region19: #{_lambda_.11} parent=11 // pred_region
        _
      $region20: #{_lambda_.11} parent=11 // pred_fallthru
        _
    $region12: #{_lambda_.11} parent=5 // pred_fallthru
      _
    %p203 = scmp.lt.s32.totalorder %s11, 24
    // Predicated region
    $region21: #{_lambda_.11} parent=5 // pred_check
      %p204 = pneg %p203
    $region22: #{_lambda_.11} parent=5 // pred_check_branch
      %206 = sbr.rel (%p204) target = $region24
    $region23: #{_lambda_.11} parent=5 // pred_region
      // Predicated region
      $region25: #{_lambda_.11} parent=23 // pred_check
        %p207 = pneg %p52
      $region26: #{_lambda_.11} parent=23 // pred_check_branch
        %209 = sbr.rel (%p207) target = $region28
      $region27: #{_lambda_.11} parent=23 // pred_region
        %s210 = smul.u32 4, %s19
        %p211 = scmp.lt.s32.totalorder %s18, 1
        %s212 = scalar_select %p211, %s18, 1
        %p213 = scmp.lt.s32.totalorder %s210, 3
        %s214 = scalar_select %p213, %s210, 3
        %s215 = smul.addr %s212, 4
        %s216 = sadd.s32 %s214, %s215
        %s217 = smul.addr %s216, 4
        %s218 = scalar_lea.vmem %s0, %s217
        %s219 = smul.u32 4, %s19
      $region28: #{_lambda_.11} parent=23 // pred_fallthru
        _
      // Predicated region
      $region29: #{_lambda_.11} parent=23 // pred_check
        %p220 = pneg %p120
      $region30: #{_lambda_.11} parent=23 // pred_check_branch
        %222 = sbr.rel (%p220) target = $region32
      $region31: #{_lambda_.11} parent=23 // pred_region
        %p223 = scmp.lt.s32.totalorder %s20, 11
        %s224 = scalar_select %p223, %s20, 11
        %s225 = smul.addr %s224, 8
        %s226 = smul.addr %s225, 4
        %s227 = scalar_lea.vmem %s3, %s226
      $region32: #{_lambda_.11} parent=23 // pred_fallthru
        _
      // Predicated region
      $region33: #{_lambda_.11} parent=23 // pred_check
        %p228 = pneg %p146
      $region34: #{_lambda_.11} parent=23 // pred_check_branch
        %230 = sbr.rel (%p228) target = $region36
      $region35: #{_lambda_.11} parent=23 // pred_region
        %p231 = scmp.lt.s32.totalorder %s20, 11
        %s232 = scalar_select %p231, %s20, 11
        %s233 = scalar_lea.vmem %s4, %s232
      $region36: #{_lambda_.11} parent=23 // pred_fallthru
        _
    $region24: #{_lambda_.11} parent=5 // pred_fallthru
      _
    %p234 = scmp.le.s32.totalorder 1, %s11
    %p235 = scmp.lt.s32.totalorder %s11, 25
    %p236 = pnand %p234, %p235
    %p237 = pneg %p236
    // Predicated region
    $region37: #{_lambda_.11} parent=5 // pred_check
      _
    $region38: #{_lambda_.11} parent=5 // pred_check_branch
      %239 = sbr.rel (%p236) target = $region40
    $region39: #{_lambda_.11} parent=5 // pred_region
      %s240 = ssub.s32 %s11, 1
      %s241 = smul.u32 4, %s22
      %p242 = scmp.lt.s32.totalorder %s21, 1
      %s243 = scalar_select %p242, %s21, 1
      %p244 = scmp.lt.s32.totalorder %s241, 3
      %s245 = scalar_select %p244, %s241, 3
      %s246 = smul.addr %s243, 4
      %s247 = sadd.s32 %s245, %s246
      %s248 = smul.addr %s247, 4
      %s249 = scalar_lea.vmem %s0, %s248
      %p250 = pneg %p58
      %p251 = pneg %p55
      %p252 = pneg %p79
      %p253 = pneg %p76
      %p254 = pneg %p100
      %p255 = pneg %p97
      %p256 = scmp.lt.s32.totalorder %s23, 11
      %s257 = scalar_select %p256, %s23, 11
      %s258 = smul.addr %s257, 8
      %s259 = smul.addr %s258, 4
      %s260 = scalar_lea.vmem %s3, %s259
      %p261 = pneg %p126
      %p262 = pneg %p123
      %p263 = scmp.lt.s32.totalorder %s23, 11
      %s264 = scalar_select %p263, %s23, 11
      %s265 = scalar_lea.vmem %s4, %s264
      %p266 = pneg %p152
      %p267 = pneg %p149
      %p268 = pneg %p182
      %p269 = pneg %p179
      %s270 = smul.u32 4, %s22
      %p271 = scmp.lt.s32.totalorder %s23, 11
      %s272 = scalar_select %p271, %s23, 11
      %p273 = scmp.lt.s32.totalorder %s21, 1
      %s274 = scalar_select %p273, %s21, 1
      %p275 = scmp.lt.s32.totalorder %s270, 3
      %s276 = scalar_select %p275, %s270, 3
      %s277 = smul.addr %s274, 4
      %s278 = sadd.s32 %s276, %s277
      %s279 = smul.addr %s272, 8
      %s280 = sadd.s32 %s278, %s279
      %s281 = smul.addr %s280, 4
      %s282 = scalar_lea.vmem %s5, %s281
      %s283 = smul.u32 4, %s22
      %p284 = scmp.lt.s32.totalorder %s21, 1
      %s285 = scalar_select %p284, %s21, 1
      %p286 = scmp.lt.s32.totalorder %s283, 3
      %s287 = scalar_select %p286, %s283, 3
      %s288 = smul.addr %s285, 4
      %s289 = sadd.s32 %s287, %s288
      %s290 = smul.addr %s289, 4
      %s291 = scalar_lea.vmem %s0, %s290
      %s292 = smul.u32 4, %s22
      %p293 = scmp.lt.s32.totalorder %s23, 11
      %s294 = scalar_select %p293, %s23, 11
      %s295 = smul.addr %s294, 8
      %s296 = smul.addr %s295, 4
      %s297 = scalar_lea.vmem %s3, %s296
      %p298 = scmp.lt.s32.totalorder %s23, 11
      %s299 = scalar_select %p298, %s23, 11
      %s300 = scalar_lea.vmem %s4, %s299
      %s301 = smul.u32 4, %s22
      %p302 = scmp.lt.s32.totalorder %s23, 11
      %s303 = scalar_select %p302, %s23, 11
      %p304 = scmp.lt.s32.totalorder %s21, 1
      %s305 = scalar_select %p304, %s21, 1
      %p306 = scmp.lt.s32.totalorder %s301, 3
      %s307 = scalar_select %p306, %s301, 3
      %s308 = smul.addr %s305, 4
      %s309 = sadd.s32 %s307, %s308
      %s310 = smul.addr %s303, 8
      %s311 = sadd.s32 %s309, %s310
      %s312 = smul.addr %s311, 4
      %s313 = scalar_lea.vmem %s5, %s312
      %s314 = smul.u32 4, %s22
      %p316 = scmp.eq.s32.totalorder %s23, 0
      // Predicated region
      $region41: #{_lambda_.11} parent=39 // pred_check
        %p317 = pneg %p316
      $region42: #{_lambda_.11} parent=39 // pred_check_branch
        %319 = sbr.rel (%p317) target = $region44
      $region43: #{_lambda_.11} parent=39 // pred_region
        %v320 = vld [vmem:[%s291] sm:$0xf]
        %v321 = vld [vmem:[%s291 + $0x4] sm:$0xf]
        %v322 = vld [vmem:[%s291 + $0x8] sm:$0xf]
        %v323 = vld [vmem:[%s291 + $0xc] sm:$0xf]
        %v324 = vunpack.c.l.bf16 %v320
        %v325 = vunpack.c.l.bf16 %v321
        %v326 = vunpack.c.l.bf16 %v322
        %v327 = vunpack.c.l.bf16 %v323
        %vm328 = vcmask 523264
        %v329 = vsel %vm328, %v324, 0.0
        %330 = vadd.xlane.f32.xlu0 %v329
        %v331 = vpop.xlane.xlu0 %330
        %v332 = vsel %vm328, %v325, 0.0
        %333 = vadd.xlane.f32.xlu0 %v332
        %v334 = vpop.xlane.xlu0 %333
        %v335 = vsel %vm328, %v326, 0.0
        %336 = vadd.xlane.f32.xlu0 %v335
        %v337 = vpop.xlane.xlu0 %336
        %v338 = vsel %vm328, %v327, 0.0
        %339 = vadd.xlane.f32.xlu0 %v338
        %v340 = vpop.xlane.xlu0 %339
        %v341 = vrcp.pop 64.0
        %v342 = vmul.f32 %v331, %v341
        %v343 = vmul.f32 %v334, %v341
        %v344 = vmul.f32 %v337, %v341
        %v345 = vmul.f32 %v340, %v341
        %v346 = vsub.f32 %v324, %v342
        %v347 = vsub.f32 %v325, %v343
        %v348 = vsub.f32 %v326, %v344
        %v349 = vsub.f32 %v327, %v345
        %v350 = vmul.f32 %v346, %v346
        %v351 = vmul.f32 %v347, %v347
        %v352 = vmul.f32 %v348, %v348
        %v353 = vmul.f32 %v349, %v349
        %v354 = vsel %vm328, %v350, 0.0
        %355 = vadd.xlane.f32.xlu0 %v354
        %v356 = vpop.xlane.xlu0 %355
        %v357 = vsel %vm328, %v351, 0.0
        %358 = vadd.xlane.f32.xlu0 %v357
        %v359 = vpop.xlane.xlu0 %358
        %v360 = vsel %vm328, %v352, 0.0
        %361 = vadd.xlane.f32.xlu0 %v360
        %v362 = vpop.xlane.xlu0 %361
        %v363 = vsel %vm328, %v353, 0.0
        %364 = vadd.xlane.f32.xlu0 %v363
        %v365 = vpop.xlane.xlu0 %364
        %v366 = vmul.f32 %v356, %v341
        %v367 = vmul.f32 %v359, %v341
        %v368 = vmul.f32 %v362, %v341
        %v369 = vmul.f32 %v365, %v341
        %v370 = vadd.f32 %v366, 1e-06
        %v371 = vadd.f32 %v367, 1e-06
        %v372 = vadd.f32 %v368, 1e-06
        %v373 = vadd.f32 %v369, 1e-06
        %v374 = vrsqrt.pop %v370
        %v375 = vrsqrt.pop %v371
        %v376 = vrsqrt.pop %v372
        %v377 = vrsqrt.pop %v373
        %v378 = vmul.f32 %v346, %v374
        %v379 = vmul.f32 %v347, %v375
        %v380 = vmul.f32 %v348, %v376
        %v381 = vmul.f32 %v349, %v377
        %v382 = vld [vmem:[%s1] sm:$0x1]
        %v384 = vlaneseq
        %v385 = vshrl.u32 %v384, 7
        %v386 = vsub.s32 0, %v385
        %v387 = vrot.slane %v382, %v386
        %v389 = vmul.f32 %v378, %v387
        %v390 = vmul.f32 %v379, %v387
        %v391 = vmul.f32 %v380, %v387
        %v392 = vmul.f32 %v381, %v387
        %v393 = vld [vmem:[%s2] sm:$0x1]
        %v395 = vlaneseq
        %v396 = vshrl.u32 %v395, 7
        %v397 = vsub.s32 0, %v396
        %v398 = vrot.slane %v393, %v397
        %v400 = vadd.f32 %v389, %v398
        %v401 = vadd.f32 %v390, %v398
        %v402 = vadd.f32 %v391, %v398
        %v403 = vadd.f32 %v392, %v398
        %v404 = vpack.c.bf16 %v401, %v400
        %v405 = vpack.c.bf16 %v403, %v402
        %406 = vst.msk [vmem:[#allocation2] sm:$0xff] %vm328, %v404
        %407 = vst.msk [vmem:[#allocation2 + $0x8] sm:$0xff] %vm328, %v405
      $region44: #{_lambda_.11} parent=39 // pred_fallthru
        _
      %v408 = vld [vmem:[#allocation2] sm:$0xff]
      %v409 = vld [vmem:[#allocation2 + $0x8] sm:$0xff]
      %v410 = vld [vmem:[%s297] sm:$0xf]
      %v411 = vld [vmem:[%s297 + $0x4] sm:$0xf]
      %v412 = vld [vmem:[%s297 + $0x8] sm:$0xf]
      %v413 = vld [vmem:[%s297 + $0xc] sm:$0xf]
      %v414 = vld [vmem:[%s297 + $0x10] sm:$0xf]
      %v415 = vld [vmem:[%s297 + $0x14] sm:$0xf]
      %v416 = vld [vmem:[%s297 + $0x18] sm:$0xf]
      %v417 = vld [vmem:[%s297 + $0x1c] sm:$0xf]
      %v418 = vld [vmem:[%s300] sm:$0x1]
      %v420 = vlaneseq
      %v421 = vshrl.u32 %v420, 7
      %v422 = vsub.s32 0, %v421
      %v423 = vrot.slane %v418, %v422
      %v433 = vunpack.c.l.b16 %v410
      %v434 = vunpack.c.l.b16 %v411
      %v435 = vunpack.c.l.b16 %v412
      %v436 = vunpack.c.l.b16 %v413
      %v437 = vunpack.c.l.b16 %v414
      %v438 = vunpack.c.l.b16 %v415
      %v439 = vunpack.c.l.b16 %v416
      %v440 = vunpack.c.l.b16 %v417
      %v441 = vpack.c.b16 %v434, %v433
      %v442 = vpack.c.b16 %v436, %v435
      %v443 = vpack.c.b16 %v438, %v437
      %v444 = vpack.c.b16 %v440, %v439
      %vm449 = vcmask 523264
      %v451 = vsel %vm449, %v408, 0
      %v454 = vsel %vm449, %v409, 0
      %456 = vmatprep.subr.bf16.mxu0 0
      %457 = vmatpush1.bf16.msra.mxu0 %v441
      %458 = vmatprep.subr.bf16.mxu0 0
      %459 = vmatpush1.bf16.msra.mxu0 %v442
      %460 = vmatprep.subr.bf16.mxu0 0
      %461 = vmatpush1.bf16.msra.mxu0 %v443
      %462 = vmatprep.subr.bf16.mxu0 0
      %463 = vmatpush1.bf16.msra.mxu0 %v444
      %464 = vmatprep.subr.bf16.mxu0 0
      %465 = vmatpush1.bf16.msra.mxu0 0
      %466 = vmatprep.subr.bf16.mxu0 0
      %467 = vmatpush1.bf16.msra.mxu0 0
      %468 = vmatprep.subr.bf16.mxu0 0
      %469 = vmatpush1.bf16.msra.mxu0 0
      %470 = vmatprep.subr.bf16.mxu0 0
      %471 = vmatpush1.bf16.msra.mxu0 0
      %472 = vmatprep.subr.bf16.mxu0 0
      %473 = vmatpush1.bf16.msra.mxu0 0
      %474 = vmatprep.subr.bf16.mxu0 0
      %475 = vmatpush1.bf16.msra.mxu0 0
      %476 = vmatprep.subr.bf16.mxu0 0
      %477 = vmatpush1.bf16.msra.mxu0 0
      %478 = vmatprep.subr.bf16.mxu0 0
      %479 = vmatpush1.bf16.msra.mxu0 0
      %480 = vmatprep.subr.bf16.mxu0 0
      %481 = vmatpush1.bf16.msra.mxu0 0
      %482 = vmatprep.subr.bf16.mxu0 0
      %483 = vmatpush1.bf16.msra.mxu0 0
      %484 = vmatprep.subr.bf16.mxu0 0
      %485 = vmatpush1.bf16.msra.mxu0 0
      %486 = vmatprep.subr.bf16.mxu0 0
      %487 = vmatpush1.bf16.msra.mxu0 0
      %488 = vmatprep.mubr.bf16.mxu0 0
      %489 = vmatmul.mubr.bf16.gmra.mrb[0].mxu0 %v451
      %v490 = vpop.f32.mrb[0].mxu0
      %v491 = vadd.f32 %v423, %v490
      %v492 = vpop.f32.mrb[0].mxu0
      %v493 = vpop.f32.mrb[0].mxu0
      %v494 = vadd.f32 %v423, %v493
      %v495 = vpop.f32.mrb[0].mxu0
      %496 = vmatprep.mubr.bf16.mxu0 0
      %497 = vmatmul.mubr.bf16.gmra.mrb[0].mxu0 %v454
      %v498 = vpop.f32.mrb[0].mxu0
      %v499 = vadd.f32 %v423, %v498
      %v500 = vpop.f32.mrb[0].mxu0
      %v501 = vpop.f32.mrb[0].mxu0
      %v502 = vadd.f32 %v423, %v501
      %v503 = vpop.f32.mrb[0].mxu0
      %504 = vdwg.mxu0
      %v505 = vpack.c.bf16 %v494, %v491
      %v506 = vpack.c.bf16 %v502, %v499
      %v509 = vunpack.c.l.b16 %v505
      %v510 = vunpack.c.h.b16 %v505
      %v511 = vunpack.c.l.b16 %v506
      %v512 = vunpack.c.h.b16 %v506
      %v513 = vpack.c.b16 %v509, %v509
      %v514 = vpack.c.b16 %v510, %v510
      %v515 = vpack.c.b16 %v511, %v511
      %v516 = vpack.c.b16 %v512, %v512
      %vm521 = vcmask 125952
      %522 = vst.msk [vmem:[%s313] sm:$0xf] %vm521, %v513
      %523 = vst.msk [vmem:[%s313 + $0x4] sm:$0xf] %vm521, %v514
      %524 = vst.msk [vmem:[%s313 + $0x8] sm:$0xf] %vm521, %v515
      %525 = vst.msk [vmem:[%s313 + $0xc] sm:$0xf] %vm521, %v516
      %s526 = smul.u32 4, %s22
      %p527 = scmp.lt.s32.totalorder %s23, 11
      %s528 = scalar_select %p527, %s23, 11
      %p529 = scmp.lt.s32.totalorder %s21, 1
      %s530 = scalar_select %p529, %s21, 1
      %p531 = scmp.lt.s32.totalorder %s526, 3
      %s532 = scalar_select %p531, %s526, 3
      %s533 = smul.addr %s530, 4
      %s534 = sadd.s32 %s532, %s533
      %s535 = smul.addr %s528, 8
      %s536 = sadd.s32 %s534, %s535
      %s537 = smul.addr %s536, 4
      %s538 = scalar_lea.vmem %s5, %s537
      // Predicated region
      $region45: #{_lambda_.11} parent=39 // pred_check
        %p539 = pneg %p179
      $region46: #{_lambda_.11} parent=39 // pred_check_branch
        %541 = sbr.rel (%p539) target = $region48
      $region47: #{_lambda_.11} parent=39 // pred_region
        %s542 = smul.u32 4, %s22
      $region48: #{_lambda_.11} parent=39 // pred_fallthru
        _
    $region40: #{_lambda_.11} parent=5 // pred_fallthru
      _
    %p543 = scmp.le.s32.totalorder 2, %s11
    // Predicated region
    $region49: #{_lambda_.11} parent=5 // pred_check
      %p544 = pneg %p543
    $region50: #{_lambda_.11} parent=5 // pred_check_branch
      %546 = sbr.rel (%p544) target = $region52
    $region51: #{_lambda_.11} parent=5 // pred_region
      %s547 = ssub.s32 %s11, 2
      // Predicated region
      $region53: #{_lambda_.11} parent=51 // pred_check
        %p548 = pneg %p185
      $region54: #{_lambda_.11} parent=51 // pred_check_branch
        %550 = sbr.rel (%p548) target = $region56
      $region55: #{_lambda_.11} parent=51 // pred_region
        %s551 = smul.u32 4, %s25
        %p552 = scmp.lt.s32.totalorder %s26, 11
        %s553 = scalar_select %p552, %s26, 11
        %p554 = scmp.lt.s32.totalorder %s24, 1
        %s555 = scalar_select %p554, %s24, 1
        %p556 = scmp.lt.s32.totalorder %s551, 3
        %s557 = scalar_select %p556, %s551, 3
        %s558 = smul.addr %s555, 4
        %s559 = sadd.s32 %s557, %s558
        %s560 = smul.addr %s553, 8
        %s561 = sadd.s32 %s559, %s560
        %s562 = smul.addr %s561, 4
        %s563 = scalar_lea.vmem %s5, %s562
      $region56: #{_lambda_.11} parent=51 // pred_fallthru
        _
    $region52: #{_lambda_.11} parent=5 // pred_fallthru
      _
  $region6: #{_lambda_.11} parent=0 // loop_footer
    %s15 = sadd.s32 1, %s11
  $region7: #{_lambda_.11} parent=0 // loop_footer_branch
    %10 = sbr.rel target = $region3
  $region8: #{_lambda_.11} parent=0 // loop_exit
    _

// kernel: _lambda_.12
$region0: #{_lambda_.12}
  #allocation0 [shape = 'u32[]', space=smem, size = 0x4, offset = 0x4, fixed_abs, tag = 'smem constant byte address 0x4 - core index']
  #allocation1 [shape = 'u32[144,128]{1,0:T(1,128)}', space=vmem, size = 0x12000, scoped, tag = 'internal scratch']
  #allocation2 [shape = 'f32[32,1]{1,0:T(8,128)}', space=vmem, size = 0x4000, scoped, tag = 'scratch operand']
  #allocation3 [shape = 'f32[32,1]{1,0:T(8,128)}', space=vmem, size = 0x4000, scoped, tag = 'scratch operand']
  #allocation4 [shape = 'f32[32,16]{1,0:T(8,128)}', space=vmem, size = 0x4000, scoped, tag = 'scratch operand']
  %s0 = inlined_call_operand.vmem [shape: bf16[12,2,32,16], index: 0, kind: input, shape index: {}, may-alias: {0,1,2}]
  %s1 = inlined_call_operand.vmem [shape: bf16[12,2,32,16], index: 1, kind: input, shape index: {}, may-alias: {0,1,2}]
  %s2 = inlined_call_operand.vmem [shape: bf16[12,2,32,16], index: 2, kind: input, shape index: {}, may-alias: {0,1,2}]
  %s3 = inlined_call_operand.vmem [shape: bf16[2,4,32,16], index: 3, kind: output, shape index: {}]
  %s4 = sld [smem:[#allocation0]]
  $region53: #{_lambda_.12} parent=0
    _
  %s6 = ssub.s32 1, %s4
  %s7 = scalar_select 0, %s6, %s4
  loop: start=0, step=1, limit=10
  $region2: #{_lambda_.12} parent=0 // loop_pre_header
    _
  $region3: #{_lambda_.12} parent=0 // loop_header
    %s9 = sphi 0, %s13
    %p10 = scmp.ge.s32.totalorder %s9, 10
    %s16 = sphi 0, %s42
    %s17 = sphi 0, %s38
    %s18 = sphi 0, %s34
    %s19 = sphi 0, %s30
    %s20 = sphi 0, %s16
    %s21 = sphi 0, %s17
    %s22 = sphi 0, %s18
    %s23 = sphi 0, %s19
    %s24 = sphi 0, %s20
    %s25 = sphi 0, %s21
    %s26 = sphi 0, %s22
    %s27 = sphi 0, %s23
    %s49 = sphi 0, %s51
    %s52 = sphi 0, %s49
    %s53 = sphi 0, %s52
    %s69 = sphi 0, %s53
    %s81 = sphi 0, %s83
    %s84 = sphi 0, %s81
    %s85 = sphi 0, %s84
    %s101 = sphi 0, %s85
    %s113 = sphi 0, %s115
    %s116 = sphi 0, %s113
    %s117 = sphi 0, %s116
    %s133 = sphi 0, %s117
    %s143 = sphi 0, %s145
    %s146 = sphi 0, %s143
    %s147 = sphi 0, %s146
    %s163 = sphi 0, %s147
  $region4: #{_lambda_.12} parent=0 // loop_header_branch
    %12 = sbr.rel (%p10) target = $region8
  $region5: #{_lambda_.12} parent=0 // loop_body
    %s14 = ssub.s32 %s9, 1
    %s15 = ssub.s32 %s9, 2
    %s28 = sadd.s32 1, %s19
    %p29 = scmp.ge.s32.totalorder %s28, 1
    %s30 = scalar_select %p29, 0, %s28
    %s31 = sadd.s32 1, %s18
    %s32 = scalar_select %p29, %s31, %s18
    %p33 = scmp.ge.s32.totalorder %s32, 1
    %s34 = scalar_select %p33, 0, %s32
    %s35 = sadd.s32 1, %s17
    %s36 = scalar_select %p33, %s35, %s17
    %p37 = scmp.ge.s32.totalorder %s36, 2
    %s38 = scalar_select %p37, 0, %s36
    %s39 = sadd.s32 1, %s16
    %s40 = scalar_select %p37, %s39, %s16
    %p41 = scmp.ge.s32.totalorder %s40, 4
    %s42 = scalar_select %p41, 0, %s40
    %s43 = ssub.s32 %s16, %s42
    %s44 = ssub.s32 %s17, %s38
    %s45 = sor.u32 %s43, %s44
    %s46 = ssub.s32 %s18, %s34
    %s47 = sor.u32 %s45, %s46
    %p48 = scmp.eq.s32.totalorder %s47, 0
    %s50 = sadd.s32 %s49, 1
    %s51 = scalar_select %p48, %s49, %s50
    %p54 = pneg %p48
    %p55 = scmp.eq.s32.totalorder %s9, 7
    %p56 = por %p54, %p55
    %p57 = scmp.ne.s32.totalorder %s49, %s52
    %p58 = scmp.eq.s32.totalorder %s9, 0
    %p59 = por %p57, %p58
    %p60 = scmp.ne.s32.totalorder %s49, %s52
    %p61 = scmp.eq.s32.totalorder %s14, 7
    %p62 = por %p60, %p61
    %p63 = scmp.ne.s32.totalorder %s52, %s53
    %p64 = scmp.eq.s32.totalorder %s14, 0
    %p65 = por %p63, %p64
    %p66 = scmp.ne.s32.totalorder %s52, %s53
    %p67 = scmp.eq.s32.totalorder %s15, 7
    %p68 = por %p66, %p67
    %p70 = scmp.ne.s32.totalorder %s53, %s69
    %p71 = scmp.eq.s32.totalorder %s15, 0
    %p72 = por %p70, %p71
    %s73 = sadd.s32 %s16, 4
    %s74 = sadd.s32 %s42, 4
    %s75 = ssub.s32 %s73, %s74
    %s76 = ssub.s32 %s17, %s38
    %s77 = sor.u32 %s75, %s76
    %s78 = ssub.s32 %s19, %s30
    %s79 = sor.u32 %s77, %s78
    %p80 = scmp.eq.s32.totalorder %s79, 0
    %s82 = sadd.s32 %s81, 1
    %s83 = scalar_select %p80, %s81, %s82
    %p86 = pneg %p80
    %p87 = scmp.eq.s32.totalorder %s9, 7
    %p88 = por %p86, %p87
    %p89 = scmp.ne.s32.totalorder %s81, %s84
    %p90 = scmp.eq.s32.totalorder %s9, 0
    %p91 = por %p89, %p90
    %p92 = scmp.ne.s32.totalorder %s81, %s84
    %p93 = scmp.eq.s32.totalorder %s14, 7
    %p94 = por %p92, %p93
    %p95 = scmp.ne.s32.totalorder %s84, %s85
    %p96 = scmp.eq.s32.totalorder %s14, 0
    %p97 = por %p95, %p96
    %p98 = scmp.ne.s32.totalorder %s84, %s85
    %p99 = scmp.eq.s32.totalorder %s15, 7
    %p100 = por %p98, %p99
    %p102 = scmp.ne.s32.totalorder %s85, %s101
    %p103 = scmp.eq.s32.totalorder %s15, 0
    %p104 = por %p102, %p103
    %s105 = sadd.s32 %s16, 8
    %s106 = sadd.s32 %s42, 8
    %s107 = ssub.s32 %s105, %s106
    %s108 = ssub.s32 %s17, %s38
    %s109 = sor.u32 %s107, %s108
    %s110 = ssub.s32 %s19, %s30
    %s111 = sor.u32 %s109, %s110
    %p112 = scmp.eq.s32.totalorder %s111, 0
    %s114 = sadd.s32 %s113, 1
    %s115 = scalar_select %p112, %s113, %s114
    %p118 = pneg %p112
    %p119 = scmp.eq.s32.totalorder %s9, 7
    %p120 = por %p118, %p119
    %p121 = scmp.ne.s32.totalorder %s113, %s116
    %p122 = scmp.eq.s32.totalorder %s9, 0
    %p123 = por %p121, %p122
    %p124 = scmp.ne.s32.totalorder %s113, %s116
    %p125 = scmp.eq.s32.totalorder %s14, 7
    %p126 = por %p124, %p125
    %p127 = scmp.ne.s32.totalorder %s116, %s117
    %p128 = scmp.eq.s32.totalorder %s14, 0
    %p129 = por %p127, %p128
    %p130 = scmp.ne.s32.totalorder %s116, %s117
    %p131 = scmp.eq.s32.totalorder %s15, 7
    %p132 = por %p130, %p131
    %p134 = scmp.ne.s32.totalorder %s117, %s133
    %p135 = scmp.eq.s32.totalorder %s15, 0
    %p136 = por %p134, %p135
    %s137 = ssub.s32 %s17, %s38
    %s138 = ssub.s32 %s16, %s42
    %s139 = sor.u32 %s137, %s138
    %s140 = ssub.s32 %s18, %s34
    %s141 = sor.u32 %s139, %s140
    %p142 = scmp.eq.s32.totalorder %s141, 0
    %s144 = sadd.s32 %s143, 1
    %s145 = scalar_select %p142, %s143, %s144
    %p148 = pneg %p142
    %p149 = scmp.eq.s32.totalorder %s9, 7
    %p150 = por %p148, %p149
    %p151 = scmp.ne.s32.totalorder %s143, %s146
    %p152 = scmp.eq.s32.totalorder %s9, 0
    %p153 = por %p151, %p152
    %p154 = scmp.ne.s32.totalorder %s143, %s146
    %p155 = scmp.eq.s32.totalorder %s14, 7
    %p156 = por %p154, %p155
    %p157 = scmp.ne.s32.totalorder %s146, %s147
    %p158 = scmp.eq.s32.totalorder %s14, 0
    %p159 = por %p157, %p158
    %p160 = scmp.ne.s32.totalorder %s146, %s147
    %p161 = scmp.eq.s32.totalorder %s15, 7
    %p162 = por %p160, %p161
    %p164 = scmp.ne.s32.totalorder %s147, %s163
    %p165 = scmp.eq.s32.totalorder %s15, 0
    %p166 = por %p164, %p165
    %p167 = scmp.le.s32.totalorder 1, %s9
    %p168 = scmp.lt.s32.totalorder %s9, 9
    %p169 = pnand %p167, %p168
    %p170 = pneg %p169
    // Predicated region
    $region9: #{_lambda_.12} parent=5 // pred_check
      _
    $region10: #{_lambda_.12} parent=5 // pred_check_branch
      %172 = sbr.rel (%p169) target = $region12
    $region11: #{_lambda_.12} parent=5 // pred_region
      %s173 = ssub.s32 %s9, 1
    $region12: #{_lambda_.12} parent=5 // pred_fallthru
      _
    %p174 = scmp.lt.s32.totalorder %s9, 8
    // Predicated region
    $region13: #{_lambda_.12} parent=5 // pred_check
      %p175 = pneg %p174
    $region14: #{_lambda_.12} parent=5 // pred_check_branch
      %177 = sbr.rel (%p175) target = $region16
    $region15: #{_lambda_.12} parent=5 // pred_region
      // Predicated region
      $region17: #{_lambda_.12} parent=15 // pred_check
        %p178 = pneg %p59
      $region18: #{_lambda_.12} parent=15 // pred_check_branch
        %180 = sbr.rel (%p178) target = $region20
      $region19: #{_lambda_.12} parent=15 // pred_region
        %s181 = smul.u32 4, %s18
        %p182 = scmp.lt.s32.totalorder %s16, 11
        %s183 = scalar_select %p182, %s16, 11
        %p184 = scmp.lt.s32.totalorder %s17, 1
        %s185 = scalar_select %p184, %s17, 1
        %p186 = scmp.lt.s32.totalorder %s181, 3
        %s187 = scalar_select %p186, %s181, 3
        %s188 = smul.addr %s185, 4
        %s189 = sadd.s32 %s187, %s188
        %s190 = smul.addr %s183, 8
        %s191 = sadd.s32 %s189, %s190
        %s192 = smul.addr %s191, 4
        %s193 = scalar_lea.vmem %s0, %s192
        %s194 = smul.u32 4, %s18
      $region20: #{_lambda_.12} parent=15 // pred_fallthru
        _
      // Predicated region
      $region21: #{_lambda_.12} parent=15 // pred_check
        %p195 = pneg %p91
      $region22: #{_lambda_.12} parent=15 // pred_check_branch
        %197 = sbr.rel (%p195) target = $region24
      $region23: #{_lambda_.12} parent=15 // pred_region
        %s198 = sadd.s32 %s16, 4
        %s199 = smul.u32 4, %s19
        %p200 = scmp.lt.s32.totalorder %s198, 11
        %s201 = scalar_select %p200, %s198, 11
        %p202 = scmp.lt.s32.totalorder %s17, 1
        %s203 = scalar_select %p202, %s17, 1
        %p204 = scmp.lt.s32.totalorder %s199, 3
        %s205 = scalar_select %p204, %s199, 3
        %s206 = smul.addr %s203, 4
        %s207 = sadd.s32 %s205, %s206
        %s208 = smul.addr %s201, 8
        %s209 = sadd.s32 %s207, %s208
        %s210 = smul.addr %s209, 4
        %s211 = scalar_lea.vmem %s1, %s210
        %s212 = sadd.s32 %s16, 4
        %s213 = smul.u32 4, %s19
      $region24: #{_lambda_.12} parent=15 // pred_fallthru
        _
      // Predicated region
      $region25: #{_lambda_.12} parent=15 // pred_check
        %p214 = pneg %p123
      $region26: #{_lambda_.12} parent=15 // pred_check_branch
        %216 = sbr.rel (%p214) target = $region28
      $region27: #{_lambda_.12} parent=15 // pred_region
        %s217 = sadd.s32 %s16, 8
        %s218 = smul.u32 4, %s19
        %p219 = scmp.lt.s32.totalorder %s217, 11
        %s220 = scalar_select %p219, %s217, 11
        %p221 = scmp.lt.s32.totalorder %s17, 1
        %s222 = scalar_select %p221, %s17, 1
        %p223 = scmp.lt.s32.totalorder %s218, 3
        %s224 = scalar_select %p223, %s218, 3
        %s225 = smul.addr %s222, 4
        %s226 = sadd.s32 %s224, %s225
        %s227 = smul.addr %s220, 8
        %s228 = sadd.s32 %s226, %s227
        %s229 = smul.addr %s228, 4
        %s230 = scalar_lea.vmem %s2, %s229
        %s231 = sadd.s32 %s16, 8
        %s232 = smul.u32 4, %s19
      $region28: #{_lambda_.12} parent=15 // pred_fallthru
        _
    $region16: #{_lambda_.12} parent=5 // pred_fallthru
      _
    %p233 = scmp.le.s32.totalorder 1, %s9
    %p234 = scmp.lt.s32.totalorder %s9, 9
    %p235 = pnand %p233, %p234
    %p236 = pneg %p235
    // Predicated region
    $region29: #{_lambda_.12} parent=5 // pred_check
      _
    $region30: #{_lambda_.12} parent=5 // pred_check_branch
      %238 = sbr.rel (%p235) target = $region32
    $region31: #{_lambda_.12} parent=5 // pred_region
      %s239 = ssub.s32 %s9, 1
      %s240 = smul.u32 4, %s22
      %p241 = scmp.lt.s32.totalorder %s20, 11
      %s242 = scalar_select %p241, %s20, 11
      %p243 = scmp.lt.s32.totalorder %s21, 1
      %s244 = scalar_select %p243, %s21, 1
      %p245 = scmp.lt.s32.totalorder %s240, 3
      %s246 = scalar_select %p245, %s240, 3
      %s247 = smul.addr %s244, 4
      %s248 = sadd.s32 %s246, %s247
      %s249 = smul.addr %s242, 8
      %s250 = sadd.s32 %s248, %s249
      %s251 = smul.addr %s250, 4
      %s252 = scalar_lea.vmem %s0, %s251
      %p253 = pneg %p65
      %p254 = pneg %p62
      %s255 = sadd.s32 %s20, 4
      %s256 = smul.u32 4, %s23
      %p257 = scmp.lt.s32.totalorder %s255, 11
      %s258 = scalar_select %p257, %s255, 11
      %p259 = scmp.lt.s32.totalorder %s21, 1
      %s260 = scalar_select %p259, %s21, 1
      %p261 = scmp.lt.s32.totalorder %s256, 3
      %s262 = scalar_select %p261, %s256, 3
      %s263 = smul.addr %s260, 4
      %s264 = sadd.s32 %s262, %s263
      %s265 = smul.addr %s258, 8
      %s266 = sadd.s32 %s264, %s265
      %s267 = smul.addr %s266, 4
      %s268 = scalar_lea.vmem %s1, %s267
      %p269 = pneg %p97
      %p270 = pneg %p94
      %s271 = sadd.s32 %s20, 8
      %s272 = smul.u32 4, %s23
      %p273 = scmp.lt.s32.totalorder %s271, 11
      %s274 = scalar_select %p273, %s271, 11
      %p275 = scmp.lt.s32.totalorder %s21, 1
      %s276 = scalar_select %p275, %s21, 1
      %p277 = scmp.lt.s32.totalorder %s272, 3
      %s278 = scalar_select %p277, %s272, 3
      %s279 = smul.addr %s276, 4
      %s280 = sadd.s32 %s278, %s279
      %s281 = smul.addr %s274, 8
      %s282 = sadd.s32 %s280, %s281
      %s283 = smul.addr %s282, 4
      %s284 = scalar_lea.vmem %s2, %s283
      %p285 = pneg %p129
      %p286 = pneg %p126
      %p287 = pneg %p159
      %p288 = pneg %p156
      %s289 = smul.u32 4, %s22
      %p290 = scmp.lt.s32.totalorder %s21, 1
      %s291 = scalar_select %p290, %s21, 1
      %p292 = scmp.lt.s32.totalorder %s20, 3
      %s293 = scalar_select %p292, %s20, 3
      %p294 = scmp.lt.s32.totalorder %s289, 3
      %s295 = scalar_select %p294, %s289, 3
      %s296 = smul.addr %s293, 4
      %s297 = sadd.s32 %s295, %s296
      %s298 = smul.addr %s291, 16
      %s299 = sadd.s32 %s297, %s298
      %s300 = smul.addr %s299, 4
      %s301 = scalar_lea.vmem %s3, %s300
      %s302 = smul.u32 4, %s22
      %p303 = scmp.lt.s32.totalorder %s20, 11
      %s304 = scalar_select %p303, %s20, 11
      %p305 = scmp.lt.s32.totalorder %s21, 1
      %s306 = scalar_select %p305, %s21, 1
      %p307 = scmp.lt.s32.totalorder %s302, 3
      %s308 = scalar_select %p307, %s302, 3
      %s309 = smul.addr %s306, 4
      %s310 = sadd.s32 %s308, %s309
      %s311 = smul.addr %s304, 8
      %s312 = sadd.s32 %s310, %s311
      %s313 = smul.addr %s312, 4
      %s314 = scalar_lea.vmem %s0, %s313
      %s315 = smul.u32 4, %s22
      %s316 = sadd.s32 %s20, 4
      %s317 = smul.u32 4, %s23
      %p318 = scmp.lt.s32.totalorder %s316, 11
      %s319 = scalar_select %p318, %s316, 11
      %p320 = scmp.lt.s32.totalorder %s21, 1
      %s321 = scalar_select %p320, %s21, 1
      %p322 = scmp.lt.s32.totalorder %s317, 3
      %s323 = scalar_select %p322, %s317, 3
      %s324 = smul.addr %s321, 4
      %s325 = sadd.s32 %s323, %s324
      %s326 = smul.addr %s319, 8
      %s327 = sadd.s32 %s325, %s326
      %s328 = smul.addr %s327, 4
      %s329 = scalar_lea.vmem %s1, %s328
      %s330 = sadd.s32 %s20, 4
      %s331 = smul.u32 4, %s23
      %s332 = sadd.s32 %s20, 8
      %s333 = smul.u32 4, %s23
      %p334 = scmp.lt.s32.totalorder %s332, 11
      %s335 = scalar_select %p334, %s332, 11
      %p336 = scmp.lt.s32.totalorder %s21, 1
      %s337 = scalar_select %p336, %s21, 1
      %p338 = scmp.lt.s32.totalorder %s333, 3
      %s339 = scalar_select %p338, %s333, 3
      %s340 = smul.addr %s337, 4
      %s341 = sadd.s32 %s339, %s340
      %s342 = smul.addr %s335, 8
      %s343 = sadd.s32 %s341, %s342
      %s344 = smul.addr %s343, 4
      %s345 = scalar_lea.vmem %s2, %s344
      %s346 = sadd.s32 %s20, 8
      %s347 = smul.u32 4, %s23
      %s348 = smul.u32 4, %s22
      %p349 = scmp.lt.s32.totalorder %s21, 1
      %s350 = scalar_select %p349, %s21, 1
      %p351 = scmp.lt.s32.totalorder %s20, 3
      %s352 = scalar_select %p351, %s20, 3
      %p353 = scmp.lt.s32.totalorder %s348, 3
      %s354 = scalar_select %p353, %s348, 3
      %s355 = smul.addr %s352, 4
      %s356 = sadd.s32 %s354, %s355
      %s357 = smul.addr %s350, 16
      %s358 = sadd.s32 %s356, %s357
      %s359 = smul.addr %s358, 4
      %s360 = scalar_lea.vmem %s3, %s359
      %s361 = smul.u32 4, %s22
      %p363 = scmp.eq.s32.totalorder %s23, 0
      // Predicated region
      $region33: #{_lambda_.12} parent=31 // pred_check
        %p364 = pneg %p363
      $region34: #{_lambda_.12} parent=31 // pred_check_branch
        %366 = sbr.rel (%p364) target = $region36
      $region35: #{_lambda_.12} parent=31 // pred_region
        %vm367 = vcmask 7168
        %368 = vst.msk [vmem:[#allocation2] sm:$0xff] %vm367, -inf
        %369 = vst.msk [vmem:[#allocation2 + $0x8] sm:$0xff] %vm367, -inf
        %370 = vst.msk [vmem:[#allocation2 + $0x10] sm:$0xff] %vm367, -inf
        %371 = vst.msk [vmem:[#allocation2 + $0x18] sm:$0xff] %vm367, -inf
        %372 = vst.msk [vmem:[#allocation3] sm:$0xff] %vm367, 0.0
        %373 = vst.msk [vmem:[#allocation3 + $0x8] sm:$0xff] %vm367, 0.0
        %374 = vst.msk [vmem:[#allocation3 + $0x10] sm:$0xff] %vm367, 0.0
        %375 = vst.msk [vmem:[#allocation3 + $0x18] sm:$0xff] %vm367, 0.0
        %vm376 = vcmask 130048
        %377 = vst.msk [vmem:[#allocation4] sm:$0xff] %vm376, 0.0
        %378 = vst.msk [vmem:[#allocation4 + $0x8] sm:$0xff] %vm376, 0.0
        %379 = vst.msk [vmem:[#allocation4 + $0x10] sm:$0xff] %vm376, 0.0
        %380 = vst.msk [vmem:[#allocation4 + $0x18] sm:$0xff] %vm376, 0.0
      $region36: #{_lambda_.12} parent=31 // pred_fallthru
        _
      %v381 = vld [vmem:[%s314] sm:$0xf]
      %v382 = vld [vmem:[%s314 + $0x4] sm:$0xf]
      %v383 = vld [vmem:[%s314 + $0x8] sm:$0xf]
      %v384 = vld [vmem:[%s314 + $0xc] sm:$0xf]
      %v385 = vunpack.c.l.bf16 %v381
      %v386 = vunpack.c.l.bf16 %v382
      %v387 = vunpack.c.l.bf16 %v383
      %v388 = vunpack.c.l.bf16 %v384
      %v389 = vmul.f32 %v385, 0.25
      %v390 = vmul.f32 %v386, 0.25
      %v391 = vmul.f32 %v387, 0.25
      %v392 = vmul.f32 %v388, 0.25
      %v393 = vpack.c.bf16 %v390, %v389
      %v394 = vpack.c.bf16 %v392, %v391
      %v395 = vld [vmem:[%s329] sm:$0xf]
      %v396 = vld [vmem:[%s329 + $0x4] sm:$0xf]
      %v397 = vld [vmem:[%s329 + $0x8] sm:$0xf]
      %v398 = vld [vmem:[%s329 + $0xc] sm:$0xf]
      %v403 = vunpack.c.l.b16 %v395
      %v404 = vunpack.c.l.b16 %v396
      %v405 = vunpack.c.l.b16 %v397
      %v406 = vunpack.c.l.b16 %v398
      %v407 = vpack.c.b16 %v404, %v403
      %v408 = vpack.c.b16 %v406, %v405
      %vm409 = vcmask 130048
      %v411 = vsel %vm409, %v393, 0
      %v414 = vsel %vm409, %v394, 0
      %v417 = vsel %vm409, %v407, 0
      %v420 = vsel %vm409, %v408, 0
      %422 = vmatprep.subr.bf16.mxu0 0
      %423 = vmatpush1.bf16.xpose.msra.mxu0 %v417
      %424 = vmatprep.subr.bf16.mxu0 0
      %425 = vmatpush1.bf16.xpose.msra.mxu0 %v420
      %426 = vmatprep.subr.bf16.mxu0 0
      %427 = vmatpush1.bf16.xpose.msra.mxu0 0
      %428 = vmatprep.subr.bf16.mxu0 0
      %429 = vmatpush1.bf16.xpose.msra.mxu0 0
      %430 = vmatprep.subr.bf16.mxu0 0
      %431 = vmatpush1.bf16.xpose.msra.mxu0 0
      %432 = vmatprep.subr.bf16.mxu0 0
      %433 = vmatpush1.bf16.xpose.msra.mxu0 0
      %434 = vmatprep.subr.bf16.mxu0 0
      %435 = vmatpush1.bf16.xpose.msra.mxu0 0
      %436 = vmatprep.subr.bf16.mxu0 0
      %437 = vmatpush1.bf16.xpose.msra.mxu0 0
      %438 = vmatprep.subr.bf16.mxu0 0
      %439 = vmatpush1.bf16.xpose.msra.mxu0 0
      %440 = vmatprep.subr.bf16.mxu0 0
      %441 = vmatpush1.bf16.xpose.msra.mxu0 0
      %442 = vmatprep.subr.bf16.mxu0 0
      %443 = vmatpush1.bf16.xpose.msra.mxu0 0
      %444 = vmatprep.subr.bf16.mxu0 0
      %445 = vmatpush1.bf16.xpose.msra.mxu0 0
      %446 = vmatprep.subr.bf16.mxu0 0
      %447 = vmatpush1.bf16.xpose.msra.mxu0 0
      %448 = vmatprep.subr.bf16.mxu0 0
      %449 = vmatpush1.bf16.xpose.msra.mxu0 0
      %450 = vmatprep.subr.bf16.mxu0 0
      %451 = vmatpush1.bf16.xpose.msra.mxu0 0
      %452 = vmatprep.subr.bf16.mxu0 0
      %453 = vmatpush1.bf16.xpose.msra.mxu0 0
      %454 = vmatprep.mubr.bf16.mxu0 0
      %455 = vmatmul.mubr.bf16.gmra.mrb[0].mxu0 %v411
      %v456 = vpop.f32.mrb[0].mxu0
      %v457 = vadd.f32 0.0, %v456
      %v458 = vpop.f32.mrb[0].mxu0
      %v459 = vpop.f32.mrb[0].mxu0
      %v460 = vadd.f32 0.0, %v459
      %v461 = vpop.f32.mrb[0].mxu0
      %462 = vmatprep.mubr.bf16.mxu0 0
      %463 = vmatmul.mubr.bf16.gmra.mrb[0].mxu0 %v414
      %v464 = vpop.f32.mrb[0].mxu0
      %v465 = vadd.f32 0.0, %v464
      %v466 = vpop.f32.mrb[0].mxu0
      %v467 = vpop.f32.mrb[0].mxu0
      %v468 = vadd.f32 0.0, %v467
      %v469 = vpop.f32.mrb[0].mxu0
      %470 = vdwg.mxu0
      %v471 = vlaneseq
      %v472 = vand.u32 %v471, 127
      %s473 = smul.u32 %s23, 32
      %v474 = vstv %s473
      %v475 = vadd.s32 %v472, %v474
      %vm476 = vcmp.lt.s32.totalorder %v475, 25
      %v477 = vsel %vm476, %v457, -1e+30
      %v478 = vsel %vm476, %v460, -1e+30
      %v479 = vsel %vm476, %v465, -1e+30
      %v480 = vsel %vm476, %v468, -1e+30
      %v481 = vld [vmem:[#allocation2] sm:$0xff]
      %v482 = vld [vmem:[#allocation2 + $0x8] sm:$0xff]
      %v483 = vld [vmem:[#allocation2 + $0x10] sm:$0xff]
      %v484 = vld [vmem:[#allocation2 + $0x18] sm:$0xff]
      %vm485 = vcmask 261120
      %v486 = vsel %vm485, %v477, -inf
      %487 = vmax.xlane.f32.xlu0 %v486
      %v488 = vpop.xlane.xlu0 %487
      %v489 = vsel %vm485, %v478, -inf
      %490 = vmax.xlane.f32.xlu0 %v489
      %v491 = vpop.xlane.xlu0 %490
      %v492 = vsel %vm485, %v479, -inf
      %493 = vmax.xlane.f32.xlu0 %v492
      %v494 = vpop.xlane.xlu0 %493
      %v495 = vsel %vm485, %v480, -inf
      %496 = vmax.xlane.f32.xlu0 %v495
      %v497 = vpop.xlane.xlu0 %496
      %v498 = vmax.f32 %v481, %v488
      %v499 = vmax.f32 %v482, %v491
      %v500 = vmax.f32 %v483, %v494
      %v501 = vmax.f32 %v484, %v497
      %v502 = vsub.f32 %v481, %v498
      %v503 = vsub.f32 %v482, %v499
      %v504 = vsub.f32 %v483, %v500
      %v505 = vsub.f32 %v484, %v501
      %v506 = vmul.f32 %v502, 1.442695
      %v507 = vpow.pop %v506
      %v508 = vmul.f32 %v503, 1.442695
      %v509 = vpow.pop %v508
      %v510 = vmul.f32 %v504, 1.442695
      %v511 = vpow.pop %v510
      %v512 = vmul.f32 %v505, 1.442695
      %v513 = vpow.pop %v512
      %515 = vset.pattern.permute.xlu0 0
      %516 = vperm.xlu0 %515, %v498
      %v517 = vpop.permute.xlu0 %516
      %520 = vset.pattern.permute.xlu0 0
      %521 = vperm.xlu0 %520, %v499
      %v522 = vpop.permute.xlu0 %521
      %525 = vset.pattern.permute.xlu0 0
      %526 = vperm.xlu0 %525, %v500
      %v527 = vpop.permute.xlu0 %526
      %530 = vset.pattern.permute.xlu0 0
      %531 = vperm.xlu0 %530, %v501
      %v532 = vpop.permute.xlu0 %531
      %v534 = vsub.f32 %v477, %v517
      %v535 = vsub.f32 %v478, %v522
      %v536 = vsub.f32 %v479, %v527
      %v537 = vsub.f32 %v480, %v532
      %v538 = vmul.f32 %v534, 1.442695
      %v539 = vpow.pop %v538
      %v540 = vmul.f32 %v535, 1.442695
      %v541 = vpow.pop %v540
      %v542 = vmul.f32 %v536, 1.442695
      %v543 = vpow.pop %v542
      %v544 = vmul.f32 %v537, 1.442695
      %v545 = vpow.pop %v544
      %v546 = vld [vmem:[#allocation3] sm:$0xff]
      %v547 = vld [vmem:[#allocation3 + $0x8] sm:$0xff]
      %v548 = vld [vmem:[#allocation3 + $0x10] sm:$0xff]
      %v549 = vld [vmem:[#allocation3 + $0x18] sm:$0xff]
      %v550 = vmul.f32 %v507, %v546
      %v551 = vmul.f32 %v509, %v547
      %v552 = vmul.f32 %v511, %v548
      %v553 = vmul.f32 %v513, %v549
      %v554 = vsel %vm485, %v539, 0.0
      %555 = vadd.xlane.f32.xlu0 %v554
      %v556 = vpop.xlane.xlu0 %555
      %v557 = vsel %vm485, %v541, 0.0
      %558 = vadd.xlane.f32.xlu0 %v557
      %v559 = vpop.xlane.xlu0 %558
      %v560 = vsel %vm485, %v543, 0.0
      %561 = vadd.xlane.f32.xlu0 %v560
      %v562 = vpop.xlane.xlu0 %561
      %v563 = vsel %vm485, %v545, 0.0
      %564 = vadd.xlane.f32.xlu0 %v563
      %v565 = vpop.xlane.xlu0 %564
      %v566 = vadd.f32 %v550, %v556
      %v567 = vadd.f32 %v551, %v559
      %v568 = vadd.f32 %v552, %v562
      %v569 = vadd.f32 %v553, %v565
      %vm570 = vcmask 7168
      %571 = vst.msk [vmem:[#allocation3] sm:$0xff] %vm570, %v566
      %572 = vst.msk [vmem:[#allocation3 + $0x8] sm:$0xff] %vm570, %v567
      %573 = vst.msk [vmem:[#allocation3 + $0x10] sm:$0xff] %vm570, %v568
      %574 = vst.msk [vmem:[#allocation3 + $0x18] sm:$0xff] %vm570, %v569
      %v575 = vld [vmem:[#allocation4] sm:$0xff]
      %v576 = vld [vmem:[#allocation4 + $0x8] sm:$0xff]
      %v577 = vld [vmem:[#allocation4 + $0x10] sm:$0xff]
      %v578 = vld [vmem:[#allocation4 + $0x18] sm:$0xff]
      %580 = vset.pattern.permute.xlu0 0
      %581 = vperm.xlu0 %580, %v507
      %v582 = vpop.permute.xlu0 %581
      %585 = vset.pattern.permute.xlu0 0
      %586 = vperm.xlu0 %585, %v509
      %v587 = vpop.permute.xlu0 %586
      %590 = vset.pattern.permute.xlu0 0
      %591 = vperm.xlu0 %590, %v511
      %v592 = vpop.permute.xlu0 %591
      %595 = vset.pattern.permute.xlu0 0
      %596 = vperm.xlu0 %595, %v513
      %v597 = vpop.permute.xlu0 %596
      %v599 = vmul.f32 %v582, %v575
      %v600 = vmul.f32 %v587, %v576
      %v601 = vmul.f32 %v592, %v577
      %v602 = vmul.f32 %v597, %v578
      %v603 = vpack.c.bf16 %v541, %v539
      %v604 = vpack.c.bf16 %v545, %v543
      %v605 = vld [vmem:[%s345] sm:$0xf]
      %v606 = vld [vmem:[%s345 + $0x4] sm:$0xf]
      %v607 = vld [vmem:[%s345 + $0x8] sm:$0xf]
      %v608 = vld [vmem:[%s345 + $0xc] sm:$0xf]
      %v613 = vunpack.c.l.b16 %v605
      %v614 = vunpack.c.l.b16 %v606
      %v615 = vunpack.c.l.b16 %v607
      %v616 = vunpack.c.l.b16 %v608
      %v617 = vpack.c.b16 %v614, %v613
      %v618 = vpack.c.b16 %v616, %v615
      %v622 = vsel %vm485, %v603, 0
      %v625 = vsel %vm485, %v604, 0
      %627 = vmatprep.subr.bf16.mxu0 0
      %628 = vmatpush1.bf16.msra.mxu0 %v617
      %629 = vmatprep.subr.bf16.mxu0 0
      %630 = vmatpush1.bf16.msra.mxu0 %v618
      %631 = vmatprep.subr.bf16.mxu0 0
      %632 = vmatpush1.bf16.msra.mxu0 0
      %633 = vmatprep.subr.bf16.mxu0 0
      %634 = vmatpush1.bf16.msra.mxu0 0
      %635 = vmatprep.subr.bf16.mxu0 0
      %636 = vmatpush1.bf16.msra.mxu0 0
      %637 = vmatprep.subr.bf16.mxu0 0
      %638 = vmatpush1.bf16.msra.mxu0 0
      %639 = vmatprep.subr.bf16.mxu0 0
      %640 = vmatpush1.bf16.msra.mxu0 0
      %641 = vmatprep.subr.bf16.mxu0 0
      %642 = vmatpush1.bf16.msra.mxu0 0
      %643 = vmatprep.subr.bf16.mxu0 0
      %644 = vmatpush1.bf16.msra.mxu0 0
      %645 = vmatprep.subr.bf16.mxu0 0
      %646 = vmatpush1.bf16.msra.mxu0 0
      %647 = vmatprep.subr.bf16.mxu0 0
      %648 = vmatpush1.bf16.msra.mxu0 0
      %649 = vmatprep.subr.bf16.mxu0 0
      %650 = vmatpush1.bf16.msra.mxu0 0
      %651 = vmatprep.subr.bf16.mxu0 0
      %652 = vmatpush1.bf16.msra.mxu0 0
      %653 = vmatprep.subr.bf16.mxu0 0
      %654 = vmatpush1.bf16.msra.mxu0 0
      %655 = vmatprep.subr.bf16.mxu0 0
      %656 = vmatpush1.bf16.msra.mxu0 0
      %657 = vmatprep.subr.bf16.mxu0 0
      %658 = vmatpush1.bf16.msra.mxu0 0
      %659 = vmatprep.mubr.bf16.mxu0 0
      %660 = vmatmul.mubr.bf16.gmra.mrb[0].mxu0 %v622
      %v661 = vpop.f32.mrb[0].mxu0
      %v662 = vadd.f32 0.0, %v661
      %v663 = vpop.f32.mrb[0].mxu0
      %v664 = vpop.f32.mrb[0].mxu0
      %v665 = vadd.f32 0.0, %v664
      %v666 = vpop.f32.mrb[0].mxu0
      %667 = vmatprep.mubr.bf16.mxu0 0
      %668 = vmatmul.mubr.bf16.gmra.mrb[0].mxu0 %v625
      %v669 = vpop.f32.mrb[0].mxu0
      %v670 = vadd.f32 0.0, %v669
      %v671 = vpop.f32.mrb[0].mxu0
      %v672 = vpop.f32.mrb[0].mxu0
      %v673 = vadd.f32 0.0, %v672
      %v674 = vpop.f32.mrb[0].mxu0
      %675 = vdwg.mxu0
      %v676 = vadd.f32 %v599, %v662
      %v677 = vadd.f32 %v600, %v665
      %v678 = vadd.f32 %v601, %v670
      %v679 = vadd.f32 %v602, %v673
      %680 = vst.msk [vmem:[#allocation4] sm:$0xff] %vm409, %v676
      %681 = vst.msk [vmem:[#allocation4 + $0x8] sm:$0xff] %vm409, %v677
      %682 = vst.msk [vmem:[#allocation4 + $0x10] sm:$0xff] %vm409, %v678
      %683 = vst.msk [vmem:[#allocation4 + $0x18] sm:$0xff] %vm409, %v679
      %684 = vst.msk [vmem:[#allocation2] sm:$0xff] %vm570, %v498
      %685 = vst.msk [vmem:[#allocation2 + $0x8] sm:$0xff] %vm570, %v499
      %686 = vst.msk [vmem:[#allocation2 + $0x10] sm:$0xff] %vm570, %v500
      %687 = vst.msk [vmem:[#allocation2 + $0x18] sm:$0xff] %vm570, %v501
      // Predicated region
      $region37: #{_lambda_.12} parent=31 // pred_check
        %p688 = pneg %p363
      $region38: #{_lambda_.12} parent=31 // pred_check_branch
        %690 = sbr.rel (%p688) target = $region40
      $region39: #{_lambda_.12} parent=31 // pred_region
        %v691 = vld [vmem:[#allocation4] sm:$0xff]
        %v692 = vld [vmem:[#allocation4 + $0x8] sm:$0xff]
        %v693 = vld [vmem:[#allocation4 + $0x10] sm:$0xff]
        %v694 = vld [vmem:[#allocation4 + $0x18] sm:$0xff]
        %v695 = vld [vmem:[#allocation3] sm:$0xff]
        %v696 = vld [vmem:[#allocation3 + $0x8] sm:$0xff]
        %v697 = vld [vmem:[#allocation3 + $0x10] sm:$0xff]
        %v698 = vld [vmem:[#allocation3 + $0x18] sm:$0xff]
        %700 = vset.pattern.permute.xlu0 0
        %701 = vperm.xlu0 %700, %v695
        %v702 = vpop.permute.xlu0 %701
        %705 = vset.pattern.permute.xlu0 0
        %706 = vperm.xlu0 %705, %v696
        %v707 = vpop.permute.xlu0 %706
        %710 = vset.pattern.permute.xlu0 0
        %711 = vperm.xlu0 %710, %v697
        %v712 = vpop.permute.xlu0 %711
        %715 = vset.pattern.permute.xlu0 0
        %716 = vperm.xlu0 %715, %v698
        %v717 = vpop.permute.xlu0 %716
        %v719 = vrcp.pop %v702
        %v720 = vmul.f32 %v691, %v719
        %v721 = vrcp.pop %v707
        %v722 = vmul.f32 %v692, %v721
        %v723 = vrcp.pop %v712
        %v724 = vmul.f32 %v693, %v723
        %v725 = vrcp.pop %v717
        %v726 = vmul.f32 %v694, %v725
        %v727 = vpack.c.bf16 %v722, %v720
        %v728 = vpack.c.bf16 %v726, %v724
        %v731 = vunpack.c.l.b16 %v727
        %v732 = vunpack.c.h.b16 %v727
        %v733 = vunpack.c.l.b16 %v728
        %v734 = vunpack.c.h.b16 %v728
        %v735 = vpack.c.b16 %v731, %v731
        %v736 = vpack.c.b16 %v732, %v732
        %v737 = vpack.c.b16 %v733, %v733
        %v738 = vpack.c.b16 %v734, %v734
        %vm743 = vcmask 125952
        %744 = vst.msk [vmem:[%s360] sm:$0xf] %vm743, %v735
        %745 = vst.msk [vmem:[%s360 + $0x4] sm:$0xf] %vm743, %v736
        %746 = vst.msk [vmem:[%s360 + $0x8] sm:$0xf] %vm743, %v737
        %747 = vst.msk [vmem:[%s360 + $0xc] sm:$0xf] %vm743, %v738
      $region40: #{_lambda_.12} parent=31 // pred_fallthru
        _
      %s748 = smul.u32 4, %s22
      %p749 = scmp.lt.s32.totalorder %s21, 1
      %s750 = scalar_select %p749, %s21, 1
      %p751 = scmp.lt.s32.totalorder %s20, 3
      %s752 = scalar_select %p751, %s20, 3
      %p753 = scmp.lt.s32.totalorder %s748, 3
      %s754 = scalar_select %p753, %s748, 3
      %s755 = smul.addr %s752, 4
      %s756 = sadd.s32 %s754, %s755
      %s757 = smul.addr %s750, 16
      %s758 = sadd.s32 %s756, %s757
      %s759 = smul.addr %s758, 4
      %s760 = scalar_lea.vmem %s3, %s759
      // Predicated region
      $region41: #{_lambda_.12} parent=31 // pred_check
        %p761 = pneg %p156
      $region42: #{_lambda_.12} parent=31 // pred_check_branch
        %763 = sbr.rel (%p761) target = $region44
      $region43: #{_lambda_.12} parent=31 // pred_region
        %s764 = smul.u32 4, %s22
      $region44: #{_lambda_.12} parent=31 // pred_fallthru
        _
    $region32: #{_lambda_.12} parent=5 // pred_fallthru
      _
    %p765 = scmp.le.s32.totalorder 2, %s9
    // Predicated region
    $region45: #{_lambda_.12} parent=5 // pred_check
      %p766 = pneg %p765
    $region46: #{_lambda_.12} parent=5 // pred_check_branch
      %768 = sbr.rel (%p766) target = $region48
    $region47: #{_lambda_.12} parent=5 // pred_region
      %s769 = ssub.s32 %s9, 2
      // Predicated region
      $region49: #{_lambda_.12} parent=47 // pred_check
        %p770 = pneg %p162
      $region50: #{_lambda_.12} parent=47 // pred_check_branch
        %772 = sbr.rel (%p770) target = $region52
      $region51: #{_lambda_.12} parent=47 // pred_region
        %s773 = smul.u32 4, %s26
        %p774 = scmp.lt.s32.totalorder %s25, 1
        %s775 = scalar_select %p774, %s25, 1
        %p776 = scmp.lt.s32.totalorder %s24, 3
        %s777 = scalar_select %p776, %s24, 3
        %p778 = scmp.lt.s32.totalorder %s773, 3
        %s779 = scalar_select %p778, %s773, 3
        %s780 = smul.addr %s777, 4
        %s781 = sadd.s32 %s779, %s780
        %s782 = smul.addr %s775, 16
        %s783 = sadd.s32 %s781, %s782
        %s784 = smul.addr %s783, 4
        %s785 = scalar_lea.vmem %s3, %s784
      $region52: #{_lambda_.12} parent=47 // pred_fallthru
        _
    $region48: #{_lambda_.12} parent=5 // pred_fallthru
      _
  $region6: #{_lambda_.12} parent=0 // loop_footer
    %s13 = sadd.s32 1, %s9
  $region7: #{_lambda_.12} parent=0 // loop_footer_branch
    %8 = sbr.rel target = $region3
  $region8: #{_lambda_.12} parent=0 // loop_exit
    _

// kernel: _lambda_.13
$region0: #{_lambda_.13}
  #allocation0 [shape = 'u32[]', space=smem, size = 0x4, offset = 0x4, fixed_abs, tag = 'smem constant byte address 0x4 - core index']
  #allocation1 [shape = 'u32[144,128]{1,0:T(1,128)}', space=vmem, size = 0x12000, scoped, tag = 'internal scratch']
  %s0 = inlined_call_operand.vmem [shape: bf16[2,4,32,16], index: 0, kind: input, shape index: {}]
  %s1 = inlined_call_operand.vmem [shape: bf16[4,16,64], index: 1, kind: input, shape index: {}]
  %s2 = inlined_call_operand.vmem [shape: f32[1,64], index: 2, kind: input, shape index: {}]
  %s3 = inlined_call_operand.vmem [shape: bf16[2,32,64], index: 3, kind: input, shape index: {}]
  %s4 = inlined_call_operand.vmem [shape: bf16[2,32,64], index: 4, kind: output, shape index: {}]
  %s5 = sld [smem:[#allocation0]]
  $region49: #{_lambda_.13} parent=0
    _
  %s7 = ssub.s32 1, %s5
  %s8 = scalar_select 0, %s7, %s5
  loop: start=0, step=1, limit=4
  $region2: #{_lambda_.13} parent=0 // loop_pre_header
    _
  $region3: #{_lambda_.13} parent=0 // loop_header
    %s10 = sphi 0, %s14
    %p11 = scmp.ge.s32.totalorder %s10, 4
    %s17 = sphi 0, %s29
    %s18 = sphi 0, %s25
    %s19 = sphi 0, %s17
    %s20 = sphi 0, %s18
    %s21 = sphi 0, %s19
    %s22 = sphi 0, %s20
    %s34 = sphi 0, %s36
    %s37 = sphi 0, %s34
    %s38 = sphi 0, %s37
    %s54 = sphi 0, %s38
    %s58 = sphi 0, %s58
    %s60 = sphi 0, %s58
    %s61 = sphi 0, %s60
    %s75 = sphi 0, %s61
    %s79 = sphi 0, %s79
    %s81 = sphi 0, %s79
    %s82 = sphi 0, %s81
    %s96 = sphi 0, %s82
    %s104 = sphi 0, %s106
    %s107 = sphi 0, %s104
    %s108 = sphi 0, %s107
    %s124 = sphi 0, %s108
    %s132 = sphi 0, %s134
    %s135 = sphi 0, %s132
    %s136 = sphi 0, %s135
    %s152 = sphi 0, %s136
  $region4: #{_lambda_.13} parent=0 // loop_header_branch
    %13 = sbr.rel (%p11) target = $region8
  $region5: #{_lambda_.13} parent=0 // loop_body
    %s15 = ssub.s32 %s10, 1
    %s16 = ssub.s32 %s10, 2
    %s23 = sadd.s32 1, %s18
    %p24 = scmp.ge.s32.totalorder %s23, 1
    %s25 = scalar_select %p24, 0, %s23
    %s26 = sadd.s32 1, %s17
    %s27 = scalar_select %p24, %s26, %s17
    %p28 = scmp.ge.s32.totalorder %s27, 2
    %s29 = scalar_select %p28, 0, %s27
    %s30 = ssub.s32 %s17, %s29
    %s31 = ssub.s32 %s18, %s25
    %s32 = sor.u32 %s30, %s31
    %p33 = scmp.eq.s32.totalorder %s32, 0
    %s35 = sadd.s32 %s34, 1
    %s36 = scalar_select %p33, %s34, %s35
    %p39 = pneg %p33
    %p40 = scmp.eq.s32.totalorder %s10, 1
    %p41 = por %p39, %p40
    %p42 = scmp.ne.s32.totalorder %s34, %s37
    %p43 = scmp.eq.s32.totalorder %s10, 0
    %p44 = por %p42, %p43
    %p45 = scmp.ne.s32.totalorder %s34, %s37
    %p46 = scmp.eq.s32.totalorder %s15, 1
    %p47 = por %p45, %p46
    %p48 = scmp.ne.s32.totalorder %s37, %s38
    %p49 = scmp.eq.s32.totalorder %s15, 0
    %p50 = por %p48, %p49
    %p51 = scmp.ne.s32.totalorder %s37, %s38
    %p52 = scmp.eq.s32.totalorder %s16, 1
    %p53 = por %p51, %p52
    %p55 = scmp.ne.s32.totalorder %s38, %s54
    %p56 = scmp.eq.s32.totalorder %s16, 0
    %p57 = por %p55, %p56
    %s59 = sadd.s32 %s58, 1
    %p62 = scmp.eq.s32.totalorder %s10, 1
    %p63 = scmp.ne.s32.totalorder %s58, %s60
    %p64 = scmp.eq.s32.totalorder %s10, 0
    %p65 = por %p63, %p64
    %p66 = scmp.ne.s32.totalorder %s58, %s60
    %p67 = scmp.eq.s32.totalorder %s15, 1
    %p68 = por %p66, %p67
    %p69 = scmp.ne.s32.totalorder %s60, %s61
    %p70 = scmp.eq.s32.totalorder %s15, 0
    %p71 = por %p69, %p70
    %p72 = scmp.ne.s32.totalorder %s60, %s61
    %p73 = scmp.eq.s32.totalorder %s16, 1
    %p74 = por %p72, %p73
    %p76 = scmp.ne.s32.totalorder %s61, %s75
    %p77 = scmp.eq.s32.totalorder %s16, 0
    %p78 = por %p76, %p77
    %s80 = sadd.s32 %s79, 1
    %p83 = scmp.eq.s32.totalorder %s10, 1
    %p84 = scmp.ne.s32.totalorder %s79, %s81
    %p85 = scmp.eq.s32.totalorder %s10, 0
    %p86 = por %p84, %p85
    %p87 = scmp.ne.s32.totalorder %s79, %s81
    %p88 = scmp.eq.s32.totalorder %s15, 1
    %p89 = por %p87, %p88
    %p90 = scmp.ne.s32.totalorder %s81, %s82
    %p91 = scmp.eq.s32.totalorder %s15, 0
    %p92 = por %p90, %p91
    %p93 = scmp.ne.s32.totalorder %s81, %s82
    %p94 = scmp.eq.s32.totalorder %s16, 1
    %p95 = por %p93, %p94
    %p97 = scmp.ne.s32.totalorder %s82, %s96
    %p98 = scmp.eq.s32.totalorder %s16, 0
    %p99 = por %p97, %p98
    %s100 = ssub.s32 %s17, %s29
    %s101 = ssub.s32 %s18, %s25
    %s102 = sor.u32 %s100, %s101
    %p103 = scmp.eq.s32.totalorder %s102, 0
    %s105 = sadd.s32 %s104, 1
    %s106 = scalar_select %p103, %s104, %s105
    %p109 = pneg %p103
    %p110 = scmp.eq.s32.totalorder %s10, 1
    %p111 = por %p109, %p110
    %p112 = scmp.ne.s32.totalorder %s104, %s107
    %p113 = scmp.eq.s32.totalorder %s10, 0
    %p114 = por %p112, %p113
    %p115 = scmp.ne.s32.totalorder %s104, %s107
    %p116 = scmp.eq.s32.totalorder %s15, 1
    %p117 = por %p115, %p116
    %p118 = scmp.ne.s32.totalorder %s107, %s108
    %p119 = scmp.eq.s32.totalorder %s15, 0
    %p120 = por %p118, %p119
    %p121 = scmp.ne.s32.totalorder %s107, %s108
    %p122 = scmp.eq.s32.totalorder %s16, 1
    %p123 = por %p121, %p122
    %p125 = scmp.ne.s32.totalorder %s108, %s124
    %p126 = scmp.eq.s32.totalorder %s16, 0
    %p127 = por %p125, %p126
    %s128 = ssub.s32 %s17, %s29
    %s129 = ssub.s32 %s18, %s25
    %s130 = sor.u32 %s128, %s129
    %p131 = scmp.eq.s32.totalorder %s130, 0
    %s133 = sadd.s32 %s132, 1
    %s134 = scalar_select %p131, %s132, %s133
    %p137 = pneg %p131
    %p138 = scmp.eq.s32.totalorder %s10, 1
    %p139 = por %p137, %p138
    %p140 = scmp.ne.s32.totalorder %s132, %s135
    %p141 = scmp.eq.s32.totalorder %s10, 0
    %p142 = por %p140, %p141
    %p143 = scmp.ne.s32.totalorder %s132, %s135
    %p144 = scmp.eq.s32.totalorder %s15, 1
    %p145 = por %p143, %p144
    %p146 = scmp.ne.s32.totalorder %s135, %s136
    %p147 = scmp.eq.s32.totalorder %s15, 0
    %p148 = por %p146, %p147
    %p149 = scmp.ne.s32.totalorder %s135, %s136
    %p150 = scmp.eq.s32.totalorder %s16, 1
    %p151 = por %p149, %p150
    %p153 = scmp.ne.s32.totalorder %s136, %s152
    %p154 = scmp.eq.s32.totalorder %s16, 0
    %p155 = por %p153, %p154
    %p156 = scmp.le.s32.totalorder 1, %s10
    %p157 = scmp.lt.s32.totalorder %s10, 3
    %p158 = pnand %p156, %p157
    %p159 = pneg %p158
    // Predicated region
    $region9: #{_lambda_.13} parent=5 // pred_check
      _
    $region10: #{_lambda_.13} parent=5 // pred_check_branch
      %161 = sbr.rel (%p158) target = $region12
    $region11: #{_lambda_.13} parent=5 // pred_region
      %s162 = ssub.s32 %s10, 1
      // Predicated region
      $region13: #{_lambda_.13} parent=11 // pred_check
        %p163 = pneg %p71
      $region14: #{_lambda_.13} parent=11 // pred_check_branch
        %165 = sbr.rel (%p163) target = $region16
      $region15: #{_lambda_.13} parent=11 // pred_region
        _
      $region16: #{_lambda_.13} parent=11 // pred_fallthru
        _
      // Predicated region
      $region17: #{_lambda_.13} parent=11 // pred_check
        %p166 = pneg %p92
      $region18: #{_lambda_.13} parent=11 // pred_check_branch
        %168 = sbr.rel (%p166) target = $region20
      $region19: #{_lambda_.13} parent=11 // pred_region
        _
      $region20: #{_lambda_.13} parent=11 // pred_fallthru
        _
    $region12: #{_lambda_.13} parent=5 // pred_fallthru
      _
    %p169 = scmp.lt.s32.totalorder %s10, 2
    // Predicated region
    $region21: #{_lambda_.13} parent=5 // pred_check
      %p170 = pneg %p169
    $region22: #{_lambda_.13} parent=5 // pred_check_branch
      %172 = sbr.rel (%p170) target = $region24
    $region23: #{_lambda_.13} parent=5 // pred_region
      // Predicated region
      $region25: #{_lambda_.13} parent=23 // pred_check
        %p173 = pneg %p44
      $region26: #{_lambda_.13} parent=23 // pred_check_branch
        %175 = sbr.rel (%p173) target = $region28
      $region27: #{_lambda_.13} parent=23 // pred_region
        %s176 = smul.u32 4, %s18
        %p177 = scmp.lt.s32.totalorder %s17, 1
        %s178 = scalar_select %p177, %s17, 1
        %p179 = scmp.lt.s32.totalorder %s176, 3
        %s180 = scalar_select %p179, %s176, 3
        %s181 = smul.addr %s178, 16
        %s182 = sadd.s32 %s180, %s181
        %s183 = smul.addr %s182, 4
        %s184 = scalar_lea.vmem %s0, %s183
        %s185 = smul.u32 4, %s18
      $region28: #{_lambda_.13} parent=23 // pred_fallthru
        _
      // Predicated region
      $region29: #{_lambda_.13} parent=23 // pred_check
        %p186 = pneg %p114
      $region30: #{_lambda_.13} parent=23 // pred_check_branch
        %188 = sbr.rel (%p186) target = $region32
      $region31: #{_lambda_.13} parent=23 // pred_region
        %s189 = smul.u32 4, %s18
        %p190 = scmp.lt.s32.totalorder %s17, 1
        %s191 = scalar_select %p190, %s17, 1
        %p192 = scmp.lt.s32.totalorder %s189, 3
        %s193 = scalar_select %p192, %s189, 3
        %s194 = smul.addr %s191, 4
        %s195 = sadd.s32 %s193, %s194
        %s196 = smul.addr %s195, 4
        %s197 = scalar_lea.vmem %s3, %s196
        %s198 = smul.u32 4, %s18
      $region32: #{_lambda_.13} parent=23 // pred_fallthru
        _
    $region24: #{_lambda_.13} parent=5 // pred_fallthru
      _
    %p199 = scmp.le.s32.totalorder 1, %s10
    %p200 = scmp.lt.s32.totalorder %s10, 3
    %p201 = pnand %p199, %p200
    %p202 = pneg %p201
    // Predicated region
    $region33: #{_lambda_.13} parent=5 // pred_check
      _
    $region34: #{_lambda_.13} parent=5 // pred_check_branch
      %204 = sbr.rel (%p201) target = $region36
    $region35: #{_lambda_.13} parent=5 // pred_region
      %s205 = ssub.s32 %s10, 1
      %s206 = smul.u32 4, %s20
      %p207 = scmp.lt.s32.totalorder %s19, 1
      %s208 = scalar_select %p207, %s19, 1
      %p209 = scmp.lt.s32.totalorder %s206, 3
      %s210 = scalar_select %p209, %s206, 3
      %s211 = smul.addr %s208, 16
      %s212 = sadd.s32 %s210, %s211
      %s213 = smul.addr %s212, 4
      %s214 = scalar_lea.vmem %s0, %s213
      %p215 = pneg %p50
      %p216 = pneg %p47
      %p217 = pneg %p71
      %p218 = pneg %p68
      %p219 = pneg %p92
      %p220 = pneg %p89
      %s221 = smul.u32 4, %s20
      %p222 = scmp.lt.s32.totalorder %s19, 1
      %s223 = scalar_select %p222, %s19, 1
      %p224 = scmp.lt.s32.totalorder %s221, 3
      %s225 = scalar_select %p224, %s221, 3
      %s226 = smul.addr %s223, 4
      %s227 = sadd.s32 %s225, %s226
      %s228 = smul.addr %s227, 4
      %s229 = scalar_lea.vmem %s3, %s228
      %p230 = pneg %p120
      %p231 = pneg %p117
      %p232 = pneg %p148
      %p233 = pneg %p145
      %s234 = smul.u32 4, %s20
      %p235 = scmp.lt.s32.totalorder %s19, 1
      %s236 = scalar_select %p235, %s19, 1
      %p237 = scmp.lt.s32.totalorder %s234, 3
      %s238 = scalar_select %p237, %s234, 3
      %s239 = smul.addr %s236, 4
      %s240 = sadd.s32 %s238, %s239
      %s241 = smul.addr %s240, 4
      %s242 = scalar_lea.vmem %s4, %s241
      %s243 = smul.u32 4, %s20
      %p244 = scmp.lt.s32.totalorder %s19, 1
      %s245 = scalar_select %p244, %s19, 1
      %p246 = scmp.lt.s32.totalorder %s243, 3
      %s247 = scalar_select %p246, %s243, 3
      %s248 = smul.addr %s245, 16
      %s249 = sadd.s32 %s247, %s248
      %s250 = smul.addr %s249, 4
      %s251 = scalar_lea.vmem %s0, %s250
      %s252 = smul.u32 4, %s20
      %s253 = smul.u32 4, %s20
      %p254 = scmp.lt.s32.totalorder %s19, 1
      %s255 = scalar_select %p254, %s19, 1
      %p256 = scmp.lt.s32.totalorder %s253, 3
      %s257 = scalar_select %p256, %s253, 3
      %s258 = smul.addr %s255, 4
      %s259 = sadd.s32 %s257, %s258
      %s260 = smul.addr %s259, 4
      %s261 = scalar_lea.vmem %s3, %s260
      %s262 = smul.u32 4, %s20
      %s263 = smul.u32 4, %s20
      %p264 = scmp.lt.s32.totalorder %s19, 1
      %s265 = scalar_select %p264, %s19, 1
      %p266 = scmp.lt.s32.totalorder %s263, 3
      %s267 = scalar_select %p266, %s263, 3
      %s268 = smul.addr %s265, 4
      %s269 = sadd.s32 %s267, %s268
      %s270 = smul.addr %s269, 4
      %s271 = scalar_lea.vmem %s4, %s270
      %s272 = smul.u32 4, %s20
      %v274 = vld [vmem:[%s251] sm:$0xf]
      %v275 = vld [vmem:[%s251 + $0x4] sm:$0xf]
      %v276 = vld [vmem:[%s251 + $0x8] sm:$0xf]
      %v277 = vld [vmem:[%s251 + $0xc] sm:$0xf]
      %v278 = vld [vmem:[%s1] sm:$0xf]
      %v279 = vld [vmem:[%s1 + $0x4] sm:$0xf]
      %s280 = scalar_lea.vmem %s251, 16
      %v281 = vld [vmem:[%s280] sm:$0xf]
      %v282 = vld [vmem:[%s280 + $0x4] sm:$0xf]
      %v283 = vld [vmem:[%s280 + $0x8] sm:$0xf]
      %v284 = vld [vmem:[%s280 + $0xc] sm:$0xf]
      %s285 = scalar_lea.vmem %s1, 8
      %v286 = vld [vmem:[%s285] sm:$0xf]
      %v287 = vld [vmem:[%s285 + $0x4] sm:$0xf]
      %v292 = vunpack.c.l.b16 %v281
      %v293 = vunpack.c.l.b16 %v282
      %v294 = vunpack.c.l.b16 %v283
      %v295 = vunpack.c.l.b16 %v284
      %v296 = vpack.c.b16 %v293, %v292
      %v297 = vpack.c.b16 %v295, %v294
      %v300 = vunpack.c.l.b16 %v286
      %v301 = vunpack.c.l.b16 %v287
      %v302 = vpack.c.b16 %v301, %v300
      %vm304 = vcmask 130048
      %v306 = vsel %vm304, %v296, 0
      %v309 = vsel %vm304, %v297, 0
      %311 = vmatprep.subr.bf16.mxu0 0
      %312 = vmatpush1.bf16.msra.mxu0 %v302
      %313 = vmatprep.subr.bf16.mxu0 0
      %314 = vmatpush1.bf16.msra.mxu0 0
      %315 = vmatprep.subr.bf16.mxu0 0
      %316 = vmatpush1.bf16.msra.mxu0 0
      %317 = vmatprep.subr.bf16.mxu0 0
      %318 = vmatpush1.bf16.msra.mxu0 0
      %319 = vmatprep.subr.bf16.mxu0 0
      %320 = vmatpush1.bf16.msra.mxu0 0
      %321 = vmatprep.subr.bf16.mxu0 0
      %322 = vmatpush1.bf16.msra.mxu0 0
      %323 = vmatprep.subr.bf16.mxu0 0
      %324 = vmatpush1.bf16.msra.mxu0 0
      %325 = vmatprep.subr.bf16.mxu0 0
      %326 = vmatpush1.bf16.msra.mxu0 0
      %327 = vmatprep.subr.bf16.mxu0 0
      %328 = vmatpush1.bf16.msra.mxu0 0
      %329 = vmatprep.subr.bf16.mxu0 0
      %330 = vmatpush1.bf16.msra.mxu0 0
      %331 = vmatprep.subr.bf16.mxu0 0
      %332 = vmatpush1.bf16.msra.mxu0 0
      %333 = vmatprep.subr.bf16.mxu0 0
      %334 = vmatpush1.bf16.msra.mxu0 0
      %335 = vmatprep.subr.bf16.mxu0 0
      %336 = vmatpush1.bf16.msra.mxu0 0
      %337 = vmatprep.subr.bf16.mxu0 0
      %338 = vmatpush1.bf16.msra.mxu0 0
      %339 = vmatprep.subr.bf16.mxu0 0
      %340 = vmatpush1.bf16.msra.mxu0 0
      %341 = vmatprep.subr.bf16.mxu0 0
      %342 = vmatpush1.bf16.msra.mxu0 0
      %343 = vmatprep.mubr.bf16.mxu0 0
      %344 = vmatmul.mubr.bf16.gmra.mrb[0].mxu0 %v306
      %v345 = vpop.f32.mrb[0].mxu0
      %v346 = vadd.f32 0.0, %v345
      %v347 = vpop.f32.mrb[0].mxu0
      %v348 = vpop.f32.mrb[0].mxu0
      %v349 = vadd.f32 0.0, %v348
      %v350 = vpop.f32.mrb[0].mxu0
      %351 = vmatprep.mubr.bf16.mxu0 0
      %352 = vmatmul.mubr.bf16.gmra.mrb[0].mxu0 %v309
      %v353 = vpop.f32.mrb[0].mxu0
      %v354 = vadd.f32 0.0, %v353
      %v355 = vpop.f32.mrb[0].mxu0
      %v356 = vpop.f32.mrb[0].mxu0
      %v357 = vadd.f32 0.0, %v356
      %v358 = vpop.f32.mrb[0].mxu0
      %359 = vdwg.mxu0
      %v364 = vunpack.c.l.b16 %v274
      %v365 = vunpack.c.l.b16 %v275
      %v366 = vunpack.c.l.b16 %v276
      %v367 = vunpack.c.l.b16 %v277
      %v368 = vpack.c.b16 %v365, %v364
      %v369 = vpack.c.b16 %v367, %v366
      %v372 = vunpack.c.l.b16 %v278
      %v373 = vunpack.c.l.b16 %v279
      %v374 = vpack.c.b16 %v373, %v372
      %v377 = vsel %vm304, %v368, 0
      %v380 = vsel %vm304, %v369, 0
      %382 = vmatprep.subr.bf16.mxu0 0
      %383 = vmatpush1.bf16.msra.mxu0 %v374
      %384 = vmatprep.subr.bf16.mxu0 0
      %385 = vmatpush1.bf16.msra.mxu0 0
      %386 = vmatprep.subr.bf16.mxu0 0
      %387 = vmatpush1.bf16.msra.mxu0 0
      %388 = vmatprep.subr.bf16.mxu0 0
      %389 = vmatpush1.bf16.msra.mxu0 0
      %390 = vmatprep.subr.bf16.mxu0 0
      %391 = vmatpush1.bf16.msra.mxu0 0
      %392 = vmatprep.subr.bf16.mxu0 0
      %393 = vmatpush1.bf16.msra.mxu0 0
      %394 = vmatprep.subr.bf16.mxu0 0
      %395 = vmatpush1.bf16.msra.mxu0 0
      %396 = vmatprep.subr.bf16.mxu0 0
      %397 = vmatpush1.bf16.msra.mxu0 0
      %398 = vmatprep.subr.bf16.mxu0 0
      %399 = vmatpush1.bf16.msra.mxu0 0
      %400 = vmatprep.subr.bf16.mxu0 0
      %401 = vmatpush1.bf16.msra.mxu0 0
      %402 = vmatprep.subr.bf16.mxu0 0
      %403 = vmatpush1.bf16.msra.mxu0 0
      %404 = vmatprep.subr.bf16.mxu0 0
      %405 = vmatpush1.bf16.msra.mxu0 0
      %406 = vmatprep.subr.bf16.mxu0 0
      %407 = vmatpush1.bf16.msra.mxu0 0
      %408 = vmatprep.subr.bf16.mxu0 0
      %409 = vmatpush1.bf16.msra.mxu0 0
      %410 = vmatprep.subr.bf16.mxu0 0
      %411 = vmatpush1.bf16.msra.mxu0 0
      %412 = vmatprep.subr.bf16.mxu0 0
      %413 = vmatpush1.bf16.msra.mxu0 0
      %414 = vmatprep.mubr.bf16.mxu0 0
      %415 = vmatmul.mubr.bf16.gmra.mrb[0].mxu0 %v377
      %v416 = vpop.f32.mrb[0].mxu0
      %v417 = vadd.f32 %v346, %v416
      %v418 = vpop.f32.mrb[0].mxu0
      %v419 = vpop.f32.mrb[0].mxu0
      %v420 = vadd.f32 %v349, %v419
      %v421 = vpop.f32.mrb[0].mxu0
      %422 = vmatprep.mubr.bf16.mxu0 0
      %423 = vmatmul.mubr.bf16.gmra.mrb[0].mxu0 %v380
      %v424 = vpop.f32.mrb[0].mxu0
      %v425 = vadd.f32 %v354, %v424
      %v426 = vpop.f32.mrb[0].mxu0
      %v427 = vpop.f32.mrb[0].mxu0
      %v428 = vadd.f32 %v357, %v427
      %v429 = vpop.f32.mrb[0].mxu0
      %430 = vdwg.mxu0
      %s431 = scalar_lea.vmem %s251, 32
      %v432 = vld [vmem:[%s431] sm:$0xf]
      %v433 = vld [vmem:[%s431 + $0x4] sm:$0xf]
      %v434 = vld [vmem:[%s431 + $0x8] sm:$0xf]
      %v435 = vld [vmem:[%s431 + $0xc] sm:$0xf]
      %s436 = scalar_lea.vmem %s1, 16
      %v437 = vld [vmem:[%s436] sm:$0xf]
      %v438 = vld [vmem:[%s436 + $0x4] sm:$0xf]
      %v443 = vunpack.c.l.b16 %v432
      %v444 = vunpack.c.l.b16 %v433
      %v445 = vunpack.c.l.b16 %v434
      %v446 = vunpack.c.l.b16 %v435
      %v447 = vpack.c.b16 %v444, %v443
      %v448 = vpack.c.b16 %v446, %v445
      %v451 = vunpack.c.l.b16 %v437
      %v452 = vunpack.c.l.b16 %v438
      %v453 = vpack.c.b16 %v452, %v451
      %v456 = vsel %vm304, %v447, 0
      %v459 = vsel %vm304, %v448, 0
      %461 = vmatprep.subr.bf16.mxu0 0
      %462 = vmatpush1.bf16.msra.mxu0 %v453
      %463 = vmatprep.subr.bf16.mxu0 0
      %464 = vmatpush1.bf16.msra.mxu0 0
      %465 = vmatprep.subr.bf16.mxu0 0
      %466 = vmatpush1.bf16.msra.mxu0 0
      %467 = vmatprep.subr.bf16.mxu0 0
      %468 = vmatpush1.bf16.msra.mxu0 0
      %469 = vmatprep.subr.bf16.mxu0 0
      %470 = vmatpush1.bf16.msra.mxu0 0
      %471 = vmatprep.subr.bf16.mxu0 0
      %472 = vmatpush1.bf16.msra.mxu0 0
      %473 = vmatprep.subr.bf16.mxu0 0
      %474 = vmatpush1.bf16.msra.mxu0 0
      %475 = vmatprep.subr.bf16.mxu0 0
      %476 = vmatpush1.bf16.msra.mxu0 0
      %477 = vmatprep.subr.bf16.mxu0 0
      %478 = vmatpush1.bf16.msra.mxu0 0
      %479 = vmatprep.subr.bf16.mxu0 0
      %480 = vmatpush1.bf16.msra.mxu0 0
      %481 = vmatprep.subr.bf16.mxu0 0
      %482 = vmatpush1.bf16.msra.mxu0 0
      %483 = vmatprep.subr.bf16.mxu0 0
      %484 = vmatpush1.bf16.msra.mxu0 0
      %485 = vmatprep.subr.bf16.mxu0 0
      %486 = vmatpush1.bf16.msra.mxu0 0
      %487 = vmatprep.subr.bf16.mxu0 0
      %488 = vmatpush1.bf16.msra.mxu0 0
      %489 = vmatprep.subr.bf16.mxu0 0
      %490 = vmatpush1.bf16.msra.mxu0 0
      %491 = vmatprep.subr.bf16.mxu0 0
      %492 = vmatpush1.bf16.msra.mxu0 0
      %493 = vmatprep.mubr.bf16.mxu0 0
      %494 = vmatmul.mubr.bf16.gmra.mrb[0].mxu0 %v456
      %v495 = vpop.f32.mrb[0].mxu0
      %v496 = vadd.f32 0.0, %v495
      %v497 = vpop.f32.mrb[0].mxu0
      %v498 = vpop.f32.mrb[0].mxu0
      %v499 = vadd.f32 0.0, %v498
      %v500 = vpop.f32.mrb[0].mxu0
      %501 = vmatprep.mubr.bf16.mxu0 0
      %502 = vmatmul.mubr.bf16.gmra.mrb[0].mxu0 %v459
      %v503 = vpop.f32.mrb[0].mxu0
      %v504 = vadd.f32 0.0, %v503
      %v505 = vpop.f32.mrb[0].mxu0
      %v506 = vpop.f32.mrb[0].mxu0
      %v507 = vadd.f32 0.0, %v506
      %v508 = vpop.f32.mrb[0].mxu0
      %509 = vdwg.mxu0
      %v510 = vadd.f32 %v417, %v496
      %v511 = vadd.f32 %v420, %v499
      %v512 = vadd.f32 %v425, %v504
      %v513 = vadd.f32 %v428, %v507
      %s514 = scalar_lea.vmem %s251, 48
      %v515 = vld [vmem:[%s514] sm:$0xf]
      %v516 = vld [vmem:[%s514 + $0x4] sm:$0xf]
      %v517 = vld [vmem:[%s514 + $0x8] sm:$0xf]
      %v518 = vld [vmem:[%s514 + $0xc] sm:$0xf]
      %s519 = scalar_lea.vmem %s1, 24
      %v520 = vld [vmem:[%s519] sm:$0xf]
      %v521 = vld [vmem:[%s519 + $0x4] sm:$0xf]
      %v526 = vunpack.c.l.b16 %v515
      %v527 = vunpack.c.l.b16 %v516
      %v528 = vunpack.c.l.b16 %v517
      %v529 = vunpack.c.l.b16 %v518
      %v530 = vpack.c.b16 %v527, %v526
      %v531 = vpack.c.b16 %v529, %v528
      %v534 = vunpack.c.l.b16 %v520
      %v535 = vunpack.c.l.b16 %v521
      %v536 = vpack.c.b16 %v535, %v534
      %v539 = vsel %vm304, %v530, 0
      %v542 = vsel %vm304, %v531, 0
      %544 = vmatprep.subr.bf16.mxu0 0
      %545 = vmatpush1.bf16.msra.mxu0 %v536
      %546 = vmatprep.subr.bf16.mxu0 0
      %547 = vmatpush1.bf16.msra.mxu0 0
      %548 = vmatprep.subr.bf16.mxu0 0
      %549 = vmatpush1.bf16.msra.mxu0 0
      %550 = vmatprep.subr.bf16.mxu0 0
      %551 = vmatpush1.bf16.msra.mxu0 0
      %552 = vmatprep.subr.bf16.mxu0 0
      %553 = vmatpush1.bf16.msra.mxu0 0
      %554 = vmatprep.subr.bf16.mxu0 0
      %555 = vmatpush1.bf16.msra.mxu0 0
      %556 = vmatprep.subr.bf16.mxu0 0
      %557 = vmatpush1.bf16.msra.mxu0 0
      %558 = vmatprep.subr.bf16.mxu0 0
      %559 = vmatpush1.bf16.msra.mxu0 0
      %560 = vmatprep.subr.bf16.mxu0 0
      %561 = vmatpush1.bf16.msra.mxu0 0
      %562 = vmatprep.subr.bf16.mxu0 0
      %563 = vmatpush1.bf16.msra.mxu0 0
      %564 = vmatprep.subr.bf16.mxu0 0
      %565 = vmatpush1.bf16.msra.mxu0 0
      %566 = vmatprep.subr.bf16.mxu0 0
      %567 = vmatpush1.bf16.msra.mxu0 0
      %568 = vmatprep.subr.bf16.mxu0 0
      %569 = vmatpush1.bf16.msra.mxu0 0
      %570 = vmatprep.subr.bf16.mxu0 0
      %571 = vmatpush1.bf16.msra.mxu0 0
      %572 = vmatprep.subr.bf16.mxu0 0
      %573 = vmatpush1.bf16.msra.mxu0 0
      %574 = vmatprep.subr.bf16.mxu0 0
      %575 = vmatpush1.bf16.msra.mxu0 0
      %576 = vmatprep.mubr.bf16.mxu0 0
      %577 = vmatmul.mubr.bf16.gmra.mrb[0].mxu0 %v539
      %v578 = vpop.f32.mrb[0].mxu0
      %v579 = vadd.f32 0.0, %v578
      %v580 = vpop.f32.mrb[0].mxu0
      %v581 = vpop.f32.mrb[0].mxu0
      %v582 = vadd.f32 0.0, %v581
      %v583 = vpop.f32.mrb[0].mxu0
      %584 = vmatprep.mubr.bf16.mxu0 0
      %585 = vmatmul.mubr.bf16.gmra.mrb[0].mxu0 %v542
      %v586 = vpop.f32.mrb[0].mxu0
      %v587 = vadd.f32 0.0, %v586
      %v588 = vpop.f32.mrb[0].mxu0
      %v589 = vpop.f32.mrb[0].mxu0
      %v590 = vadd.f32 0.0, %v589
      %v591 = vpop.f32.mrb[0].mxu0
      %592 = vdwg.mxu0
      %v593 = vadd.f32 %v510, %v579
      %v594 = vadd.f32 %v511, %v582
      %v595 = vadd.f32 %v512, %v587
      %v596 = vadd.f32 %v513, %v590
      %v597 = vld [vmem:[%s2] sm:$0x1]
      %v599 = vlaneseq
      %v600 = vshrl.u32 %v599, 7
      %v601 = vsub.s32 0, %v600
      %v602 = vrot.slane %v597, %v601
      %v604 = vadd.f32 %v593, %v602
      %v605 = vadd.f32 %v594, %v602
      %v606 = vadd.f32 %v595, %v602
      %v607 = vadd.f32 %v596, %v602
      %v608 = vld [vmem:[%s261] sm:$0xf]
      %v609 = vld [vmem:[%s261 + $0x4] sm:$0xf]
      %v610 = vld [vmem:[%s261 + $0x8] sm:$0xf]
      %v611 = vld [vmem:[%s261 + $0xc] sm:$0xf]
      %v612 = vunpack.c.l.bf16 %v608
      %v613 = vunpack.c.l.bf16 %v609
      %v614 = vunpack.c.l.bf16 %v610
      %v615 = vunpack.c.l.bf16 %v611
      %v616 = vadd.f32 %v604, %v612
      %v617 = vadd.f32 %v605, %v613
      %v618 = vadd.f32 %v606, %v614
      %v619 = vadd.f32 %v607, %v615
      %v620 = vpack.c.bf16 %v617, %v616
      %v621 = vpack.c.bf16 %v619, %v618
      %v624 = vunpack.c.l.b16 %v620
      %v625 = vunpack.c.h.b16 %v620
      %v626 = vunpack.c.l.b16 %v621
      %v627 = vunpack.c.h.b16 %v621
      %v628 = vpack.c.b16 %v624, %v624
      %v629 = vpack.c.b16 %v625, %v625
      %v630 = vpack.c.b16 %v626, %v626
      %v631 = vpack.c.b16 %v627, %v627
      %vm636 = vcmask 519168
      %637 = vst.msk [vmem:[%s271] sm:$0xf] %vm636, %v628
      %638 = vst.msk [vmem:[%s271 + $0x4] sm:$0xf] %vm636, %v629
      %639 = vst.msk [vmem:[%s271 + $0x8] sm:$0xf] %vm636, %v630
      %640 = vst.msk [vmem:[%s271 + $0xc] sm:$0xf] %vm636, %v631
      %s641 = smul.u32 4, %s20
      %p642 = scmp.lt.s32.totalorder %s19, 1
      %s643 = scalar_select %p642, %s19, 1
      %p644 = scmp.lt.s32.totalorder %s641, 3
      %s645 = scalar_select %p644, %s641, 3
      %s646 = smul.addr %s643, 4
      %s647 = sadd.s32 %s645, %s646
      %s648 = smul.addr %s647, 4
      %s649 = scalar_lea.vmem %s4, %s648
      // Predicated region
      $region37: #{_lambda_.13} parent=35 // pred_check
        %p650 = pneg %p145
      $region38: #{_lambda_.13} parent=35 // pred_check_branch
        %652 = sbr.rel (%p650) target = $region40
      $region39: #{_lambda_.13} parent=35 // pred_region
        %s653 = smul.u32 4, %s20
      $region40: #{_lambda_.13} parent=35 // pred_fallthru
        _
    $region36: #{_lambda_.13} parent=5 // pred_fallthru
      _
    %p654 = scmp.le.s32.totalorder 2, %s10
    // Predicated region
    $region41: #{_lambda_.13} parent=5 // pred_check
      %p655 = pneg %p654
    $region42: #{_lambda_.13} parent=5 // pred_check_branch
      %657 = sbr.rel (%p655) target = $region44
    $region43: #{_lambda_.13} parent=5 // pred_region
      %s658 = ssub.s32 %s10, 2
      // Predicated region
      $region45: #{_lambda_.13} parent=43 // pred_check
        %p659 = pneg %p151
      $region46: #{_lambda_.13} parent=43 // pred_check_branch
        %661 = sbr.rel (%p659) target = $region48
      $region47: #{_lambda_.13} parent=43 // pred_region
        %s662 = smul.u32 4, %s22
        %p663 = scmp.lt.s32.totalorder %s21, 1
        %s664 = scalar_select %p663, %s21, 1
        %p665 = scmp.lt.s32.totalorder %s662, 3
        %s666 = scalar_select %p665, %s662, 3
        %s667 = smul.addr %s664, 4
        %s668 = sadd.s32 %s666, %s667
        %s669 = smul.addr %s668, 4
        %s670 = scalar_lea.vmem %s4, %s669
      $region48: #{_lambda_.13} parent=43 // pred_fallthru
        _
    $region44: #{_lambda_.13} parent=5 // pred_fallthru
      _
  $region6: #{_lambda_.13} parent=0 // loop_footer
    %s14 = sadd.s32 1, %s10
  $region7: #{_lambda_.13} parent=0 // loop_footer_branch
    %9 = sbr.rel target = $region3
  $region8: #{_lambda_.13} parent=0 // loop_exit
    _

// kernel: _lambda_.19
$region0: #{_lambda_.19}
  #allocation0 [shape = 'u32[]', space=smem, size = 0x4, offset = 0x4, fixed_abs, tag = 'smem constant byte address 0x4 - core index']
  #allocation1 [shape = 'u32[144,128]{1,0:T(1,128)}', space=vmem, size = 0x12000, scoped, tag = 'internal scratch']
  %s0 = inlined_call_operand.vmem [shape: bf16[64,64], index: 0, kind: input, shape index: {}]
  %s1 = inlined_call_operand.vmem [shape: f32[1,64], index: 1, kind: input, shape index: {}]
  %s2 = inlined_call_operand.vmem [shape: f32[1,64], index: 2, kind: input, shape index: {}]
  %s3 = inlined_call_operand.vmem [shape: bf16[64,64], index: 3, kind: output, shape index: {}]
  %s4 = sld [smem:[#allocation0]]
  $region22: #{_lambda_.19} parent=0
    _
  %s6 = ssub.s32 1, %s4
  %s7 = scalar_select 0, %s6, %s4
  // Predicated region
  $region2: #{_lambda_.19} parent=0 // pred_check
    _
  $region3: #{_lambda_.19} parent=0 // pred_check_branch
    %9 = sbr.rel (0) target = $region5
  $region4: #{_lambda_.19} parent=0 // pred_region
    _
  $region5: #{_lambda_.19} parent=0 // pred_fallthru
    _
  // Predicated region
  $region6: #{_lambda_.19} parent=0 // pred_check
    _
  $region7: #{_lambda_.19} parent=0 // pred_check_branch
    %11 = sbr.rel (0) target = $region9
  $region8: #{_lambda_.19} parent=0 // pred_region
    _
  $region9: #{_lambda_.19} parent=0 // pred_fallthru
    _
  // Predicated region
  $region10: #{_lambda_.19} parent=0 // pred_check
    _
  $region11: #{_lambda_.19} parent=0 // pred_check_branch
    %13 = sbr.rel (0) target = $region13
  $region12: #{_lambda_.19} parent=0 // pred_region
    _
  $region13: #{_lambda_.19} parent=0 // pred_fallthru
    _
  %v14 = vld [vmem:[%s0] sm:$0xf]
  %v15 = vld [vmem:[%s0 + $0x4] sm:$0xf]
  %v16 = vld [vmem:[%s0 + $0x8] sm:$0xf]
  %v17 = vld [vmem:[%s0 + $0xc] sm:$0xf]
  %v18 = vld [vmem:[%s0 + $0x10] sm:$0xf]
  %v19 = vld [vmem:[%s0 + $0x14] sm:$0xf]
  %v20 = vld [vmem:[%s0 + $0x18] sm:$0xf]
  %v21 = vld [vmem:[%s0 + $0x1c] sm:$0xf]
  %v22 = vunpack.c.l.bf16 %v14
  %v23 = vunpack.c.l.bf16 %v15
  %v24 = vunpack.c.l.bf16 %v16
  %v25 = vunpack.c.l.bf16 %v17
  %v26 = vunpack.c.l.bf16 %v18
  %v27 = vunpack.c.l.bf16 %v19
  %v28 = vunpack.c.l.bf16 %v20
  %v29 = vunpack.c.l.bf16 %v21
  %vm30 = vcmask 523264
  %v31 = vsel %vm30, %v22, 0.0
  %32 = vadd.xlane.f32.xlu0 %v31
  %v33 = vpop.xlane.xlu0 %32
  %v34 = vsel %vm30, %v23, 0.0
  %35 = vadd.xlane.f32.xlu0 %v34
  %v36 = vpop.xlane.xlu0 %35
  %v37 = vsel %vm30, %v24, 0.0
  %38 = vadd.xlane.f32.xlu0 %v37
  %v39 = vpop.xlane.xlu0 %38
  %v40 = vsel %vm30, %v25, 0.0
  %41 = vadd.xlane.f32.xlu0 %v40
  %v42 = vpop.xlane.xlu0 %41
  %v43 = vsel %vm30, %v26, 0.0
  %44 = vadd.xlane.f32.xlu0 %v43
  %v45 = vpop.xlane.xlu0 %44
  %v46 = vsel %vm30, %v27, 0.0
  %47 = vadd.xlane.f32.xlu0 %v46
  %v48 = vpop.xlane.xlu0 %47
  %v49 = vsel %vm30, %v28, 0.0
  %50 = vadd.xlane.f32.xlu0 %v49
  %v51 = vpop.xlane.xlu0 %50
  %v52 = vsel %vm30, %v29, 0.0
  %53 = vadd.xlane.f32.xlu0 %v52
  %v54 = vpop.xlane.xlu0 %53
  %v55 = vrcp.pop 64.0
  %v56 = vmul.f32 %v33, %v55
  %v57 = vmul.f32 %v36, %v55
  %v58 = vmul.f32 %v39, %v55
  %v59 = vmul.f32 %v42, %v55
  %v60 = vmul.f32 %v45, %v55
  %v61 = vmul.f32 %v48, %v55
  %v62 = vmul.f32 %v51, %v55
  %v63 = vmul.f32 %v54, %v55
  %v64 = vsub.f32 %v22, %v56
  %v65 = vsub.f32 %v23, %v57
  %v66 = vsub.f32 %v24, %v58
  %v67 = vsub.f32 %v25, %v59
  %v68 = vsub.f32 %v26, %v60
  %v69 = vsub.f32 %v27, %v61
  %v70 = vsub.f32 %v28, %v62
  %v71 = vsub.f32 %v29, %v63
  %v72 = vmul.f32 %v64, %v64
  %v73 = vmul.f32 %v65, %v65
  %v74 = vmul.f32 %v66, %v66
  %v75 = vmul.f32 %v67, %v67
  %v76 = vmul.f32 %v68, %v68
  %v77 = vmul.f32 %v69, %v69
  %v78 = vmul.f32 %v70, %v70
  %v79 = vmul.f32 %v71, %v71
  %v80 = vsel %vm30, %v72, 0.0
  %81 = vadd.xlane.f32.xlu0 %v80
  %v82 = vpop.xlane.xlu0 %81
  %v83 = vsel %vm30, %v73, 0.0
  %84 = vadd.xlane.f32.xlu0 %v83
  %v85 = vpop.xlane.xlu0 %84
  %v86 = vsel %vm30, %v74, 0.0
  %87 = vadd.xlane.f32.xlu0 %v86
  %v88 = vpop.xlane.xlu0 %87
  %v89 = vsel %vm30, %v75, 0.0
  %90 = vadd.xlane.f32.xlu0 %v89
  %v91 = vpop.xlane.xlu0 %90
  %v92 = vsel %vm30, %v76, 0.0
  %93 = vadd.xlane.f32.xlu0 %v92
  %v94 = vpop.xlane.xlu0 %93
  %v95 = vsel %vm30, %v77, 0.0
  %96 = vadd.xlane.f32.xlu0 %v95
  %v97 = vpop.xlane.xlu0 %96
  %v98 = vsel %vm30, %v78, 0.0
  %99 = vadd.xlane.f32.xlu0 %v98
  %v100 = vpop.xlane.xlu0 %99
  %v101 = vsel %vm30, %v79, 0.0
  %102 = vadd.xlane.f32.xlu0 %v101
  %v103 = vpop.xlane.xlu0 %102
  %v104 = vmul.f32 %v82, %v55
  %v105 = vmul.f32 %v85, %v55
  %v106 = vmul.f32 %v88, %v55
  %v107 = vmul.f32 %v91, %v55
  %v108 = vmul.f32 %v94, %v55
  %v109 = vmul.f32 %v97, %v55
  %v110 = vmul.f32 %v100, %v55
  %v111 = vmul.f32 %v103, %v55
  %v112 = vadd.f32 %v104, 1e-06
  %v113 = vadd.f32 %v105, 1e-06
  %v114 = vadd.f32 %v106, 1e-06
  %v115 = vadd.f32 %v107, 1e-06
  %v116 = vadd.f32 %v108, 1e-06
  %v117 = vadd.f32 %v109, 1e-06
  %v118 = vadd.f32 %v110, 1e-06
  %v119 = vadd.f32 %v111, 1e-06
  %v120 = vrsqrt.pop %v112
  %v121 = vrsqrt.pop %v113
  %v122 = vrsqrt.pop %v114
  %v123 = vrsqrt.pop %v115
  %v124 = vrsqrt.pop %v116
  %v125 = vrsqrt.pop %v117
  %v126 = vrsqrt.pop %v118
  %v127 = vrsqrt.pop %v119
  %v128 = vmul.f32 %v64, %v120
  %v129 = vmul.f32 %v65, %v121
  %v130 = vmul.f32 %v66, %v122
  %v131 = vmul.f32 %v67, %v123
  %v132 = vmul.f32 %v68, %v124
  %v133 = vmul.f32 %v69, %v125
  %v134 = vmul.f32 %v70, %v126
  %v135 = vmul.f32 %v71, %v127
  %v136 = vld [vmem:[%s1] sm:$0x1]
  %v138 = vlaneseq
  %v139 = vshrl.u32 %v138, 7
  %v140 = vsub.s32 0, %v139
  %v141 = vrot.slane %v136, %v140
  %v143 = vmul.f32 %v128, %v141
  %v144 = vmul.f32 %v129, %v141
  %v145 = vmul.f32 %v130, %v141
  %v146 = vmul.f32 %v131, %v141
  %v147 = vmul.f32 %v132, %v141
  %v148 = vmul.f32 %v133, %v141
  %v149 = vmul.f32 %v134, %v141
  %v150 = vmul.f32 %v135, %v141
  %v151 = vld [vmem:[%s2] sm:$0x1]
  %v153 = vlaneseq
  %v154 = vshrl.u32 %v153, 7
  %v155 = vsub.s32 0, %v154
  %v156 = vrot.slane %v151, %v155
  %v158 = vadd.f32 %v143, %v156
  %v159 = vadd.f32 %v144, %v156
  %v160 = vadd.f32 %v145, %v156
  %v161 = vadd.f32 %v146, %v156
  %v162 = vadd.f32 %v147, %v156
  %v163 = vadd.f32 %v148, %v156
  %v164 = vadd.f32 %v149, %v156
  %v165 = vadd.f32 %v150, %v156
  %v166 = vpack.c.bf16 %v159, %v158
  %v167 = vpack.c.bf16 %v161, %v160
  %v168 = vpack.c.bf16 %v163, %v162
  %v169 = vpack.c.bf16 %v165, %v164
  %v174 = vunpack.c.l.b16 %v166
  %v175 = vunpack.c.h.b16 %v166
  %v176 = vunpack.c.l.b16 %v167
  %v177 = vunpack.c.h.b16 %v167
  %v178 = vunpack.c.l.b16 %v168
  %v179 = vunpack.c.h.b16 %v168
  %v180 = vunpack.c.l.b16 %v169
  %v181 = vunpack.c.h.b16 %v169
  %v182 = vpack.c.b16 %v174, %v174
  %v183 = vpack.c.b16 %v175, %v175
  %v184 = vpack.c.b16 %v176, %v176
  %v185 = vpack.c.b16 %v177, %v177
  %v186 = vpack.c.b16 %v178, %v178
  %v187 = vpack.c.b16 %v179, %v179
  %v188 = vpack.c.b16 %v180, %v180
  %v189 = vpack.c.b16 %v181, %v181
  %vm198 = vcmask 519168
  %199 = vst.msk [vmem:[%s3] sm:$0xf] %vm198, %v182
  %200 = vst.msk [vmem:[%s3 + $0x4] sm:$0xf] %vm198, %v183
  %201 = vst.msk [vmem:[%s3 + $0x8] sm:$0xf] %vm198, %v184
  %202 = vst.msk [vmem:[%s3 + $0xc] sm:$0xf] %vm198, %v185
  %203 = vst.msk [vmem:[%s3 + $0x10] sm:$0xf] %vm198, %v186
  %204 = vst.msk [vmem:[%s3 + $0x14] sm:$0xf] %vm198, %v187
  %205 = vst.msk [vmem:[%s3 + $0x18] sm:$0xf] %vm198, %v188
  %206 = vst.msk [vmem:[%s3 + $0x1c] sm:$0xf] %vm198, %v189
  // Predicated region
  $region14: #{_lambda_.19} parent=0 // pred_check
    _
  $region15: #{_lambda_.19} parent=0 // pred_check_branch
    %208 = sbr.rel (0) target = $region17
  $region16: #{_lambda_.19} parent=0 // pred_region
    _
  $region17: #{_lambda_.19} parent=0 // pred_fallthru
    _
  // Predicated region
  $region18: #{_lambda_.19} parent=0 // pred_check
    _
  $region19: #{_lambda_.19} parent=0 // pred_check_branch
    %210 = sbr.rel (0) target = $region21
  $region20: #{_lambda_.19} parent=0 // pred_region
    _
  $region21: #{_lambda_.19} parent=0 // pred_fallthru
    _

// kernel: _lambda_.14
$region0: #{_lambda_.14}
  #allocation0 [shape = 'u32[]', space=smem, size = 0x4, offset = 0x4, fixed_abs, tag = 'smem constant byte address 0x4 - core index']
  #allocation1 [shape = 'u32[144,128]{1,0:T(1,128)}', space=vmem, size = 0x12000, scoped, tag = 'internal scratch']
  #allocation2 [shape = 'bf16[64,64]{1,0:T(16,128)(2,1)}', space=vmem, size = 0x4000, scoped, tag = 'scratch operand']
  #allocation3 [shape = 'f32[64,64]{1,0:T(8,128)}', space=vmem, size = 0x8000, scoped, tag = 'scratch operand']
  %s0 = inlined_call_operand.vmem [shape: bf16[64,64], index: 0, kind: input, shape index: {}]
  %s1 = inlined_call_operand.vmem [shape: f32[1,64], index: 1, kind: input, shape index: {}]
  %s2 = inlined_call_operand.vmem [shape: f32[1,64], index: 2, kind: input, shape index: {}]
  %s3 = inlined_call_operand.vmem [shape: bf16[64,128], index: 3, kind: input, shape index: {}]
  %s4 = inlined_call_operand.vmem [shape: f32[1,128], index: 4, kind: input, shape index: {}]
  %s5 = inlined_call_operand.vmem [shape: bf16[128,64], index: 5, kind: input, shape index: {}]
  %s6 = inlined_call_operand.vmem [shape: f32[1,64], index: 6, kind: input, shape index: {}]
  %s7 = inlined_call_operand.vmem [shape: bf16[64,64], index: 7, kind: output, shape index: {}]
  %s8 = sld [smem:[#allocation0]]
  $region46: #{_lambda_.14} parent=0
    _
  %s10 = ssub.s32 1, %s8
  %s11 = scalar_select 0, %s10, %s8
  // Predicated region
  $region2: #{_lambda_.14} parent=0 // pred_check
    _
  $region3: #{_lambda_.14} parent=0 // pred_check_branch
    %13 = sbr.rel (0) target = $region5
  $region4: #{_lambda_.14} parent=0 // pred_region
    _
  $region5: #{_lambda_.14} parent=0 // pred_fallthru
    _
  // Predicated region
  $region6: #{_lambda_.14} parent=0 // pred_check
    _
  $region7: #{_lambda_.14} parent=0 // pred_check_branch
    %15 = sbr.rel (0) target = $region9
  $region8: #{_lambda_.14} parent=0 // pred_region
    _
  $region9: #{_lambda_.14} parent=0 // pred_fallthru
    _
  // Predicated region
  $region10: #{_lambda_.14} parent=0 // pred_check
    _
  $region11: #{_lambda_.14} parent=0 // pred_check_branch
    %17 = sbr.rel (0) target = $region13
  $region12: #{_lambda_.14} parent=0 // pred_region
    _
  $region13: #{_lambda_.14} parent=0 // pred_fallthru
    _
  // Predicated region
  $region14: #{_lambda_.14} parent=0 // pred_check
    _
  $region15: #{_lambda_.14} parent=0 // pred_check_branch
    %19 = sbr.rel (0) target = $region17
  $region16: #{_lambda_.14} parent=0 // pred_region
    _
  $region17: #{_lambda_.14} parent=0 // pred_fallthru
    _
  // Predicated region
  $region18: #{_lambda_.14} parent=0 // pred_check
    _
  $region19: #{_lambda_.14} parent=0 // pred_check_branch
    %21 = sbr.rel (0) target = $region21
  $region20: #{_lambda_.14} parent=0 // pred_region
    _
  $region21: #{_lambda_.14} parent=0 // pred_fallthru
    _
  // Predicated region
  $region22: #{_lambda_.14} parent=0 // pred_check
    _
  $region23: #{_lambda_.14} parent=0 // pred_check_branch
    %23 = sbr.rel (0) target = $region25
  $region24: #{_lambda_.14} parent=0 // pred_region
    _
  $region25: #{_lambda_.14} parent=0 // pred_fallthru
    _
  // Predicated region
  $region26: #{_lambda_.14} parent=0 // pred_check
    _
  $region27: #{_lambda_.14} parent=0 // pred_check_branch
    %25 = sbr.rel (0) target = $region29
  $region28: #{_lambda_.14} parent=0 // pred_region
    _
  $region29: #{_lambda_.14} parent=0 // pred_fallthru
    _
  %p31 = scmp.eq.s32.totalorder 0, 0
  // Predicated region
  $region30: #{_lambda_.14} parent=0 // pred_check
    %p32 = pneg %p31
  $region31: #{_lambda_.14} parent=0 // pred_check_branch
    %34 = sbr.rel (%p32) target = $region33
  $region32: #{_lambda_.14} parent=0 // pred_region
    %v35 = vld [vmem:[%s0] sm:$0xf]
    %v36 = vld [vmem:[%s0 + $0x4] sm:$0xf]
    %v37 = vld [vmem:[%s0 + $0x8] sm:$0xf]
    %v38 = vld [vmem:[%s0 + $0xc] sm:$0xf]
    %v39 = vld [vmem:[%s0 + $0x10] sm:$0xf]
    %v40 = vld [vmem:[%s0 + $0x14] sm:$0xf]
    %v41 = vld [vmem:[%s0 + $0x18] sm:$0xf]
    %v42 = vld [vmem:[%s0 + $0x1c] sm:$0xf]
    %v43 = vunpack.c.l.bf16 %v35
    %v44 = vunpack.c.l.bf16 %v36
    %v45 = vunpack.c.l.bf16 %v37
    %v46 = vunpack.c.l.bf16 %v38
    %v47 = vunpack.c.l.bf16 %v39
    %v48 = vunpack.c.l.bf16 %v40
    %v49 = vunpack.c.l.bf16 %v41
    %v50 = vunpack.c.l.bf16 %v42
    %vm51 = vcmask 523264
    %v52 = vsel %vm51, %v43, 0.0
    %53 = vadd.xlane.f32.xlu0 %v52
    %v54 = vpop.xlane.xlu0 %53
    %v55 = vsel %vm51, %v44, 0.0
    %56 = vadd.xlane.f32.xlu0 %v55
    %v57 = vpop.xlane.xlu0 %56
    %v58 = vsel %vm51, %v45, 0.0
    %59 = vadd.xlane.f32.xlu0 %v58
    %v60 = vpop.xlane.xlu0 %59
    %v61 = vsel %vm51, %v46, 0.0
    %62 = vadd.xlane.f32.xlu0 %v61
    %v63 = vpop.xlane.xlu0 %62
    %v64 = vsel %vm51, %v47, 0.0
    %65 = vadd.xlane.f32.xlu0 %v64
    %v66 = vpop.xlane.xlu0 %65
    %v67 = vsel %vm51, %v48, 0.0
    %68 = vadd.xlane.f32.xlu0 %v67
    %v69 = vpop.xlane.xlu0 %68
    %v70 = vsel %vm51, %v49, 0.0
    %71 = vadd.xlane.f32.xlu0 %v70
    %v72 = vpop.xlane.xlu0 %71
    %v73 = vsel %vm51, %v50, 0.0
    %74 = vadd.xlane.f32.xlu0 %v73
    %v75 = vpop.xlane.xlu0 %74
    %v76 = vrcp.pop 64.0
    %v77 = vmul.f32 %v54, %v76
    %v78 = vmul.f32 %v57, %v76
    %v79 = vmul.f32 %v60, %v76
    %v80 = vmul.f32 %v63, %v76
    %v81 = vmul.f32 %v66, %v76
    %v82 = vmul.f32 %v69, %v76
    %v83 = vmul.f32 %v72, %v76
    %v84 = vmul.f32 %v75, %v76
    %v85 = vsub.f32 %v43, %v77
    %v86 = vsub.f32 %v44, %v78
    %v87 = vsub.f32 %v45, %v79
    %v88 = vsub.f32 %v46, %v80
    %v89 = vsub.f32 %v47, %v81
    %v90 = vsub.f32 %v48, %v82
    %v91 = vsub.f32 %v49, %v83
    %v92 = vsub.f32 %v50, %v84
    %v93 = vmul.f32 %v85, %v85
    %v94 = vmul.f32 %v86, %v86
    %v95 = vmul.f32 %v87, %v87
    %v96 = vmul.f32 %v88, %v88
    %v97 = vmul.f32 %v89, %v89
    %v98 = vmul.f32 %v90, %v90
    %v99 = vmul.f32 %v91, %v91
    %v100 = vmul.f32 %v92, %v92
    %v101 = vsel %vm51, %v93, 0.0
    %102 = vadd.xlane.f32.xlu0 %v101
    %v103 = vpop.xlane.xlu0 %102
    %v104 = vsel %vm51, %v94, 0.0
    %105 = vadd.xlane.f32.xlu0 %v104
    %v106 = vpop.xlane.xlu0 %105
    %v107 = vsel %vm51, %v95, 0.0
    %108 = vadd.xlane.f32.xlu0 %v107
    %v109 = vpop.xlane.xlu0 %108
    %v110 = vsel %vm51, %v96, 0.0
    %111 = vadd.xlane.f32.xlu0 %v110
    %v112 = vpop.xlane.xlu0 %111
    %v113 = vsel %vm51, %v97, 0.0
    %114 = vadd.xlane.f32.xlu0 %v113
    %v115 = vpop.xlane.xlu0 %114
    %v116 = vsel %vm51, %v98, 0.0
    %117 = vadd.xlane.f32.xlu0 %v116
    %v118 = vpop.xlane.xlu0 %117
    %v119 = vsel %vm51, %v99, 0.0
    %120 = vadd.xlane.f32.xlu0 %v119
    %v121 = vpop.xlane.xlu0 %120
    %v122 = vsel %vm51, %v100, 0.0
    %123 = vadd.xlane.f32.xlu0 %v122
    %v124 = vpop.xlane.xlu0 %123
    %v125 = vmul.f32 %v103, %v76
    %v126 = vmul.f32 %v106, %v76
    %v127 = vmul.f32 %v109, %v76
    %v128 = vmul.f32 %v112, %v76
    %v129 = vmul.f32 %v115, %v76
    %v130 = vmul.f32 %v118, %v76
    %v131 = vmul.f32 %v121, %v76
    %v132 = vmul.f32 %v124, %v76
    %v133 = vadd.f32 %v125, 1e-06
    %v134 = vadd.f32 %v126, 1e-06
    %v135 = vadd.f32 %v127, 1e-06
    %v136 = vadd.f32 %v128, 1e-06
    %v137 = vadd.f32 %v129, 1e-06
    %v138 = vadd.f32 %v130, 1e-06
    %v139 = vadd.f32 %v131, 1e-06
    %v140 = vadd.f32 %v132, 1e-06
    %v141 = vrsqrt.pop %v133
    %v142 = vrsqrt.pop %v134
    %v143 = vrsqrt.pop %v135
    %v144 = vrsqrt.pop %v136
    %v145 = vrsqrt.pop %v137
    %v146 = vrsqrt.pop %v138
    %v147 = vrsqrt.pop %v139
    %v148 = vrsqrt.pop %v140
    %v149 = vmul.f32 %v85, %v141
    %v150 = vmul.f32 %v86, %v142
    %v151 = vmul.f32 %v87, %v143
    %v152 = vmul.f32 %v88, %v144
    %v153 = vmul.f32 %v89, %v145
    %v154 = vmul.f32 %v90, %v146
    %v155 = vmul.f32 %v91, %v147
    %v156 = vmul.f32 %v92, %v148
    %v157 = vld [vmem:[%s1] sm:$0x1]
    %v159 = vlaneseq
    %v160 = vshrl.u32 %v159, 7
    %v161 = vsub.s32 0, %v160
    %v162 = vrot.slane %v157, %v161
    %v164 = vmul.f32 %v149, %v162
    %v165 = vmul.f32 %v150, %v162
    %v166 = vmul.f32 %v151, %v162
    %v167 = vmul.f32 %v152, %v162
    %v168 = vmul.f32 %v153, %v162
    %v169 = vmul.f32 %v154, %v162
    %v170 = vmul.f32 %v155, %v162
    %v171 = vmul.f32 %v156, %v162
    %v172 = vld [vmem:[%s2] sm:$0x1]
    %v174 = vlaneseq
    %v175 = vshrl.u32 %v174, 7
    %v176 = vsub.s32 0, %v175
    %v177 = vrot.slane %v172, %v176
    %v179 = vadd.f32 %v164, %v177
    %v180 = vadd.f32 %v165, %v177
    %v181 = vadd.f32 %v166, %v177
    %v182 = vadd.f32 %v167, %v177
    %v183 = vadd.f32 %v168, %v177
    %v184 = vadd.f32 %v169, %v177
    %v185 = vadd.f32 %v170, %v177
    %v186 = vadd.f32 %v171, %v177
    %v187 = vpack.c.bf16 %v180, %v179
    %v188 = vpack.c.bf16 %v182, %v181
    %v189 = vpack.c.bf16 %v184, %v183
    %v190 = vpack.c.bf16 %v186, %v185
    %191 = vst.msk [vmem:[#allocation2] sm:$0xff] %vm51, %v187
    %192 = vst.msk [vmem:[#allocation2 + $0x8] sm:$0xff] %vm51, %v188
    %193 = vst.msk [vmem:[#allocation2 + $0x10] sm:$0xff] %vm51, %v189
    %194 = vst.msk [vmem:[#allocation2 + $0x18] sm:$0xff] %vm51, %v190
    %195 = vst.msk [vmem:[#allocation3] sm:$0xff] %vm51, 0.0
    %196 = vst.msk [vmem:[#allocation3 + $0x8] sm:$0xff] %vm51, 0.0
    %197 = vst.msk [vmem:[#allocation3 + $0x10] sm:$0xff] %vm51, 0.0
    %198 = vst.msk [vmem:[#allocation3 + $0x18] sm:$0xff] %vm51, 0.0
    %199 = vst.msk [vmem:[#allocation3 + $0x20] sm:$0xff] %vm51, 0.0
    %200 = vst.msk [vmem:[#allocation3 + $0x28] sm:$0xff] %vm51, 0.0
    %201 = vst.msk [vmem:[#allocation3 + $0x30] sm:$0xff] %vm51, 0.0
    %202 = vst.msk [vmem:[#allocation3 + $0x38] sm:$0xff] %vm51, 0.0
  $region33: #{_lambda_.14} parent=0 // pred_fallthru
    _
  %v203 = vld [vmem:[#allocation2] sm:$0xff]
  %v204 = vld [vmem:[#allocation2 + $0x8] sm:$0xff]
  %v205 = vld [vmem:[#allocation2 + $0x10] sm:$0xff]
  %v206 = vld [vmem:[#allocation2 + $0x18] sm:$0xff]
  %v207 = vld [vmem:[%s3] sm:$0xf]
  %v208 = vld [vmem:[%s3 + $0x4] sm:$0xf]
  %v209 = vld [vmem:[%s3 + $0x8] sm:$0xf]
  %v210 = vld [vmem:[%s3 + $0xc] sm:$0xf]
  %v211 = vld [vmem:[%s3 + $0x10] sm:$0xf]
  %v212 = vld [vmem:[%s3 + $0x14] sm:$0xf]
  %v213 = vld [vmem:[%s3 + $0x18] sm:$0xf]
  %v214 = vld [vmem:[%s3 + $0x1c] sm:$0xf]
  %v215 = vld [vmem:[%s4] sm:$0x1]
  %v217 = vlaneseq
  %v218 = vshrl.u32 %v217, 7
  %v219 = vsub.s32 0, %v218
  %v220 = vrot.slane %v215, %v219
  %v230 = vunpack.c.l.b16 %v207
  %v231 = vunpack.c.l.b16 %v208
  %v232 = vunpack.c.l.b16 %v209
  %v233 = vunpack.c.l.b16 %v210
  %v234 = vunpack.c.l.b16 %v211
  %v235 = vunpack.c.l.b16 %v212
  %v236 = vunpack.c.l.b16 %v213
  %v237 = vunpack.c.l.b16 %v214
  %v238 = vpack.c.b16 %v231, %v230
  %v239 = vpack.c.b16 %v233, %v232
  %v240 = vpack.c.b16 %v235, %v234
  %v241 = vpack.c.b16 %v237, %v236
  %vm246 = vcmask 523264
  %v248 = vsel %vm246, %v203, 0
  %v251 = vsel %vm246, %v204, 0
  %v254 = vsel %vm246, %v205, 0
  %v257 = vsel %vm246, %v206, 0
  %259 = vmatprep.subr.bf16.mxu0 0
  %260 = vmatpush1.bf16.msra.mxu0 %v238
  %261 = vmatprep.subr.bf16.mxu0 0
  %262 = vmatpush1.bf16.msra.mxu0 %v239
  %263 = vmatprep.subr.bf16.mxu0 0
  %264 = vmatpush1.bf16.msra.mxu0 %v240
  %265 = vmatprep.subr.bf16.mxu0 0
  %266 = vmatpush1.bf16.msra.mxu0 %v241
  %267 = vmatprep.subr.bf16.mxu0 0
  %268 = vmatpush1.bf16.msra.mxu0 0
  %269 = vmatprep.subr.bf16.mxu0 0
  %270 = vmatpush1.bf16.msra.mxu0 0
  %271 = vmatprep.subr.bf16.mxu0 0
  %272 = vmatpush1.bf16.msra.mxu0 0
  %273 = vmatprep.subr.bf16.mxu0 0
  %274 = vmatpush1.bf16.msra.mxu0 0
  %275 = vmatprep.subr.bf16.mxu0 0
  %276 = vmatpush1.bf16.msra.mxu0 0
  %277 = vmatprep.subr.bf16.mxu0 0
  %278 = vmatpush1.bf16.msra.mxu0 0
  %279 = vmatprep.subr.bf16.mxu0 0
  %280 = vmatpush1.bf16.msra.mxu0 0
  %281 = vmatprep.subr.bf16.mxu0 0
  %282 = vmatpush1.bf16.msra.mxu0 0
  %283 = vmatprep.subr.bf16.mxu0 0
  %284 = vmatpush1.bf16.msra.mxu0 0
  %285 = vmatprep.subr.bf16.mxu0 0
  %286 = vmatpush1.bf16.msra.mxu0 0
  %287 = vmatprep.subr.bf16.mxu0 0
  %288 = vmatpush1.bf16.msra.mxu0 0
  %289 = vmatprep.subr.bf16.mxu0 0
  %290 = vmatpush1.bf16.msra.mxu0 0
  %291 = vmatprep.mubr.bf16.mxu0 0
  %292 = vmatmul.mubr.bf16.gmra.mrb[0].mxu0 %v248
  %v293 = vpop.f32.mrb[0].mxu0
  %v294 = vadd.f32 %v220, %v293
  %v295 = vpop.f32.mrb[0].mxu0
  %v296 = vpop.f32.mrb[0].mxu0
  %v297 = vadd.f32 %v220, %v296
  %v298 = vpop.f32.mrb[0].mxu0
  %299 = vmatprep.mubr.bf16.mxu0 0
  %300 = vmatmul.mubr.bf16.gmra.mrb[0].mxu0 %v251
  %v301 = vpop.f32.mrb[0].mxu0
  %v302 = vadd.f32 %v220, %v301
  %v303 = vpop.f32.mrb[0].mxu0
  %v304 = vpop.f32.mrb[0].mxu0
  %v305 = vadd.f32 %v220, %v304
  %v306 = vpop.f32.mrb[0].mxu0
  %307 = vmatprep.mubr.bf16.mxu0 0
  %308 = vmatmul.mubr.bf16.gmra.mrb[0].mxu0 %v254
  %v309 = vpop.f32.mrb[0].mxu0
  %v310 = vadd.f32 %v220, %v309
  %v311 = vpop.f32.mrb[0].mxu0
  %v312 = vpop.f32.mrb[0].mxu0
  %v313 = vadd.f32 %v220, %v312
  %v314 = vpop.f32.mrb[0].mxu0
  %315 = vmatprep.mubr.bf16.mxu0 0
  %316 = vmatmul.mubr.bf16.gmra.mrb[0].mxu0 %v257
  %v317 = vpop.f32.mrb[0].mxu0
  %v318 = vadd.f32 %v220, %v317
  %v319 = vpop.f32.mrb[0].mxu0
  %v320 = vpop.f32.mrb[0].mxu0
  %v321 = vadd.f32 %v220, %v320
  %v322 = vpop.f32.mrb[0].mxu0
  %323 = vdwg.mxu0
  %v324 = vpack.c.bf16 %v297, %v294
  %v325 = vpack.c.bf16 %v305, %v302
  %v326 = vpack.c.bf16 %v313, %v310
  %v327 = vpack.c.bf16 %v321, %v318
  %v328 = vmul.bf16 %v324, 1056980736
  %v329 = vmul.bf16 %v325, 1056980736
  %v330 = vmul.bf16 %v326, 1056980736
  %v331 = vmul.bf16 %v327, 1056980736
  %v332 = vmul.bf16 %v324, %v324
  %v333 = vmul.bf16 %v325, %v325
  %v334 = vmul.bf16 %v326, %v326
  %v335 = vmul.bf16 %v327, %v327
  %v336 = vmul.bf16 %v332, %v324
  %v337 = vmul.bf16 %v333, %v325
  %v338 = vmul.bf16 %v334, %v326
  %v339 = vmul.bf16 %v335, %v327
  %v340 = vmul.bf16 %v336, 1027030327
  %v341 = vmul.bf16 %v337, 1027030327
  %v342 = vmul.bf16 %v338, 1027030327
  %v343 = vmul.bf16 %v339, 1027030327
  %v344 = vadd.bf16 %v324, %v340
  %v345 = vadd.bf16 %v325, %v341
  %v346 = vadd.bf16 %v326, %v342
  %v347 = vadd.bf16 %v327, %v343
  %v348 = vmul.bf16 %v344, 1061961548
  %v349 = vmul.bf16 %v345, 1061961548
  %v350 = vmul.bf16 %v346, 1061961548
  %v351 = vmul.bf16 %v347, 1061961548
  %v352 = vtanh.bf16.pop %v348
  %v353 = vtanh.bf16.pop %v349
  %v354 = vtanh.bf16.pop %v350
  %v355 = vtanh.bf16.pop %v351
  %v356 = vadd.bf16 %v352, 1065369472
  %v357 = vadd.bf16 %v353, 1065369472
  %v358 = vadd.bf16 %v354, 1065369472
  %v359 = vadd.bf16 %v355, 1065369472
  %v360 = vmul.bf16 %v328, %v356
  %v361 = vmul.bf16 %v329, %v357
  %v362 = vmul.bf16 %v330, %v358
  %v363 = vmul.bf16 %v331, %v359
  %v364 = vld [vmem:[#allocation3] sm:$0xff]
  %v365 = vld [vmem:[#allocation3 + $0x8] sm:$0xff]
  %v366 = vld [vmem:[#allocation3 + $0x10] sm:$0xff]
  %v367 = vld [vmem:[#allocation3 + $0x18] sm:$0xff]
  %v368 = vld [vmem:[#allocation3 + $0x20] sm:$0xff]
  %v369 = vld [vmem:[#allocation3 + $0x28] sm:$0xff]
  %v370 = vld [vmem:[#allocation3 + $0x30] sm:$0xff]
  %v371 = vld [vmem:[#allocation3 + $0x38] sm:$0xff]
  %v372 = vld [vmem:[%s5] sm:$0xf]
  %v373 = vld [vmem:[%s5 + $0x4] sm:$0xf]
  %v374 = vld [vmem:[%s5 + $0x8] sm:$0xf]
  %v375 = vld [vmem:[%s5 + $0xc] sm:$0xf]
  %v376 = vld [vmem:[%s5 + $0x10] sm:$0xf]
  %v377 = vld [vmem:[%s5 + $0x14] sm:$0xf]
  %v378 = vld [vmem:[%s5 + $0x18] sm:$0xf]
  %v379 = vld [vmem:[%s5 + $0x1c] sm:$0xf]
  %v380 = vld [vmem:[%s5 + $0x20] sm:$0xf]
  %v381 = vld [vmem:[%s5 + $0x24] sm:$0xf]
  %v382 = vld [vmem:[%s5 + $0x28] sm:$0xf]
  %v383 = vld [vmem:[%s5 + $0x2c] sm:$0xf]
  %v384 = vld [vmem:[%s5 + $0x30] sm:$0xf]
  %v385 = vld [vmem:[%s5 + $0x34] sm:$0xf]
  %v386 = vld [vmem:[%s5 + $0x38] sm:$0xf]
  %v387 = vld [vmem:[%s5 + $0x3c] sm:$0xf]
  %v404 = vunpack.c.l.b16 %v372
  %v405 = vunpack.c.l.b16 %v373
  %v406 = vunpack.c.l.b16 %v374
  %v407 = vunpack.c.l.b16 %v375
  %v408 = vunpack.c.l.b16 %v376
  %v409 = vunpack.c.l.b16 %v377
  %v410 = vunpack.c.l.b16 %v378
  %v411 = vunpack.c.l.b16 %v379
  %v412 = vunpack.c.l.b16 %v380
  %v413 = vunpack.c.l.b16 %v381
  %v414 = vunpack.c.l.b16 %v382
  %v415 = vunpack.c.l.b16 %v383
  %v416 = vunpack.c.l.b16 %v384
  %v417 = vunpack.c.l.b16 %v385
  %v418 = vunpack.c.l.b16 %v386
  %v419 = vunpack.c.l.b16 %v387
  %v420 = vpack.c.b16 %v405, %v404
  %v421 = vpack.c.b16 %v407, %v406
  %v422 = vpack.c.b16 %v409, %v408
  %v423 = vpack.c.b16 %v411, %v410
  %v424 = vpack.c.b16 %v413, %v412
  %v425 = vpack.c.b16 %v415, %v414
  %v426 = vpack.c.b16 %v417, %v416
  %v427 = vpack.c.b16 %v419, %v418
  %436 = vmatprep.subr.bf16.mxu0 0
  %437 = vmatpush1.bf16.msra.mxu0 %v420
  %438 = vmatprep.subr.bf16.mxu0 0
  %439 = vmatpush1.bf16.msra.mxu0 %v421
  %440 = vmatprep.subr.bf16.mxu0 0
  %441 = vmatpush1.bf16.msra.mxu0 %v422
  %442 = vmatprep.subr.bf16.mxu0 0
  %443 = vmatpush1.bf16.msra.mxu0 %v423
  %444 = vmatprep.subr.bf16.mxu0 0
  %445 = vmatpush1.bf16.msra.mxu0 %v424
  %446 = vmatprep.subr.bf16.mxu0 0
  %447 = vmatpush1.bf16.msra.mxu0 %v425
  %448 = vmatprep.subr.bf16.mxu0 0
  %449 = vmatpush1.bf16.msra.mxu0 %v426
  %450 = vmatprep.subr.bf16.mxu0 0
  %451 = vmatpush1.bf16.msra.mxu0 %v427
  %452 = vmatprep.subr.bf16.mxu0 0
  %453 = vmatpush1.bf16.msra.mxu0 0
  %454 = vmatprep.subr.bf16.mxu0 0
  %455 = vmatpush1.bf16.msra.mxu0 0
  %456 = vmatprep.subr.bf16.mxu0 0
  %457 = vmatpush1.bf16.msra.mxu0 0
  %458 = vmatprep.subr.bf16.mxu0 0
  %459 = vmatpush1.bf16.msra.mxu0 0
  %460 = vmatprep.subr.bf16.mxu0 0
  %461 = vmatpush1.bf16.msra.mxu0 0
  %462 = vmatprep.subr.bf16.mxu0 0
  %463 = vmatpush1.bf16.msra.mxu0 0
  %464 = vmatprep.subr.bf16.mxu0 0
  %465 = vmatpush1.bf16.msra.mxu0 0
  %466 = vmatprep.subr.bf16.mxu0 0
  %467 = vmatpush1.bf16.msra.mxu0 0
  %468 = vmatprep.mubr.bf16.mxu0 0
  %469 = vmatmul.mubr.bf16.gmra.mrb[0].mxu0 %v360
  %v470 = vpop.f32.mrb[0].mxu0
  %v471 = vadd.f32 0.0, %v470
  %v472 = vpop.f32.mrb[0].mxu0
  %v473 = vpop.f32.mrb[0].mxu0
  %v474 = vadd.f32 0.0, %v473
  %v475 = vpop.f32.mrb[0].mxu0
  %476 = vmatprep.mubr.bf16.mxu0 0
  %477 = vmatmul.mubr.bf16.gmra.mrb[0].mxu0 %v361
  %v478 = vpop.f32.mrb[0].mxu0
  %v479 = vadd.f32 0.0, %v478
  %v480 = vpop.f32.mrb[0].mxu0
  %v481 = vpop.f32.mrb[0].mxu0
  %v482 = vadd.f32 0.0, %v481
  %v483 = vpop.f32.mrb[0].mxu0
  %484 = vmatprep.mubr.bf16.mxu0 0
  %485 = vmatmul.mubr.bf16.gmra.mrb[0].mxu0 %v362
  %v486 = vpop.f32.mrb[0].mxu0
  %v487 = vadd.f32 0.0, %v486
  %v488 = vpop.f32.mrb[0].mxu0
  %v489 = vpop.f32.mrb[0].mxu0
  %v490 = vadd.f32 0.0, %v489
  %v491 = vpop.f32.mrb[0].mxu0
  %492 = vmatprep.mubr.bf16.mxu0 0
  %493 = vmatmul.mubr.bf16.gmra.mrb[0].mxu0 %v363
  %v494 = vpop.f32.mrb[0].mxu0
  %v495 = vadd.f32 0.0, %v494
  %v496 = vpop.f32.mrb[0].mxu0
  %v497 = vpop.f32.mrb[0].mxu0
  %v498 = vadd.f32 0.0, %v497
  %v499 = vpop.f32.mrb[0].mxu0
  %500 = vdwg.mxu0
  %v501 = vadd.f32 %v364, %v471
  %v502 = vadd.f32 %v365, %v474
  %v503 = vadd.f32 %v366, %v479
  %v504 = vadd.f32 %v367, %v482
  %v505 = vadd.f32 %v368, %v487
  %v506 = vadd.f32 %v369, %v490
  %v507 = vadd.f32 %v370, %v495
  %v508 = vadd.f32 %v371, %v498
  %509 = vst.msk [vmem:[#allocation3] sm:$0xff] %vm246, %v501
  %510 = vst.msk [vmem:[#allocation3 + $0x8] sm:$0xff] %vm246, %v502
  %511 = vst.msk [vmem:[#allocation3 + $0x10] sm:$0xff] %vm246, %v503
  %512 = vst.msk [vmem:[#allocation3 + $0x18] sm:$0xff] %vm246, %v504
  %513 = vst.msk [vmem:[#allocation3 + $0x20] sm:$0xff] %vm246, %v505
  %514 = vst.msk [vmem:[#allocation3 + $0x28] sm:$0xff] %vm246, %v506
  %515 = vst.msk [vmem:[#allocation3 + $0x30] sm:$0xff] %vm246, %v507
  %516 = vst.msk [vmem:[#allocation3 + $0x38] sm:$0xff] %vm246, %v508
  // Predicated region
  $region34: #{_lambda_.14} parent=0 // pred_check
    %p517 = pneg %p31
  $region35: #{_lambda_.14} parent=0 // pred_check_branch
    %519 = sbr.rel (%p517) target = $region37
  $region36: #{_lambda_.14} parent=0 // pred_region
    %v520 = vld [vmem:[#allocation3] sm:$0xff]
    %v521 = vld [vmem:[#allocation3 + $0x8] sm:$0xff]
    %v522 = vld [vmem:[#allocation3 + $0x10] sm:$0xff]
    %v523 = vld [vmem:[#allocation3 + $0x18] sm:$0xff]
    %v524 = vld [vmem:[#allocation3 + $0x20] sm:$0xff]
    %v525 = vld [vmem:[#allocation3 + $0x28] sm:$0xff]
    %v526 = vld [vmem:[#allocation3 + $0x30] sm:$0xff]
    %v527 = vld [vmem:[#allocation3 + $0x38] sm:$0xff]
    %v528 = vld [vmem:[%s6] sm:$0x1]
    %v530 = vlaneseq
    %v531 = vshrl.u32 %v530, 7
    %v532 = vsub.s32 0, %v531
    %v533 = vrot.slane %v528, %v532
    %v535 = vadd.f32 %v520, %v533
    %v536 = vadd.f32 %v521, %v533
    %v537 = vadd.f32 %v522, %v533
    %v538 = vadd.f32 %v523, %v533
    %v539 = vadd.f32 %v524, %v533
    %v540 = vadd.f32 %v525, %v533
    %v541 = vadd.f32 %v526, %v533
    %v542 = vadd.f32 %v527, %v533
    %v543 = vld [vmem:[%s0] sm:$0xf]
    %v544 = vld [vmem:[%s0 + $0x4] sm:$0xf]
    %v545 = vld [vmem:[%s0 + $0x8] sm:$0xf]
    %v546 = vld [vmem:[%s0 + $0xc] sm:$0xf]
    %v547 = vld [vmem:[%s0 + $0x10] sm:$0xf]
    %v548 = vld [vmem:[%s0 + $0x14] sm:$0xf]
    %v549 = vld [vmem:[%s0 + $0x18] sm:$0xf]
    %v550 = vld [vmem:[%s0 + $0x1c] sm:$0xf]
    %v551 = vunpack.c.l.bf16 %v543
    %v552 = vunpack.c.l.bf16 %v544
    %v553 = vunpack.c.l.bf16 %v545
    %v554 = vunpack.c.l.bf16 %v546
    %v555 = vunpack.c.l.bf16 %v547
    %v556 = vunpack.c.l.bf16 %v548
    %v557 = vunpack.c.l.bf16 %v549
    %v558 = vunpack.c.l.bf16 %v550
    %v559 = vadd.f32 %v535, %v551
    %v560 = vadd.f32 %v536, %v552
    %v561 = vadd.f32 %v537, %v553
    %v562 = vadd.f32 %v538, %v554
    %v563 = vadd.f32 %v539, %v555
    %v564 = vadd.f32 %v540, %v556
    %v565 = vadd.f32 %v541, %v557
    %v566 = vadd.f32 %v542, %v558
    %v567 = vpack.c.bf16 %v560, %v559
    %v568 = vpack.c.bf16 %v562, %v561
    %v569 = vpack.c.bf16 %v564, %v563
    %v570 = vpack.c.bf16 %v566, %v565
    %v575 = vunpack.c.l.b16 %v567
    %v576 = vunpack.c.h.b16 %v567
    %v577 = vunpack.c.l.b16 %v568
    %v578 = vunpack.c.h.b16 %v568
    %v579 = vunpack.c.l.b16 %v569
    %v580 = vunpack.c.h.b16 %v569
    %v581 = vunpack.c.l.b16 %v570
    %v582 = vunpack.c.h.b16 %v570
    %v583 = vpack.c.b16 %v575, %v575
    %v584 = vpack.c.b16 %v576, %v576
    %v585 = vpack.c.b16 %v577, %v577
    %v586 = vpack.c.b16 %v578, %v578
    %v587 = vpack.c.b16 %v579, %v579
    %v588 = vpack.c.b16 %v580, %v580
    %v589 = vpack.c.b16 %v581, %v581
    %v590 = vpack.c.b16 %v582, %v582
    %vm599 = vcmask 519168
    %600 = vst.msk [vmem:[%s7] sm:$0xf] %vm599, %v583
    %601 = vst.msk [vmem:[%s7 + $0x4] sm:$0xf] %vm599, %v584
    %602 = vst.msk [vmem:[%s7 + $0x8] sm:$0xf] %vm599, %v585
    %603 = vst.msk [vmem:[%s7 + $0xc] sm:$0xf] %vm599, %v586
    %604 = vst.msk [vmem:[%s7 + $0x10] sm:$0xf] %vm599, %v587
    %605 = vst.msk [vmem:[%s7 + $0x14] sm:$0xf] %vm599, %v588
    %606 = vst.msk [vmem:[%s7 + $0x18] sm:$0xf] %vm599, %v589
    %607 = vst.msk [vmem:[%s7 + $0x1c] sm:$0xf] %vm599, %v590
  $region37: #{_lambda_.14} parent=0 // pred_fallthru
    _
  // Predicated region
  $region38: #{_lambda_.14} parent=0 // pred_check
    _
  $region39: #{_lambda_.14} parent=0 // pred_check_branch
    %609 = sbr.rel (0) target = $region41
  $region40: #{_lambda_.14} parent=0 // pred_region
    _
  $region41: #{_lambda_.14} parent=0 // pred_fallthru
    _
  // Predicated region
  $region42: #{_lambda_.14} parent=0 // pred_check
    _
  $region43: #{_lambda_.14} parent=0 // pred_check_branch
    %611 = sbr.rel (0) target = $region45
  $region44: #{_lambda_.14} parent=0 // pred_region
    _
  $region45: #{_lambda_.14} parent=0 // pred_fallthru
    _

</llo_original>
